<compile_context>
chip_gen: v6e
topology: v6e:2x2x1
jax: 0.10.0
libtpu: 0.0.40
codegen_flags: <defaults>
</compile_context>

<pallas_src>
import functools

import jax
import jax.numpy as jnp
from jax import lax
from jax.experimental import pallas as pl
from jax.experimental.pallas import tpu as pltpu


# ----------------------------------------------------------------------------
# Weight packing helpers (fuse the two directions into single matrices)
# ----------------------------------------------------------------------------
# Gate-interleaved column layout: for gate k in (i, f, g, o) the columns
# [2kH : 2kH+H] hold the forward direction and [2kH+H : 2(k+1)H] the backward
# direction.  A (rows, 8H) gate tensor then slices into four contiguous 2H
# blocks whose [fwd | bwd] sub-layout matches the fused h/c state (rows, 2H).

def _interleave_cols(wf_t, wb_t, h):
    """wf_t, wb_t: (K, 4H) -> (K, 8H), both directions read the same input."""
    k = wf_t.shape[0]
    return jnp.stack([wf_t.reshape(k, 4, h), wb_t.reshape(k, 4, h)],
                     axis=2).reshape(k, 8 * h)


def _block_diag_interleaved(wf_t, wb_t, h):
    """wf_t: (Kf, 4H), wb_t: (Kb, 4H) -> (Kf+Kb, 8H) block-diagonal."""
    kf, kb = wf_t.shape[0], wb_t.shape[0]
    top = jnp.stack([wf_t.reshape(kf, 4, h),
                     jnp.zeros((kf, 4, h), wf_t.dtype)], axis=2).reshape(kf, 8 * h)
    bot = jnp.stack([jnp.zeros((kb, 4, h), wb_t.dtype),
                     wb_t.reshape(kb, 4, h)], axis=2).reshape(kb, 8 * h)
    return jnp.concatenate([top, bot], axis=0)


def _interleave_bias(bf, bb, h):
    return jnp.stack([bf.reshape(4, h), bb.reshape(4, h)], axis=1).reshape(8 * h)


# ----------------------------------------------------------------------------
# Pallas kernels
# ----------------------------------------------------------------------------

def _char_bilstm_kernel(x_ref, wih_ref, whh_ref, b_ref, out_ref,
                        xg_scr, h_scr, c_scr, *, seq_len, keep_start, keep_len):
    """Fused fwd+bwd char LSTM (both directions share the time ordering).

    x_ref:   (T*N, 2E)  time-major flattened; features = [emb_fwd | emb_bwd]
    wih_ref: (2E, 8H)   block-diagonal, gate-interleaved
    whh_ref: (2H, 8H)   block-diagonal, gate-interleaved
    b_ref:   (1, 8H)
    out_ref: (T, keep_len, 2H)  only the last-char rows of each step's hidden
    """
    n, h2 = h_scr.shape          # N rows, 2H fused state width
    g8 = 4 * h2                  # 8H gate width

    # Hoisted input projection for all timesteps and both directions.
    xg = (jnp.dot(x_ref[...], wih_ref[...], preferred_element_type=jnp.float32)
          + b_ref[...])
    xg_scr[...] = xg.reshape(seq_len, n, g8)

    h_scr[...] = jnp.zeros_like(h_scr)
    c_scr[...] = jnp.zeros_like(c_scr)
    whh = whh_ref[...]

    def step(t, carry):
        hcat = h_scr[...]
        c = c_scr[...]
        gates = xg_scr[t] + jnp.dot(hcat, whh, preferred_element_type=jnp.float32)
        i_g = jax.nn.sigmoid(gates[:, 0 * h2:1 * h2])
        f_g = jax.nn.sigmoid(gates[:, 1 * h2:2 * h2])
        g_g = jnp.tanh(gates[:, 2 * h2:3 * h2])
        o_g = jax.nn.sigmoid(gates[:, 3 * h2:4 * h2])
        c_new = f_g * c + i_g * g_g
        h_new = o_g * jnp.tanh(c_new)
        h_scr[...] = h_new
        c_scr[...] = c_new
        # Only the last-char rows are ever consumed downstream.
        out_ref[t] = h_new[keep_start:keep_start + keep_len, :]
        return carry

    lax.fori_loop(0, seq_len, step, 0, unroll=min(8, seq_len))


def _word_bilstm_proj_kernel(x_ref, wih_ref, whh_ref, b_ref, mask_ref,
                             wlin_ref, blin_ref, emis_ref,
                             xg_scr, hf_scr, hb_scr, h_scr, c_scr, *, seq_len):
    """Fused fwd+bwd word LSTM with the final linear layer fused into the tail.

    x_ref:    (T*B, Din)   word input, passed once (no reversed copy)
    wih_ref:  (Din, 8H)    gate-interleaved (same input feeds both directions)
    whh_ref:  (2H, 8H)     block-diagonal, gate-interleaved
    b_ref:    (1, 8H)
    mask_ref: (1, 8H)      1.0 on forward-direction columns
    wlin_ref: (2H, Lpad)   linear W^T, rows 0:H -> h_fwd, H:2H -> h_bwd
    blin_ref: (1, Lpad)
    emis_ref: (T*B, Lpad)  lane-dense (padded) emissions
    """
    b, h2 = h_scr.shape
    h = h2 // 2
    g8 = 4 * h2

    xg = (jnp.dot(x_ref[...], wih_ref[...], preferred_element_type=jnp.float32)
          + b_ref[...])
    xg_scr[...] = xg.reshape(seq_len, b, g8)

    h_scr[...] = jnp.zeros_like(h_scr)
    c_scr[...] = jnp.zeros_like(c_scr)
    whh = whh_ref[...]
    m = mask_ref[...]            # (1, 8H) forward-column selector
    inv_m = 1.0 - m

    def step(t, carry):
        rt = seq_len - 1 - t
        hcat = h_scr[...]
        c = c_scr[...]
        # Forward gates read x[t]; backward gates read x[T-1-t].
        xg_sel = xg_scr[t] * m + xg_scr[rt] * inv_m
        gates = xg_sel + jnp.dot(hcat, whh, preferred_element_type=jnp.float32)
        i_g = jax.nn.sigmoid(gates[:, 0 * h2:1 * h2])
        f_g = jax.nn.sigmoid(gates[:, 1 * h2:2 * h2])
        g_g = jnp.tanh(gates[:, 2 * h2:3 * h2])
        o_g = jax.nn.sigmoid(gates[:, 3 * h2:4 * h2])
        c_new = f_g * c + i_g * g_g
        h_new = o_g * jnp.tanh(c_new)
        h_scr[...] = h_new
        c_scr[...] = c_new
        hf_scr[t] = h_new[:, :h]          # fwd hidden at original time t
        hb_scr[rt] = h_new[:, h:]         # bwd hidden, already time-aligned
        return carry

    lax.fori_loop(0, seq_len, step, 0, unroll=min(8, seq_len))

    # Fused, lane-dense emission projection over the whole sequence.
    hf = hf_scr[...].reshape(seq_len * b, h)
    hb = hb_scr[...].reshape(seq_len * b, h)
    emis_ref[...] = (
        jnp.dot(hf, wlin_ref[:h, :], preferred_element_type=jnp.float32)
        + jnp.dot(hb, wlin_ref[h:, :], preferred_element_type=jnp.float32)
        + blin_ref[...])


# ----------------------------------------------------------------------------
# Wrappers
# ----------------------------------------------------------------------------

_VMEM_LIMIT = 64 * 1024 * 1024


def char_bilstm_pallas(x_flat, wih_bd, whh_bd, b_cat, *,
                       seq_len, keep_start, keep_len):
    tn, e2 = x_flat.shape
    n = tn // seq_len
    g8 = wih_bd.shape[1]
    h2 = g8 // 4
    return pl.pallas_call(
        functools.partial(_char_bilstm_kernel, seq_len=seq_len,
                          keep_start=keep_start, keep_len=keep_len),
        out_shape=jax.ShapeDtypeStruct((seq_len, keep_len, h2), jnp.float32),
        grid_spec=pltpu.PrefetchScalarGridSpec(
            num_scalar_prefetch=0,
            grid=(1,),
            in_specs=[
                pl.BlockSpec((tn, e2), lambda i: (0, 0)),
                pl.BlockSpec((e2, g8), lambda i: (0, 0)),
                pl.BlockSpec((h2, g8), lambda i: (0, 0)),
                pl.BlockSpec((1, g8), lambda i: (0, 0)),
            ],
            out_specs=pl.BlockSpec((seq_len, keep_len, h2), lambda i: (0, 0, 0)),
            scratch_shapes=[
                pltpu.VMEM((seq_len, n, g8), jnp.float32),   # input gates
                pltpu.VMEM((n, h2), jnp.float32),            # fused h
                pltpu.VMEM((n, h2), jnp.float32),            # fused c
            ],
        ),
        compiler_params=pltpu.CompilerParams(
            dimension_semantics=("arbitrary",),
            vmem_limit_bytes=_VMEM_LIMIT),
    )(x_flat, wih_bd, whh_bd, b_cat.reshape(1, g8))


def word_bilstm_proj_pallas(x_flat, wih_cat, whh_bd, b_cat, fwd_mask,
                            wlin, blin, *, seq_len):
    tb, din = x_flat.shape
    b = tb // seq_len
    g8 = wih_cat.shape[1]
    h2 = g8 // 4
    h = h2 // 2
    lpad = wlin.shape[1]
    return pl.pallas_call(
        functools.partial(_word_bilstm_proj_kernel, seq_len=seq_len),
        out_shape=jax.ShapeDtypeStruct((tb, lpad), jnp.float32),
        grid_spec=pltpu.PrefetchScalarGridSpec(
            num_scalar_prefetch=0,
            grid=(1,),
            in_specs=[
                pl.BlockSpec((tb, din), lambda i: (0, 0)),
                pl.BlockSpec((din, g8), lambda i: (0, 0)),
                pl.BlockSpec((h2, g8), lambda i: (0, 0)),
                pl.BlockSpec((1, g8), lambda i: (0, 0)),
                pl.BlockSpec((1, g8), lambda i: (0, 0)),
                pl.BlockSpec((h2, lpad), lambda i: (0, 0)),
                pl.BlockSpec((1, lpad), lambda i: (0, 0)),
            ],
            out_specs=pl.BlockSpec((tb, lpad), lambda i: (0, 0)),
            scratch_shapes=[
                pltpu.VMEM((seq_len, b, g8), jnp.float32),   # input gates
                pltpu.VMEM((seq_len, b, h), jnp.float32),    # fwd hidden history
                pltpu.VMEM((seq_len, b, h), jnp.float32),    # bwd hidden history
                pltpu.VMEM((b, h2), jnp.float32),            # fused h
                pltpu.VMEM((b, h2), jnp.float32),            # fused c
            ],
        ),
        compiler_params=pltpu.CompilerParams(
            dimension_semantics=("arbitrary",),
            vmem_limit_bytes=_VMEM_LIMIT),
    )(x_flat, wih_cat, whh_bd, b_cat.reshape(1, g8), fwd_mask.reshape(1, g8),
      wlin, blin.reshape(1, lpad))


# ----------------------------------------------------------------------------
# CRF Viterbi decode (plain JAX glue; torchcrf semantics, mask = all ones)
# ----------------------------------------------------------------------------
# TODO(synk): CRF class body was not provided in the reference; standard
# torchcrf Viterbi decode semantics are assumed.

def crf_decode(emissions, start_trans, end_trans, trans):
    """emissions: (S, B, L) -> best tag sequence (B, S) int."""
    S, B, L = emissions.shape
    score0 = start_trans[None, :] + emissions[0]                      # (B, L)

    def fwd_step(score, em_t):
        nxt = score[:, :, None] + trans[None, :, :] + em_t[:, None, :]
        return jnp.max(nxt, axis=1), jnp.argmax(nxt, axis=1)

    final_score, history = lax.scan(fwd_step, score0, emissions[1:])  # (S-1,B,L)
    final_score = final_score + end_trans[None, :]
    last_tag = jnp.argmax(final_score, axis=1)                        # (B,)

    def back_step(tag, hist_t):
        out = tag
        prev = jnp.take_along_axis(hist_t, tag[:, None], axis=1)[:, 0]
        return prev, out

    first_tag, rest = lax.scan(back_step, last_tag, history, reverse=True)
    tags = jnp.concatenate([first_tag[None, :], rest], axis=0)        # (S, B)
    return tags.T                                                     # (B, S)


# ----------------------------------------------------------------------------
# Parameter initialization (deterministic, synthetic)
# ----------------------------------------------------------------------------

def _uni(key, shape, k):
    return jax.random.uniform(key, shape, jnp.float32, -k, k)


def init_params(key, word_vocab, char_vocab, label_dim,
                word_embed_dim, char_embed_dim, word_lstm_dim, char_lstm_dim):
    keys = iter(jax.random.split(key, 32))
    p = {}
    p['word_embed'] = jax.random.normal(next(keys), (word_vocab, word_embed_dim),
                                        jnp.float32)
    p['char_embed'] = jax.random.normal(next(keys), (char_vocab, char_embed_dim),
                                        jnp.float32)

    def lstm_params(prefix, din, h):
        k = 1.0 / jnp.sqrt(h)
        p[prefix + '_wih'] = _uni(next(keys), (4 * h, din), k)
        p[prefix + '_whh'] = _uni(next(keys), (4 * h, h), k)
        b_ih = _uni(next(keys), (4 * h,), k)
        b_hh = _uni(next(keys), (4 * h,), k)
        p[prefix + '_b'] = b_ih + b_hh

    # char LSTMs (forward / backward, run separately as in CharLSTM)
    lstm_params('c_f', char_embed_dim, char_lstm_dim)
    lstm_params('c_b', char_embed_dim, char_lstm_dim)
    # word BiLSTM (forward / reverse directions)
    word_in = word_embed_dim + 2 * char_lstm_dim
    lstm_params('w_f', word_in, word_lstm_dim)
    lstm_params('w_b', word_in, word_lstm_dim)

    klin = 1.0 / jnp.sqrt(2 * word_lstm_dim)
    p['lin_w'] = _uni(next(keys), (label_dim, 2 * word_lstm_dim), klin)
    p['lin_b'] = _uni(next(keys), (label_dim,), klin)

    p['crf_start'] = _uni(next(keys), (label_dim,), 0.1)
    p['crf_end'] = _uni(next(keys), (label_dim,), 0.1)
    p['crf_trans'] = _uni(next(keys), (label_dim, label_dim), 0.1)
    return p


# ----------------------------------------------------------------------------
# Forward pass (mirrors BiLSTMLSTMCRF.forward; the torch print() is omitted)
# ----------------------------------------------------------------------------

@jax.jit
def bilstm_lstm_crf_forward(params, word, char):
    """word: (S, B) int32, char: (S, B, C) int32 -> decoded tags (B, S) f32."""
    S, B = word.shape
    C = char.shape[2]
    E = params['char_embed'].shape[1]
    Hc = params['c_f_whh'].shape[1]
    Hw = params['w_f_whh'].shape[1]
    L = params['lin_w'].shape[0]

    # ---- CharLSTM -----------------------------------------------------------
    # Original quirk: nn.LSTM is fed (B, C, E), so its time axis is the word
    # batch B and its "batch" is the char positions C; all S word positions
    # share a zero init state and are batched together.  Char-major row layout
    # (row = c*S + s) makes the consumed rows (last char column c = C-1) a
    # contiguous trailing block of S rows.
    emb_f = params['char_embed'][char]               # (S, B, C, E)
    emb_b = params['char_embed'][char[:, :, ::-1]]   # flipped chars (bwd LSTM)

    def arrange(emb):   # (S, B, C, E) -> (B, C*S, E)
        return jnp.transpose(emb, (1, 2, 0, 3)).reshape(B, C * S, E)

    x_char = jnp.concatenate([arrange(emb_f), arrange(emb_b)], axis=-1)
    x_char = x_char.reshape(B * C * S, 2 * E)

    wih_c = _block_diag_interleaved(params['c_f_wih'].T, params['c_b_wih'].T, Hc)
    whh_c = _block_diag_interleaved(params['c_f_whh'].T, params['c_b_whh'].T, Hc)
    b_c = _interleave_bias(params['c_f_b'], params['c_b_b'], Hc)

    char_keep = char_bilstm_pallas(
        x_char, wih_c, whh_c, b_c,
        seq_len=B, keep_start=(C - 1) * S, keep_len=S)        # (B, S, 2Hc)
    char_lstm_out = jnp.transpose(char_keep, (1, 0, 2))       # (S, B, 2Hc)

    # ---- word BiLSTM + fused final linear ("tanh" is a pure nn.Linear) -----
    word_embeds = params['word_embed'][word]                  # (S, B, We)
    x = jnp.concatenate([word_embeds, char_lstm_out], axis=2)  # (S, B, Win)
    Win = x.shape[-1]

    wih_w = _interleave_cols(params['w_f_wih'].T, params['w_b_wih'].T, Hw)
    whh_w = _block_diag_interleaved(params['w_f_whh'].T, params['w_b_whh'].T, Hw)
    b_w = _interleave_bias(params['w_f_b'], params['w_b_b'], Hw)
    fwd_mask = jnp.stack([jnp.ones((4, Hw), jnp.float32),
                          jnp.zeros((4, Hw), jnp.float32)], axis=1).reshape(8 * Hw)

    # Lane-dense emission projection: pad the label dim to a multiple of 128.
    Lpad = -(-L // 128) * 128
    wlin = jnp.pad(params['lin_w'].T, ((0, 0), (0, Lpad - L)))   # (2Hw, Lpad)
    blin = jnp.pad(params['lin_b'], (0, Lpad - L))               # (Lpad,)

    emis_pad = word_bilstm_proj_pallas(
        x.reshape(S * B, Win), wih_w, whh_w, b_w, fwd_mask, wlin, blin,
        seq_len=S)                                             # (S*B, Lpad)
    emissions = emis_pad.reshape(S, B, Lpad)[:, :, :L]          # (S, B, L)

    # ---- CRF Viterbi decode --------------------------------------------------
    tags = crf_decode(emissions, params['crf_start'], params['crf_end'],
                      params['crf_trans'])
    return tags.astype(jnp.float32)                             # (B, S)


# ----------------------------------------------------------------------------
# Main
# ----------------------------------------------------------------------------

if __name__ == "__main__":
    # small shapes consistent with the module
    S, B, C = 8, 2, 6                  # seq_len, batch, max_char_len
    word_vocab, char_vocab = 50, 30
    label_dim = 5
    word_embed_dim, char_embed_dim = 32, 16
    word_lstm_dim, char_lstm_dim = 32, 16

    key = jax.random.PRNGKey(0)
    kp, kw, kc = jax.random.split(key, 3)

    params = init_params(kp, word_vocab, char_vocab, label_dim,
                         word_embed_dim, char_embed_dim,
                         word_lstm_dim, char_lstm_dim)

    word = jax.random.randint(kw, (S, B), 0, word_vocab, dtype=jnp.int32)
    char = jax.random.randint(kc, (S, B, C), 0, char_vocab, dtype=jnp.int32)

    decoded = bilstm_lstm_crf_forward(params, word, char)
    jax.block_until_ready(decoded)
    assert decoded.shape == (B, S) and decoded.dtype == jnp.float32
    print("KERNEL_OK")
</pallas_src>

<mosaic_0001>
module attributes {stable_mosaic.version = 11 : i64} {
  func.func @_char_bilstm_kernel(%arg0: i32, %arg1: memref<96x32xf32, #tpu.memory_space<vmem>>, %arg2: memref<32x128xf32, #tpu.memory_space<vmem>>, %arg3: memref<32x128xf32, #tpu.memory_space<vmem>>, %arg4: memref<1x128xf32, #tpu.memory_space<vmem>>, %arg5: memref<2x8x32xf32, #tpu.memory_space<vmem>>, %arg6: memref<2x48x128xf32, #tpu.memory_space<vmem>>, %arg7: memref<48x32xf32, #tpu.memory_space<vmem>>, %arg8: memref<48x32xf32, #tpu.memory_space<vmem>>) attributes {dimension_semantics = [#tpu.dimension_semantics<arbitrary>], iteration_bounds = array<i64: 1>, scalar_prefetch = 0 : i64, scratch_operands = 3 : i64, tpu.core_type = #tpu.core_type<tc>, window_params = [{pipeline_mode = #tpu.pipeline_mode<synchronous>, transform_indices = @transform_0, window_bounds = array<i64: 96, 32>}, {pipeline_mode = #tpu.pipeline_mode<synchronous>, transform_indices = @transform_1, window_bounds = array<i64: 32, 128>}, {pipeline_mode = #tpu.pipeline_mode<synchronous>, transform_indices = @transform_2, window_bounds = array<i64: 32, 128>}, {pipeline_mode = #tpu.pipeline_mode<synchronous>, transform_indices = @transform_3, window_bounds = array<i64: 1, 128>}, {pipeline_mode = #tpu.pipeline_mode<synchronous>, transform_indices = @transform_4, window_bounds = array<i64: 2, 8, 32>}]} {
    %c0 = arith.constant 0 : index
    %c0_0 = arith.constant 0 : index
    %0 = vector.load %arg1[%c0, %c0_0] : memref<96x32xf32, #tpu.memory_space<vmem>>, vector<96x32xf32>
    %c0_1 = arith.constant 0 : index
    %c0_2 = arith.constant 0 : index
    %1 = vector.load %arg2[%c0_1, %c0_2] : memref<32x128xf32, #tpu.memory_space<vmem>>, vector<32x128xf32>
    %cst = arith.constant dense<0.000000e+00> : vector<96x128xf32>
    %2 = tpu.matmul %0, %1, %cst {dimension_numbers = #tpu.dot_dimension_numbers<[1], [0], [0], [1], [0, 0, 1, 1], [], []>} : vector<96x32xf32>, vector<32x128xf32>, vector<96x128xf32> -> vector<96x128xf32>
    %c0_3 = arith.constant 0 : index
    %c0_4 = arith.constant 0 : index
    %3 = vector.load %arg4[%c0_3, %c0_4] : memref<1x128xf32, #tpu.memory_space<vmem>>, vector<1x128xf32>
    %4 = vector.broadcast %3 : vector<1x128xf32> to vector<96x128xf32>
    %5 = arith.addf %2, %4 : vector<96x128xf32>
    %6 = vector.shape_cast %5 : vector<96x128xf32> to vector<2x48x128xf32>
    %c0_5 = arith.constant 0 : index
    %c0_6 = arith.constant 0 : index
    %c0_7 = arith.constant 0 : index
    %7 = vector.load %arg6[%c0_5, %c0_6, %c0_7] : memref<2x48x128xf32, #tpu.memory_space<vmem>>, vector<2x48x128xf32>
    tpu.vector_store %arg6[%c0_5, %c0_6, %c0_7], %6 {strides = array<i32>} : memref<2x48x128xf32, #tpu.memory_space<vmem>>, vector<2x48x128xf32>,
    %cst_8 = arith.constant 0.000000e+00 : f32
    %8 = vector.broadcast %cst_8 : f32 to vector<48x32xf32>
    %c0_9 = arith.constant 0 : index
    %c0_10 = arith.constant 0 : index
    %9 = vector.load %arg7[%c0_9, %c0_10] : memref<48x32xf32, #tpu.memory_space<vmem>>, vector<48x32xf32>
    tpu.vector_store %arg7[%c0_9, %c0_10], %8 {strides = array<i32>} : memref<48x32xf32, #tpu.memory_space<vmem>>, vector<48x32xf32>,
    %cst_11 = arith.constant 0.000000e+00 : f32
    %10 = vector.broadcast %cst_11 : f32 to vector<48x32xf32>
    %c0_12 = arith.constant 0 : index
    %c0_13 = arith.constant 0 : index
    %11 = vector.load %arg8[%c0_12, %c0_13] : memref<48x32xf32, #tpu.memory_space<vmem>>, vector<48x32xf32>
    tpu.vector_store %arg8[%c0_12, %c0_13], %10 {strides = array<i32>} : memref<48x32xf32, #tpu.memory_space<vmem>>, vector<48x32xf32>,
    %c0_14 = arith.constant 0 : index
    %c0_15 = arith.constant 0 : index
    %12 = vector.load %arg3[%c0_14, %c0_15] : memref<32x128xf32, #tpu.memory_space<vmem>>, vector<32x128xf32>
    %c0_i32 = arith.constant 0 : i32
    %c0_16 = arith.constant 0 : index
    %c0_17 = arith.constant 0 : index
    %13 = vector.load %arg7[%c0_16, %c0_17] : memref<48x32xf32, #tpu.memory_space<vmem>>, vector<48x32xf32>
    %c0_18 = arith.constant 0 : index
    %c0_19 = arith.constant 0 : index
    %14 = vector.load %arg8[%c0_18, %c0_19] : memref<48x32xf32, #tpu.memory_space<vmem>>, vector<48x32xf32>
    %15 = arith.index_cast %c0_i32 : i32 to index
    %c0_20 = arith.constant 0 : index
    %c0_21 = arith.constant 0 : index
    %16 = vector.load %arg6[%15, %c0_20, %c0_21] : memref<2x48x128xf32, #tpu.memory_space<vmem>>, vector<1x48x128xf32>
    %17 = vector.shape_cast %16 : vector<1x48x128xf32> to vector<48x128xf32>
    %cst_22 = arith.constant dense<0.000000e+00> : vector<48x128xf32>
    %18 = tpu.matmul %13, %12, %cst_22 {dimension_numbers = #tpu.dot_dimension_numbers<[1], [0], [0], [1], [0, 0, 1, 1], [], []>} : vector<48x32xf32>, vector<32x128xf32>, vector<48x128xf32> -> vector<48x128xf32>
    %19 = arith.addf %17, %18 : vector<48x128xf32>
    %20 = vector.extract_strided_slice %19 {offsets = [0, 0], sizes = [48, 32], strides = [1, 1]} : vector<48x128xf32> to vector<48x32xf32>
    %21 = arith.negf %20 : vector<48x32xf32>
    %22 = math.exp %21 : vector<48x32xf32>
    %cst_23 = arith.constant 1.000000e+00 : f32
    %23 = vector.broadcast %cst_23 : f32 to vector<48x32xf32>
    %24 = arith.addf %23, %22 : vector<48x32xf32>
    %25 = arith.divf %23, %24 : vector<48x32xf32>
    %26 = vector.extract_strided_slice %19 {offsets = [0, 32], sizes = [48, 32], strides = [1, 1]} : vector<48x128xf32> to vector<48x32xf32>
    %27 = arith.negf %26 : vector<48x32xf32>
    %28 = math.exp %27 : vector<48x32xf32>
    %cst_24 = arith.constant 1.000000e+00 : f32
    %29 = vector.broadcast %cst_24 : f32 to vector<48x32xf32>
    %30 = arith.addf %29, %28 : vector<48x32xf32>
    %31 = arith.divf %29, %30 : vector<48x32xf32>
    %32 = vector.extract_strided_slice %19 {offsets = [0, 64], sizes = [48, 32], strides = [1, 1]} : vector<48x128xf32> to vector<48x32xf32>
    %33 = math.tanh %32 : vector<48x32xf32>
    %34 = vector.extract_strided_slice %19 {offsets = [0, 96], sizes = [48, 32], strides = [1, 1]} : vector<48x128xf32> to vector<48x32xf32>
    %35 = arith.negf %34 : vector<48x32xf32>
    %36 = math.exp %35 : vector<48x32xf32>
    %cst_25 = arith.constant 1.000000e+00 : f32
    %37 = vector.broadcast %cst_25 : f32 to vector<48x32xf32>
    %38 = arith.addf %37, %36 : vector<48x32xf32>
    %39 = arith.divf %37, %38 : vector<48x32xf32>
    %40 = arith.mulf %31, %14 : vector<48x32xf32>
    %41 = arith.mulf %25, %33 : vector<48x32xf32>
    %42 = arith.addf %40, %41 : vector<48x32xf32>
    %43 = math.tanh %42 : vector<48x32xf32>
    %44 = arith.mulf %39, %43 : vector<48x32xf32>
    %c0_26 = arith.constant 0 : index
    %c0_27 = arith.constant 0 : index
    %45 = vector.load %arg7[%c0_26, %c0_27] : memref<48x32xf32, #tpu.memory_space<vmem>>, vector<48x32xf32>
    tpu.vector_store %arg7[%c0_26, %c0_27], %44 {strides = array<i32>} : memref<48x32xf32, #tpu.memory_space<vmem>>, vector<48x32xf32>,
    %c0_28 = arith.constant 0 : index
    %c0_29 = arith.constant 0 : index
    %46 = vector.load %arg8[%c0_28, %c0_29] : memref<48x32xf32, #tpu.memory_space<vmem>>, vector<48x32xf32>
    tpu.vector_store %arg8[%c0_28, %c0_29], %42 {strides = array<i32>} : memref<48x32xf32, #tpu.memory_space<vmem>>, vector<48x32xf32>,
    %47 = vector.extract_strided_slice %44 {offsets = [40, 0], sizes = [8, 32], strides = [1, 1]} : vector<48x32xf32> to vector<8x32xf32>
    %48 = arith.index_cast %c0_i32 : i32 to index
    %c0_30 = arith.constant 0 : index
    %c0_31 = arith.constant 0 : index
    %49 = vector.load %arg5[%48, %c0_30, %c0_31] : memref<2x8x32xf32, #tpu.memory_space<vmem>>, vector<1x8x32xf32>
    %50 = vector.shape_cast %49 : vector<1x8x32xf32> to vector<8x32xf32>
    %51 = vector.shape_cast %47 : vector<8x32xf32> to vector<1x8x32xf32>
    tpu.vector_store %arg5[%48, %c0_30, %c0_31], %51 {strides = array<i32>} : memref<2x8x32xf32, #tpu.memory_space<vmem>>, vector<1x8x32xf32>,
    %c1_i32 = arith.constant 1 : i32
    %c0_32 = arith.constant 0 : index
    %c0_33 = arith.constant 0 : index
    %52 = vector.load %arg7[%c0_32, %c0_33] : memref<48x32xf32, #tpu.memory_space<vmem>>, vector<48x32xf32>
    %c0_34 = arith.constant 0 : index
    %c0_35 = arith.constant 0 : index
    %53 = vector.load %arg8[%c0_34, %c0_35] : memref<48x32xf32, #tpu.memory_space<vmem>>, vector<48x32xf32>
    %54 = arith.index_cast %c1_i32 : i32 to index
    %c0_36 = arith.constant 0 : index
    %c0_37 = arith.constant 0 : index
    %55 = vector.load %arg6[%54, %c0_36, %c0_37] : memref<2x48x128xf32, #tpu.memory_space<vmem>>, vector<1x48x128xf32>
    %56 = vector.shape_cast %55 : vector<1x48x128xf32> to vector<48x128xf32>
    %cst_38 = arith.constant dense<0.000000e+00> : vector<48x128xf32>
    %57 = tpu.matmul %52, %12, %cst_38 {dimension_numbers = #tpu.dot_dimension_numbers<[1], [0], [0], [1], [0, 0, 1, 1], [], []>} : vector<48x32xf32>, vector<32x128xf32>, vector<48x128xf32> -> vector<48x128xf32>
    %58 = arith.addf %56, %57 : vector<48x128xf32>
    %59 = vector.extract_strided_slice %58 {offsets = [0, 0], sizes = [48, 32], strides = [1, 1]} : vector<48x128xf32> to vector<48x32xf32>
    %60 = arith.negf %59 : vector<48x32xf32>
    %61 = math.exp %60 : vector<48x32xf32>
    %cst_39 = arith.constant 1.000000e+00 : f32
    %62 = vector.broadcast %cst_39 : f32 to vector<48x32xf32>
    %63 = arith.addf %62, %61 : vector<48x32xf32>
    %64 = arith.divf %62, %63 : vector<48x32xf32>
    %65 = vector.extract_strided_slice %58 {offsets = [0, 32], sizes = [48, 32], strides = [1, 1]} : vector<48x128xf32> to vector<48x32xf32>
    %66 = arith.negf %65 : vector<48x32xf32>
    %67 = math.exp %66 : vector<48x32xf32>
    %cst_40 = arith.constant 1.000000e+00 : f32
    %68 = vector.broadcast %cst_40 : f32 to vector<48x32xf32>
    %69 = arith.addf %68, %67 : vector<48x32xf32>
    %70 = arith.divf %68, %69 : vector<48x32xf32>
    %71 = vector.extract_strided_slice %58 {offsets = [0, 64], sizes = [48, 32], strides = [1, 1]} : vector<48x128xf32> to vector<48x32xf32>
    %72 = math.tanh %71 : vector<48x32xf32>
    %73 = vector.extract_strided_slice %58 {offsets = [0, 96], sizes = [48, 32], strides = [1, 1]} : vector<48x128xf32> to vector<48x32xf32>
    %74 = arith.negf %73 : vector<48x32xf32>
    %75 = math.exp %74 : vector<48x32xf32>
    %cst_41 = arith.constant 1.000000e+00 : f32
    %76 = vector.broadcast %cst_41 : f32 to vector<48x32xf32>
    %77 = arith.addf %76, %75 : vector<48x32xf32>
    %78 = arith.divf %76, %77 : vector<48x32xf32>
    %79 = arith.mulf %70, %53 : vector<48x32xf32>
    %80 = arith.mulf %64, %72 : vector<48x32xf32>
    %81 = arith.addf %79, %80 : vector<48x32xf32>
    %82 = math.tanh %81 : vector<48x32xf32>
    %83 = arith.mulf %78, %82 : vector<48x32xf32>
    %c0_42 = arith.constant 0 : index
    %c0_43 = arith.constant 0 : index
    %84 = vector.load %arg7[%c0_42, %c0_43] : memref<48x32xf32, #tpu.memory_space<vmem>>, vector<48x32xf32>
    tpu.vector_store %arg7[%c0_42, %c0_43], %83 {strides = array<i32>} : memref<48x32xf32, #tpu.memory_space<vmem>>, vector<48x32xf32>,
    %c0_44 = arith.constant 0 : index
    %c0_45 = arith.constant 0 : index
    %85 = vector.load %arg8[%c0_44, %c0_45] : memref<48x32xf32, #tpu.memory_space<vmem>>, vector<48x32xf32>
    tpu.vector_store %arg8[%c0_44, %c0_45], %81 {strides = array<i32>} : memref<48x32xf32, #tpu.memory_space<vmem>>, vector<48x32xf32>,
    %86 = vector.extract_strided_slice %83 {offsets = [40, 0], sizes = [8, 32], strides = [1, 1]} : vector<48x32xf32> to vector<8x32xf32>
    %87 = arith.index_cast %c1_i32 : i32 to index
    %c0_46 = arith.constant 0 : index
    %c0_47 = arith.constant 0 : index
    %88 = vector.load %arg5[%87, %c0_46, %c0_47] : memref<2x8x32xf32, #tpu.memory_space<vmem>>, vector<1x8x32xf32>
    %89 = vector.shape_cast %88 : vector<1x8x32xf32> to vector<8x32xf32>
    %90 = vector.shape_cast %86 : vector<8x32xf32> to vector<1x8x32xf32>
    tpu.vector_store %arg5[%87, %c0_46, %c0_47], %90 {strides = array<i32>} : memref<2x8x32xf32, #tpu.memory_space<vmem>>, vector<1x8x32xf32>,
    %c2_i32 = arith.constant 2 : i32
    return
  }
  func.func @transform_0(%arg0: i32) -> (i32, i32) {
    %c0_i32 = arith.constant 0 : i32
    %c0_i32_0 = arith.constant 0 : i32
    %c0_i32_1 = arith.constant 0 : i32
    return %c0_i32, %c0_i32_0 : i32, i32
  }
  func.func @transform_1(%arg0: i32) -> (i32, i32) {
    %c0_i32 = arith.constant 0 : i32
    %c0_i32_0 = arith.constant 0 : i32
    %c0_i32_1 = arith.constant 0 : i32
    return %c0_i32, %c0_i32_0 : i32, i32
  }
  func.func @transform_2(%arg0: i32) -> (i32, i32) {
    %c0_i32 = arith.constant 0 : i32
    %c0_i32_0 = arith.constant 0 : i32
    %c0_i32_1 = arith.constant 0 : i32
    return %c0_i32, %c0_i32_0 : i32, i32
  }
  func.func @transform_3(%arg0: i32) -> (i32, i32) {
    %c0_i32 = arith.constant 0 : i32
    %c0_i32_0 = arith.constant 0 : i32
    %c0_i32_1 = arith.constant 0 : i32
    return %c0_i32, %c0_i32_0 : i32, i32
  }
  func.func @transform_4(%arg0: i32) -> (i32, i32, i32) {
    %c0_i32 = arith.constant 0 : i32
    %c0_i32_0 = arith.constant 0 : i32
    %c0_i32_1 = arith.constant 0 : i32
    %c0_i32_2 = arith.constant 0 : i32
    return %c0_i32, %c0_i32_0, %c0_i32_1 : i32, i32, i32
  }
}

module attributes {stable_mosaic.version = 11 : i64} {
  func.func @_word_bilstm_proj_kernel(%arg0: i32, %arg1: memref<16x64xf32, #tpu.memory_space<vmem>>, %arg2: memref<64x256xf32, #tpu.memory_space<vmem>>, %arg3: memref<64x256xf32, #tpu.memory_space<vmem>>, %arg4: memref<1x256xf32, #tpu.memory_space<vmem>>, %arg5: memref<1x256xf32, #tpu.memory_space<vmem>>, %arg6: memref<64x128xf32, #tpu.memory_space<vmem>>, %arg7: memref<1x128xf32, #tpu.memory_space<vmem>>, %arg8: memref<16x128xf32, #tpu.memory_space<vmem>>, %arg9: memref<8x2x256xf32, #tpu.memory_space<vmem>>, %arg10: memref<8x2x32xf32, #tpu.memory_space<vmem>>, %arg11: memref<8x2x32xf32, #tpu.memory_space<vmem>>, %arg12: memref<2x64xf32, #tpu.memory_space<vmem>>, %arg13: memref<2x64xf32, #tpu.memory_space<vmem>>) attributes {dimension_semantics = [#tpu.dimension_semantics<arbitrary>], iteration_bounds = array<i64: 1>, scalar_prefetch = 0 : i64, scratch_operands = 5 : i64, tpu.core_type = #tpu.core_type<tc>, window_params = [{pipeline_mode = #tpu.pipeline_mode<synchronous>, transform_indices = @transform_0, window_bounds = array<i64: 16, 64>}, {pipeline_mode = #tpu.pipeline_mode<synchronous>, transform_indices = @transform_1, window_bounds = array<i64: 64, 256>}, {pipeline_mode = #tpu.pipeline_mode<synchronous>, transform_indices = @transform_2, window_bounds = array<i64: 64, 256>}, {pipeline_mode = #tpu.pipeline_mode<synchronous>, transform_indices = @transform_3, window_bounds = array<i64: 1, 256>}, {pipeline_mode = #tpu.pipeline_mode<synchronous>, transform_indices = @transform_4, window_bounds = array<i64: 1, 256>}, {pipeline_mode = #tpu.pipeline_mode<synchronous>, transform_indices = @transform_5, window_bounds = array<i64: 64, 128>}, {pipeline_mode = #tpu.pipeline_mode<synchronous>, transform_indices = @transform_6, window_bounds = array<i64: 1, 128>}, {pipeline_mode = #tpu.pipeline_mode<synchronous>, transform_indices = @transform_7, window_bounds = array<i64: 16, 128>}]} {
    %c0 = arith.constant 0 : index
    %c0_0 = arith.constant 0 : index
    %0 = vector.load %arg1[%c0, %c0_0] : memref<16x64xf32, #tpu.memory_space<vmem>>, vector<16x64xf32>
    %c0_1 = arith.constant 0 : index
    %c0_2 = arith.constant 0 : index
    %1 = vector.load %arg2[%c0_1, %c0_2] : memref<64x256xf32, #tpu.memory_space<vmem>>, vector<64x256xf32>
    %cst = arith.constant dense<0.000000e+00> : vector<16x256xf32>
    %2 = tpu.matmul %0, %1, %cst {dimension_numbers = #tpu.dot_dimension_numbers<[1], [0], [0], [1], [0, 0, 1, 1], [], []>} : vector<16x64xf32>, vector<64x256xf32>, vector<16x256xf32> -> vector<16x256xf32>
    %c0_3 = arith.constant 0 : index
    %c0_4 = arith.constant 0 : index
    %3 = vector.load %arg4[%c0_3, %c0_4] : memref<1x256xf32, #tpu.memory_space<vmem>>, vector<1x256xf32>
    %4 = vector.broadcast %3 : vector<1x256xf32> to vector<16x256xf32>
    %5 = arith.addf %2, %4 : vector<16x256xf32>
    %6 = vector.shape_cast %5 : vector<16x256xf32> to vector<8x2x256xf32>
    %c0_5 = arith.constant 0 : index
    %c0_6 = arith.constant 0 : index
    %c0_7 = arith.constant 0 : index
    %7 = vector.load %arg9[%c0_5, %c0_6, %c0_7] : memref<8x2x256xf32, #tpu.memory_space<vmem>>, vector<8x2x256xf32>
    tpu.vector_store %arg9[%c0_5, %c0_6, %c0_7], %6 {strides = array<i32>} : memref<8x2x256xf32, #tpu.memory_space<vmem>>, vector<8x2x256xf32>,
    %cst_8 = arith.constant 0.000000e+00 : f32
    %8 = vector.broadcast %cst_8 : f32 to vector<2x64xf32>
    %c0_9 = arith.constant 0 : index
    %c0_10 = arith.constant 0 : index
    %9 = vector.load %arg12[%c0_9, %c0_10] : memref<2x64xf32, #tpu.memory_space<vmem>>, vector<2x64xf32>
    tpu.vector_store %arg12[%c0_9, %c0_10], %8 {strides = array<i32>} : memref<2x64xf32, #tpu.memory_space<vmem>>, vector<2x64xf32>,
    %cst_11 = arith.constant 0.000000e+00 : f32
    %10 = vector.broadcast %cst_11 : f32 to vector<2x64xf32>
    %c0_12 = arith.constant 0 : index
    %c0_13 = arith.constant 0 : index
    %11 = vector.load %arg13[%c0_12, %c0_13] : memref<2x64xf32, #tpu.memory_space<vmem>>, vector<2x64xf32>
    tpu.vector_store %arg13[%c0_12, %c0_13], %10 {strides = array<i32>} : memref<2x64xf32, #tpu.memory_space<vmem>>, vector<2x64xf32>,
    %c0_14 = arith.constant 0 : index
    %c0_15 = arith.constant 0 : index
    %12 = vector.load %arg3[%c0_14, %c0_15] : memref<64x256xf32, #tpu.memory_space<vmem>>, vector<64x256xf32>
    %c0_16 = arith.constant 0 : index
    %c0_17 = arith.constant 0 : index
    %13 = vector.load %arg5[%c0_16, %c0_17] : memref<1x256xf32, #tpu.memory_space<vmem>>, vector<1x256xf32>
    %cst_18 = arith.constant 1.000000e+00 : f32
    %14 = vector.broadcast %cst_18 : f32 to vector<1x256xf32>
    %15 = arith.subf %14, %13 : vector<1x256xf32>
    %c0_i32 = arith.constant 0 : i32
    %c7_i32 = arith.constant 7 : i32
    %16 = arith.subi %c7_i32, %c0_i32 : i32
    %c0_19 = arith.constant 0 : index
    %c0_20 = arith.constant 0 : index
    %17 = vector.load %arg12[%c0_19, %c0_20] : memref<2x64xf32, #tpu.memory_space<vmem>>, vector<2x64xf32>
    %c0_21 = arith.constant 0 : index
    %c0_22 = arith.constant 0 : index
    %18 = vector.load %arg13[%c0_21, %c0_22] : memref<2x64xf32, #tpu.memory_space<vmem>>, vector<2x64xf32>
    %19 = arith.index_cast %c0_i32 : i32 to index
    %c0_23 = arith.constant 0 : index
    %c0_24 = arith.constant 0 : index
    %20 = vector.load %arg9[%19, %c0_23, %c0_24] : memref<8x2x256xf32, #tpu.memory_space<vmem>>, vector<1x2x256xf32>
    %21 = vector.shape_cast %20 : vector<1x2x256xf32> to vector<2x256xf32>
    %22 = vector.broadcast %13 : vector<1x256xf32> to vector<2x256xf32>
    %23 = arith.mulf %21, %22 : vector<2x256xf32>
    %24 = arith.index_cast %16 : i32 to index
    %c0_25 = arith.constant 0 : index
    %c0_26 = arith.constant 0 : index
    %25 = vector.load %arg9[%24, %c0_25, %c0_26] : memref<8x2x256xf32, #tpu.memory_space<vmem>>, vector<1x2x256xf32>
    %26 = vector.shape_cast %25 : vector<1x2x256xf32> to vector<2x256xf32>
    %27 = vector.broadcast %15 : vector<1x256xf32> to vector<2x256xf32>
    %28 = arith.mulf %26, %27 : vector<2x256xf32>
    %29 = arith.addf %23, %28 : vector<2x256xf32>
    %cst_27 = arith.constant dense<0.000000e+00> : vector<2x256xf32>
    %30 = tpu.matmul %17, %12, %cst_27 {dimension_numbers = #tpu.dot_dimension_numbers<[1], [0], [0], [1], [0, 0, 1, 1], [], []>} : vector<2x64xf32>, vector<64x256xf32>, vector<2x256xf32> -> vector<2x256xf32>
    %31 = arith.addf %29, %30 : vector<2x256xf32>
    %32 = vector.extract_strided_slice %31 {offsets = [0, 0], sizes = [2, 64], strides = [1, 1]} : vector<2x256xf32> to vector<2x64xf32>
    %33 = arith.negf %32 : vector<2x64xf32>
    %34 = math.exp %33 : vector<2x64xf32>
    %cst_28 = arith.constant 1.000000e+00 : f32
    %35 = vector.broadcast %cst_28 : f32 to vector<2x64xf32>
    %36 = arith.addf %35, %34 : vector<2x64xf32>
    %37 = arith.divf %35, %36 : vector<2x64xf32>
    %38 = vector.extract_strided_slice %31 {offsets = [0, 64], sizes = [2, 64], strides = [1, 1]} : vector<2x256xf32> to vector<2x64xf32>
    %39 = arith.negf %38 : vector<2x64xf32>
    %40 = math.exp %39 : vector<2x64xf32>
    %cst_29 = arith.constant 1.000000e+00 : f32
    %41 = vector.broadcast %cst_29 : f32 to vector<2x64xf32>
    %42 = arith.addf %41, %40 : vector<2x64xf32>
    %43 = arith.divf %41, %42 : vector<2x64xf32>
    %44 = vector.extract_strided_slice %31 {offsets = [0, 128], sizes = [2, 64], strides = [1, 1]} : vector<2x256xf32> to vector<2x64xf32>
    %45 = math.tanh %44 : vector<2x64xf32>
    %46 = vector.extract_strided_slice %31 {offsets = [0, 192], sizes = [2, 64], strides = [1, 1]} : vector<2x256xf32> to vector<2x64xf32>
    %47 = arith.negf %46 : vector<2x64xf32>
    %48 = math.exp %47 : vector<2x64xf32>
    %cst_30 = arith.constant 1.000000e+00 : f32
    %49 = vector.broadcast %cst_30 : f32 to vector<2x64xf32>
    %50 = arith.addf %49, %48 : vector<2x64xf32>
    %51 = arith.divf %49, %50 : vector<2x64xf32>
    %52 = arith.mulf %43, %18 : vector<2x64xf32>
    %53 = arith.mulf %37, %45 : vector<2x64xf32>
    %54 = arith.addf %52, %53 : vector<2x64xf32>
    %55 = math.tanh %54 : vector<2x64xf32>
    %56 = arith.mulf %51, %55 : vector<2x64xf32>
    %c0_31 = arith.constant 0 : index
    %c0_32 = arith.constant 0 : index
    %57 = vector.load %arg12[%c0_31, %c0_32] : memref<2x64xf32, #tpu.memory_space<vmem>>, vector<2x64xf32>
    tpu.vector_store %arg12[%c0_31, %c0_32], %56 {strides = array<i32>} : memref<2x64xf32, #tpu.memory_space<vmem>>, vector<2x64xf32>,
    %c0_33 = arith.constant 0 : index
    %c0_34 = arith.constant 0 : index
    %58 = vector.load %arg13[%c0_33, %c0_34] : memref<2x64xf32, #tpu.memory_space<vmem>>, vector<2x64xf32>
    tpu.vector_store %arg13[%c0_33, %c0_34], %54 {strides = array<i32>} : memref<2x64xf32, #tpu.memory_space<vmem>>, vector<2x64xf32>,
    %59 = vector.extract_strided_slice %56 {offsets = [0, 0], sizes = [2, 32], strides = [1, 1]} : vector<2x64xf32> to vector<2x32xf32>
    %60 = arith.index_cast %c0_i32 : i32 to index
    %c0_35 = arith.constant 0 : index
    %c0_36 = arith.constant 0 : index
    %61 = vector.load %arg10[%60, %c0_35, %c0_36] : memref<8x2x32xf32, #tpu.memory_space<vmem>>, vector<1x2x32xf32>
    %62 = vector.shape_cast %61 : vector<1x2x32xf32> to vector<2x32xf32>
    %63 = vector.shape_cast %59 : vector<2x32xf32> to vector<1x2x32xf32>
    tpu.vector_store %arg10[%60, %c0_35, %c0_36], %63 {strides = array<i32>} : memref<8x2x32xf32, #tpu.memory_space<vmem>>, vector<1x2x32xf32>,
    %64 = vector.extract_strided_slice %56 {offsets = [0, 32], sizes = [2, 32], strides = [1, 1]} : vector<2x64xf32> to vector<2x32xf32>
    %65 = arith.index_cast %16 : i32 to index
    %c0_37 = arith.constant 0 : index
    %c0_38 = arith.constant 0 : index
    %66 = vector.load %arg11[%65, %c0_37, %c0_38] : memref<8x2x32xf32, #tpu.memory_space<vmem>>, vector<1x2x32xf32>
    %67 = vector.shape_cast %66 : vector<1x2x32xf32> to vector<2x32xf32>
    %68 = vector.shape_cast %64 : vector<2x32xf32> to vector<1x2x32xf32>
    tpu.vector_store %arg11[%65, %c0_37, %c0_38], %68 {strides = array<i32>} : memref<8x2x32xf32, #tpu.memory_space<vmem>>, vector<1x2x32xf32>,
    %c1_i32 = arith.constant 1 : i32
    %c7_i32_39 = arith.constant 7 : i32
    %69 = arith.subi %c7_i32_39, %c1_i32 : i32
    %c0_40 = arith.constant 0 : index
    %c0_41 = arith.constant 0 : index
    %70 = vector.load %arg12[%c0_40, %c0_41] : memref<2x64xf32, #tpu.memory_space<vmem>>, vector<2x64xf32>
    %c0_42 = arith.constant 0 : index
    %c0_43 = arith.constant 0 : index
    %71 = vector.load %arg13[%c0_42, %c0_43] : memref<2x64xf32, #tpu.memory_space<vmem>>, vector<2x64xf32>
    %72 = arith.index_cast %c1_i32 : i32 to index
    %c0_44 = arith.constant 0 : index
    %c0_45 = arith.constant 0 : index
    %73 = vector.load %arg9[%72, %c0_44, %c0_45] : memref<8x2x256xf32, #tpu.memory_space<vmem>>, vector<1x2x256xf32>
    %74 = vector.shape_cast %73 : vector<1x2x256xf32> to vector<2x256xf32>
    %75 = vector.broadcast %13 : vector<1x256xf32> to vector<2x256xf32>
    %76 = arith.mulf %74, %75 : vector<2x256xf32>
    %77 = arith.index_cast %69 : i32 to index
    %c0_46 = arith.constant 0 : index
    %c0_47 = arith.constant 0 : index
    %78 = vector.load %arg9[%77, %c0_46, %c0_47] : memref<8x2x256xf32, #tpu.memory_space<vmem>>, vector<1x2x256xf32>
    %79 = vector.shape_cast %78 : vector<1x2x256xf32> to vector<2x256xf32>
    %80 = vector.broadcast %15 : vector<1x256xf32> to vector<2x256xf32>
    %81 = arith.mulf %79, %80 : vector<2x256xf32>
    %82 = arith.addf %76, %81 : vector<2x256xf32>
    %cst_48 = arith.constant dense<0.000000e+00> : vector<2x256xf32>
    %83 = tpu.matmul %70, %12, %cst_48 {dimension_numbers = #tpu.dot_dimension_numbers<[1], [0], [0], [1], [0, 0, 1, 1], [], []>} : vector<2x64xf32>, vector<64x256xf32>, vector<2x256xf32> -> vector<2x256xf32>
    %84 = arith.addf %82, %83 : vector<2x256xf32>
    %85 = vector.extract_strided_slice %84 {offsets = [0, 0], sizes = [2, 64], strides = [1, 1]} : vector<2x256xf32> to vector<2x64xf32>
    %86 = arith.negf %85 : vector<2x64xf32>
    %87 = math.exp %86 : vector<2x64xf32>
    %cst_49 = arith.constant 1.000000e+00 : f32
    %88 = vector.broadcast %cst_49 : f32 to vector<2x64xf32>
    %89 = arith.addf %88, %87 : vector<2x64xf32>
    %90 = arith.divf %88, %89 : vector<2x64xf32>
    %91 = vector.extract_strided_slice %84 {offsets = [0, 64], sizes = [2, 64], strides = [1, 1]} : vector<2x256xf32> to vector<2x64xf32>
    %92 = arith.negf %91 : vector<2x64xf32>
    %93 = math.exp %92 : vector<2x64xf32>
    %cst_50 = arith.constant 1.000000e+00 : f32
    %94 = vector.broadcast %cst_50 : f32 to vector<2x64xf32>
    %95 = arith.addf %94, %93 : vector<2x64xf32>
    %96 = arith.divf %94, %95 : vector<2x64xf32>
    %97 = vector.extract_strided_slice %84 {offsets = [0, 128], sizes = [2, 64], strides = [1, 1]} : vector<2x256xf32> to vector<2x64xf32>
    %98 = math.tanh %97 : vector<2x64xf32>
    %99 = vector.extract_strided_slice %84 {offsets = [0, 192], sizes = [2, 64], strides = [1, 1]} : vector<2x256xf32> to vector<2x64xf32>
    %100 = arith.negf %99 : vector<2x64xf32>
    %101 = math.exp %100 : vector<2x64xf32>
    %cst_51 = arith.constant 1.000000e+00 : f32
    %102 = vector.broadcast %cst_51 : f32 to vector<2x64xf32>
    %103 = arith.addf %102, %101 : vector<2x64xf32>
    %104 = arith.divf %102, %103 : vector<2x64xf32>
    %105 = arith.mulf %96, %71 : vector<2x64xf32>
    %106 = arith.mulf %90, %98 : vector<2x64xf32>
    %107 = arith.addf %105, %106 : vector<2x64xf32>
    %108 = math.tanh %107 : vector<2x64xf32>
    %109 = arith.mulf %104, %108 : vector<2x64xf32>
    %c0_52 = arith.constant 0 : index
    %c0_53 = arith.constant 0 : index
    %110 = vector.load %arg12[%c0_52, %c0_53] : memref<2x64xf32, #tpu.memory_space<vmem>>, vector<2x64xf32>
    tpu.vector_store %arg12[%c0_52, %c0_53], %109 {strides = array<i32>} : memref<2x64xf32, #tpu.memory_space<vmem>>, vector<2x64xf32>,
    %c0_54 = arith.constant 0 : index
    %c0_55 = arith.constant 0 : index
    %111 = vector.load %arg13[%c0_54, %c0_55] : memref<2x64xf32, #tpu.memory_space<vmem>>, vector<2x64xf32>
    tpu.vector_store %arg13[%c0_54, %c0_55], %107 {strides = array<i32>} : memref<2x64xf32, #tpu.memory_space<vmem>>, vector<2x64xf32>,
    %112 = vector.extract_strided_slice %109 {offsets = [0, 0], sizes = [2, 32], strides = [1, 1]} : vector<2x64xf32> to vector<2x32xf32>
    %113 = arith.index_cast %c1_i32 : i32 to index
    %c0_56 = arith.constant 0 : index
    %c0_57 = arith.constant 0 : index
    %114 = vector.load %arg10[%113, %c0_56, %c0_57] : memref<8x2x32xf32, #tpu.memory_space<vmem>>, vector<1x2x32xf32>
    %115 = vector.shape_cast %114 : vector<1x2x32xf32> to vector<2x32xf32>
    %116 = vector.shape_cast %112 : vector<2x32xf32> to vector<1x2x32xf32>
    tpu.vector_store %arg10[%113, %c0_56, %c0_57], %116 {strides = array<i32>} : memref<8x2x32xf32, #tpu.memory_space<vmem>>, vector<1x2x32xf32>,
    %117 = vector.extract_strided_slice %109 {offsets = [0, 32], sizes = [2, 32], strides = [1, 1]} : vector<2x64xf32> to vector<2x32xf32>
    %118 = arith.index_cast %69 : i32 to index
    %c0_58 = arith.constant 0 : index
    %c0_59 = arith.constant 0 : index
    %119 = vector.load %arg11[%118, %c0_58, %c0_59] : memref<8x2x32xf32, #tpu.memory_space<vmem>>, vector<1x2x32xf32>
    %120 = vector.shape_cast %119 : vector<1x2x32xf32> to vector<2x32xf32>
    %121 = vector.shape_cast %117 : vector<2x32xf32> to vector<1x2x32xf32>
    tpu.vector_store %arg11[%118, %c0_58, %c0_59], %121 {strides = array<i32>} : memref<8x2x32xf32, #tpu.memory_space<vmem>>, vector<1x2x32xf32>,
    %c2_i32 = arith.constant 2 : i32
    %c7_i32_60 = arith.constant 7 : i32
    %122 = arith.subi %c7_i32_60, %c2_i32 : i32
    %c0_61 = arith.constant 0 : index
    %c0_62 = arith.constant 0 : index
    %123 = vector.load %arg12[%c0_61, %c0_62] : memref<2x64xf32, #tpu.memory_space<vmem>>, vector<2x64xf32>
    %c0_63 = arith.constant 0 : index
    %c0_64 = arith.constant 0 : index
    %124 = vector.load %arg13[%c0_63, %c0_64] : memref<2x64xf32, #tpu.memory_space<vmem>>, vector<2x64xf32>
    %125 = arith.index_cast %c2_i32 : i32 to index
    %c0_65 = arith.constant 0 : index
    %c0_66 = arith.constant 0 : index
    %126 = vector.load %arg9[%125, %c0_65, %c0_66] : memref<8x2x256xf32, #tpu.memory_space<vmem>>, vector<1x2x256xf32>
    %127 = vector.shape_cast %126 : vector<1x2x256xf32> to vector<2x256xf32>
    %128 = vector.broadcast %13 : vector<1x256xf32> to vector<2x256xf32>
    %129 = arith.mulf %127, %128 : vector<2x256xf32>
    %130 = arith.index_cast %122 : i32 to index
    %c0_67 = arith.constant 0 : index
    %c0_68 = arith.constant 0 : index
    %131 = vector.load %arg9[%130, %c0_67, %c0_68] : memref<8x2x256xf32, #tpu.memory_space<vmem>>, vector<1x2x256xf32>
    %132 = vector.shape_cast %131 : vector<1x2x256xf32> to vector<2x256xf32>
    %133 = vector.broadcast %15 : vector<1x256xf32> to vector<2x256xf32>
    %134 = arith.mulf %132, %133 : vector<2x256xf32>
    %135 = arith.addf %129, %134 : vector<2x256xf32>
    %cst_69 = arith.constant dense<0.000000e+00> : vector<2x256xf32>
    %136 = tpu.matmul %123, %12, %cst_69 {dimension_numbers = #tpu.dot_dimension_numbers<[1], [0], [0], [1], [0, 0, 1, 1], [], []>} : vector<2x64xf32>, vector<64x256xf32>, vector<2x256xf32> -> vector<2x256xf32>
    %137 = arith.addf %135, %136 : vector<2x256xf32>
    %138 = vector.extract_strided_slice %137 {offsets = [0, 0], sizes = [2, 64], strides = [1, 1]} : vector<2x256xf32> to vector<2x64xf32>
    %139 = arith.negf %138 : vector<2x64xf32>
    %140 = math.exp %139 : vector<2x64xf32>
    %cst_70 = arith.constant 1.000000e+00 : f32
    %141 = vector.broadcast %cst_70 : f32 to vector<2x64xf32>
    %142 = arith.addf %141, %140 : vector<2x64xf32>
    %143 = arith.divf %141, %142 : vector<2x64xf32>
    %144 = vector.extract_strided_slice %137 {offsets = [0, 64], sizes = [2, 64], strides = [1, 1]} : vector<2x256xf32> to vector<2x64xf32>
    %145 = arith.negf %144 : vector<2x64xf32>
    %146 = math.exp %145 : vector<2x64xf32>
    %cst_71 = arith.constant 1.000000e+00 : f32
    %147 = vector.broadcast %cst_71 : f32 to vector<2x64xf32>
    %148 = arith.addf %147, %146 : vector<2x64xf32>
    %149 = arith.divf %147, %148 : vector<2x64xf32>
    %150 = vector.extract_strided_slice %137 {offsets = [0, 128], sizes = [2, 64], strides = [1, 1]} : vector<2x256xf32> to vector<2x64xf32>
    %151 = math.tanh %150 : vector<2x64xf32>
    %152 = vector.extract_strided_slice %137 {offsets = [0, 192], sizes = [2, 64], strides = [1, 1]} : vector<2x256xf32> to vector<2x64xf32>
    %153 = arith.negf %152 : vector<2x64xf32>
    %154 = math.exp %153 : vector<2x64xf32>
    %cst_72 = arith.constant 1.000000e+00 : f32
    %155 = vector.broadcast %cst_72 : f32 to vector<2x64xf32>
    %156 = arith.addf %155, %154 : vector<2x64xf32>
    %157 = arith.divf %155, %156 : vector<2x64xf32>
    %158 = arith.mulf %149, %124 : vector<2x64xf32>
    %159 = arith.mulf %143, %151 : vector<2x64xf32>
    %160 = arith.addf %158, %159 : vector<2x64xf32>
    %161 = math.tanh %160 : vector<2x64xf32>
    %162 = arith.mulf %157, %161 : vector<2x64xf32>
    %c0_73 = arith.constant 0 : index
    %c0_74 = arith.constant 0 : index
    %163 = vector.load %arg12[%c0_73, %c0_74] : memref<2x64xf32, #tpu.memory_space<vmem>>, vector<2x64xf32>
    tpu.vector_store %arg12[%c0_73, %c0_74], %162 {strides = array<i32>} : memref<2x64xf32, #tpu.memory_space<vmem>>, vector<2x64xf32>,
    %c0_75 = arith.constant 0 : index
    %c0_76 = arith.constant 0 : index
    %164 = vector.load %arg13[%c0_75, %c0_76] : memref<2x64xf32, #tpu.memory_space<vmem>>, vector<2x64xf32>
    tpu.vector_store %arg13[%c0_75, %c0_76], %160 {strides = array<i32>} : memref<2x64xf32, #tpu.memory_space<vmem>>, vector<2x64xf32>,
    %165 = vector.extract_strided_slice %162 {offsets = [0, 0], sizes = [2, 32], strides = [1, 1]} : vector<2x64xf32> to vector<2x32xf32>
    %166 = arith.index_cast %c2_i32 : i32 to index
    %c0_77 = arith.constant 0 : index
    %c0_78 = arith.constant 0 : index
    %167 = vector.load %arg10[%166, %c0_77, %c0_78] : memref<8x2x32xf32, #tpu.memory_space<vmem>>, vector<1x2x32xf32>
    %168 = vector.shape_cast %167 : vector<1x2x32xf32> to vector<2x32xf32>
    %169 = vector.shape_cast %165 : vector<2x32xf32> to vector<1x2x32xf32>
    tpu.vector_store %arg10[%166, %c0_77, %c0_78], %169 {strides = array<i32>} : memref<8x2x32xf32, #tpu.memory_space<vmem>>, vector<1x2x32xf32>,
    %170 = vector.extract_strided_slice %162 {offsets = [0, 32], sizes = [2, 32], strides = [1, 1]} : vector<2x64xf32> to vector<2x32xf32>
    %171 = arith.index_cast %122 : i32 to index
    %c0_79 = arith.constant 0 : index
    %c0_80 = arith.constant 0 : index
    %172 = vector.load %arg11[%171, %c0_79, %c0_80] : memref<8x2x32xf32, #tpu.memory_space<vmem>>, vector<1x2x32xf32>
    %173 = vector.shape_cast %172 : vector<1x2x32xf32> to vector<2x32xf32>
    %174 = vector.shape_cast %170 : vector<2x32xf32> to vector<1x2x32xf32>
    tpu.vector_store %arg11[%171, %c0_79, %c0_80], %174 {strides = array<i32>} : memref<8x2x32xf32, #tpu.memory_space<vmem>>, vector<1x2x32xf32>,
    %c3_i32 = arith.constant 3 : i32
    %c7_i32_81 = arith.constant 7 : i32
    %175 = arith.subi %c7_i32_81, %c3_i32 : i32
    %c0_82 = arith.constant 0 : index
    %c0_83 = arith.constant 0 : index
    %176 = vector.load %arg12[%c0_82, %c0_83] : memref<2x64xf32, #tpu.memory_space<vmem>>, vector<2x64xf32>
    %c0_84 = arith.constant 0 : index
    %c0_85 = arith.constant 0 : index
    %177 = vector.load %arg13[%c0_84, %c0_85] : memref<2x64xf32, #tpu.memory_space<vmem>>, vector<2x64xf32>
    %178 = arith.index_cast %c3_i32 : i32 to index
    %c0_86 = arith.constant 0 : index
    %c0_87 = arith.constant 0 : index
    %179 = vector.load %arg9[%178, %c0_86, %c0_87] : memref<8x2x256xf32, #tpu.memory_space<vmem>>, vector<1x2x256xf32>
    %180 = vector.shape_cast %179 : vector<1x2x256xf32> to vector<2x256xf32>
    %181 = vector.broadcast %13 : vector<1x256xf32> to vector<2x256xf32>
    %182 = arith.mulf %180, %181 : vector<2x256xf32>
    %183 = arith.index_cast %175 : i32 to index
    %c0_88 = arith.constant 0 : index
    %c0_89 = arith.constant 0 : index
    %184 = vector.load %arg9[%183, %c0_88, %c0_89] : memref<8x2x256xf32, #tpu.memory_space<vmem>>, vector<1x2x256xf32>
    %185 = vector.shape_cast %184 : vector<1x2x256xf32> to vector<2x256xf32>
    %186 = vector.broadcast %15 : vector<1x256xf32> to vector<2x256xf32>
    %187 = arith.mulf %185, %186 : vector<2x256xf32>
    %188 = arith.addf %182, %187 : vector<2x256xf32>
    %cst_90 = arith.constant dense<0.000000e+00> : vector<2x256xf32>
    %189 = tpu.matmul %176, %12, %cst_90 {dimension_numbers = #tpu.dot_dimension_numbers<[1], [0], [0], [1], [0, 0, 1, 1], [], []>} : vector<2x64xf32>, vector<64x256xf32>, vector<2x256xf32> -> vector<2x256xf32>
    %190 = arith.addf %188, %189 : vector<2x256xf32>
    %191 = vector.extract_strided_slice %190 {offsets = [0, 0], sizes = [2, 64], strides = [1, 1]} : vector<2x256xf32> to vector<2x64xf32>
    %192 = arith.negf %191 : vector<2x64xf32>
    %193 = math.exp %192 : vector<2x64xf32>
    %cst_91 = arith.constant 1.000000e+00 : f32
    %194 = vector.broadcast %cst_91 : f32 to vector<2x64xf32>
    %195 = arith.addf %194, %193 : vector<2x64xf32>
    %196 = arith.divf %194, %195 : vector<2x64xf32>
    %197 = vector.extract_strided_slice %190 {offsets = [0, 64], sizes = [2, 64], strides = [1, 1]} : vector<2x256xf32> to vector<2x64xf32>
    %198 = arith.negf %197 : vector<2x64xf32>
    %199 = math.exp %198 : vector<2x64xf32>
    %cst_92 = arith.constant 1.000000e+00 : f32
    %200 = vector.broadcast %cst_92 : f32 to vector<2x64xf32>
    %201 = arith.addf %200, %199 : vector<2x64xf32>
    %202 = arith.divf %200, %201 : vector<2x64xf32>
    %203 = vector.extract_strided_slice %190 {offsets = [0, 128], sizes = [2, 64], strides = [1, 1]} : vector<2x256xf32> to vector<2x64xf32>
    %204 = math.tanh %203 : vector<2x64xf32>
    %205 = vector.extract_strided_slice %190 {offsets = [0, 192], sizes = [2, 64], strides = [1, 1]} : vector<2x256xf32> to vector<2x64xf32>
    %206 = arith.negf %205 : vector<2x64xf32>
    %207 = math.exp %206 : vector<2x64xf32>
    %cst_93 = arith.constant 1.000000e+00 : f32
    %208 = vector.broadcast %cst_93 : f32 to vector<2x64xf32>
    %209 = arith.addf %208, %207 : vector<2x64xf32>
    %210 = arith.divf %208, %209 : vector<2x64xf32>
    %211 = arith.mulf %202, %177 : vector<2x64xf32>
    %212 = arith.mulf %196, %204 : vector<2x64xf32>
    %213 = arith.addf %211, %212 : vector<2x64xf32>
    %214 = math.tanh %213 : vector<2x64xf32>
    %215 = arith.mulf %210, %214 : vector<2x64xf32>
    %c0_94 = arith.constant 0 : index
    %c0_95 = arith.constant 0 : index
    %216 = vector.load %arg12[%c0_94, %c0_95] : memref<2x64xf32, #tpu.memory_space<vmem>>, vector<2x64xf32>
    tpu.vector_store %arg12[%c0_94, %c0_95], %215 {strides = array<i32>} : memref<2x64xf32, #tpu.memory_space<vmem>>, vector<2x64xf32>,
    %c0_96 = arith.constant 0 : index
    %c0_97 = arith.constant 0 : index
    %217 = vector.load %arg13[%c0_96, %c0_97] : memref<2x64xf32, #tpu.memory_space<vmem>>, vector<2x64xf32>
    tpu.vector_store %arg13[%c0_96, %c0_97], %213 {strides = array<i32>} : memref<2x64xf32, #tpu.memory_space<vmem>>, vector<2x64xf32>,
    %218 = vector.extract_strided_slice %215 {offsets = [0, 0], sizes = [2, 32], strides = [1, 1]} : vector<2x64xf32> to vector<2x32xf32>
    %219 = arith.index_cast %c3_i32 : i32 to index
    %c0_98 = arith.constant 0 : index
    %c0_99 = arith.constant 0 : index
    %220 = vector.load %arg10[%219, %c0_98, %c0_99] : memref<8x2x32xf32, #tpu.memory_space<vmem>>, vector<1x2x32xf32>
    %221 = vector.shape_cast %220 : vector<1x2x32xf32> to vector<2x32xf32>
    %222 = vector.shape_cast %218 : vector<2x32xf32> to vector<1x2x32xf32>
    tpu.vector_store %arg10[%219, %c0_98, %c0_99], %222 {strides = array<i32>} : memref<8x2x32xf32, #tpu.memory_space<vmem>>, vector<1x2x32xf32>,
    %223 = vector.extract_strided_slice %215 {offsets = [0, 32], sizes = [2, 32], strides = [1, 1]} : vector<2x64xf32> to vector<2x32xf32>
    %224 = arith.index_cast %175 : i32 to index
    %c0_100 = arith.constant 0 : index
    %c0_101 = arith.constant 0 : index
    %225 = vector.load %arg11[%224, %c0_100, %c0_101] : memref<8x2x32xf32, #tpu.memory_space<vmem>>, vector<1x2x32xf32>
    %226 = vector.shape_cast %225 : vector<1x2x32xf32> to vector<2x32xf32>
    %227 = vector.shape_cast %223 : vector<2x32xf32> to vector<1x2x32xf32>
    tpu.vector_store %arg11[%224, %c0_100, %c0_101], %227 {strides = array<i32>} : memref<8x2x32xf32, #tpu.memory_space<vmem>>, vector<1x2x32xf32>,
    %c4_i32 = arith.constant 4 : i32
    %c7_i32_102 = arith.constant 7 : i32
    %228 = arith.subi %c7_i32_102, %c4_i32 : i32
    %c0_103 = arith.constant 0 : index
    %c0_104 = arith.constant 0 : index
    %229 = vector.load %arg12[%c0_103, %c0_104] : memref<2x64xf32, #tpu.memory_space<vmem>>, vector<2x64xf32>
    %c0_105 = arith.constant 0 : index
    %c0_106 = arith.constant 0 : index
    %230 = vector.load %arg13[%c0_105, %c0_106] : memref<2x64xf32, #tpu.memory_space<vmem>>, vector<2x64xf32>
    %231 = arith.index_cast %c4_i32 : i32 to index
    %c0_107 = arith.constant 0 : index
    %c0_108 = arith.constant 0 : index
    %232 = vector.load %arg9[%231, %c0_107, %c0_108] : memref<8x2x256xf32, #tpu.memory_space<vmem>>, vector<1x2x256xf32>
    %233 = vector.shape_cast %232 : vector<1x2x256xf32> to vector<2x256xf32>
    %234 = vector.broadcast %13 : vector<1x256xf32> to vector<2x256xf32>
    %235 = arith.mulf %233, %234 : vector<2x256xf32>
    %236 = arith.index_cast %228 : i32 to index
    %c0_109 = arith.constant 0 : index
    %c0_110 = arith.constant 0 : index
    %237 = vector.load %arg9[%236, %c0_109, %c0_110] : memref<8x2x256xf32, #tpu.memory_space<vmem>>, vector<1x2x256xf32>
    %238 = vector.shape_cast %237 : vector<1x2x256xf32> to vector<2x256xf32>
    %239 = vector.broadcast %15 : vector<1x256xf32> to vector<2x256xf32>
    %240 = arith.mulf %238, %239 : vector<2x256xf32>
    %241 = arith.addf %235, %240 : vector<2x256xf32>
    %cst_111 = arith.constant dense<0.000000e+00> : vector<2x256xf32>
    %242 = tpu.matmul %229, %12, %cst_111 {dimension_numbers = #tpu.dot_dimension_numbers<[1], [0], [0], [1], [0, 0, 1, 1], [], []>} : vector<2x64xf32>, vector<64x256xf32>, vector<2x256xf32> -> vector<2x256xf32>
    %243 = arith.addf %241, %242 : vector<2x256xf32>
    %244 = vector.extract_strided_slice %243 {offsets = [0, 0], sizes = [2, 64], strides = [1, 1]} : vector<2x256xf32> to vector<2x64xf32>
    %245 = arith.negf %244 : vector<2x64xf32>
    %246 = math.exp %245 : vector<2x64xf32>
    %cst_112 = arith.constant 1.000000e+00 : f32
    %247 = vector.broadcast %cst_112 : f32 to vector<2x64xf32>
    %248 = arith.addf %247, %246 : vector<2x64xf32>
    %249 = arith.divf %247, %248 : vector<2x64xf32>
    %250 = vector.extract_strided_slice %243 {offsets = [0, 64], sizes = [2, 64], strides = [1, 1]} : vector<2x256xf32> to vector<2x64xf32>
    %251 = arith.negf %250 : vector<2x64xf32>
    %252 = math.exp %251 : vector<2x64xf32>
    %cst_113 = arith.constant 1.000000e+00 : f32
    %253 = vector.broadcast %cst_113 : f32 to vector<2x64xf32>
    %254 = arith.addf %253, %252 : vector<2x64xf32>
    %255 = arith.divf %253, %254 : vector<2x64xf32>
    %256 = vector.extract_strided_slice %243 {offsets = [0, 128], sizes = [2, 64], strides = [1, 1]} : vector<2x256xf32> to vector<2x64xf32>
    %257 = math.tanh %256 : vector<2x64xf32>
    %258 = vector.extract_strided_slice %243 {offsets = [0, 192], sizes = [2, 64], strides = [1, 1]} : vector<2x256xf32> to vector<2x64xf32>
    %259 = arith.negf %258 : vector<2x64xf32>
    %260 = math.exp %259 : vector<2x64xf32>
    %cst_114 = arith.constant 1.000000e+00 : f32
    %261 = vector.broadcast %cst_114 : f32 to vector<2x64xf32>
    %262 = arith.addf %261, %260 : vector<2x64xf32>
    %263 = arith.divf %261, %262 : vector<2x64xf32>
    %264 = arith.mulf %255, %230 : vector<2x64xf32>
    %265 = arith.mulf %249, %257 : vector<2x64xf32>
    %266 = arith.addf %264, %265 : vector<2x64xf32>
    %267 = math.tanh %266 : vector<2x64xf32>
    %268 = arith.mulf %263, %267 : vector<2x64xf32>
    %c0_115 = arith.constant 0 : index
    %c0_116 = arith.constant 0 : index
    %269 = vector.load %arg12[%c0_115, %c0_116] : memref<2x64xf32, #tpu.memory_space<vmem>>, vector<2x64xf32>
    tpu.vector_store %arg12[%c0_115, %c0_116], %268 {strides = array<i32>} : memref<2x64xf32, #tpu.memory_space<vmem>>, vector<2x64xf32>,
    %c0_117 = arith.constant 0 : index
    %c0_118 = arith.constant 0 : index
    %270 = vector.load %arg13[%c0_117, %c0_118] : memref<2x64xf32, #tpu.memory_space<vmem>>, vector<2x64xf32>
    tpu.vector_store %arg13[%c0_117, %c0_118], %266 {strides = array<i32>} : memref<2x64xf32, #tpu.memory_space<vmem>>, vector<2x64xf32>,
    %271 = vector.extract_strided_slice %268 {offsets = [0, 0], sizes = [2, 32], strides = [1, 1]} : vector<2x64xf32> to vector<2x32xf32>
    %272 = arith.index_cast %c4_i32 : i32 to index
    %c0_119 = arith.constant 0 : index
    %c0_120 = arith.constant 0 : index
    %273 = vector.load %arg10[%272, %c0_119, %c0_120] : memref<8x2x32xf32, #tpu.memory_space<vmem>>, vector<1x2x32xf32>
    %274 = vector.shape_cast %273 : vector<1x2x32xf32> to vector<2x32xf32>
    %275 = vector.shape_cast %271 : vector<2x32xf32> to vector<1x2x32xf32>
    tpu.vector_store %arg10[%272, %c0_119, %c0_120], %275 {strides = array<i32>} : memref<8x2x32xf32, #tpu.memory_space<vmem>>, vector<1x2x32xf32>,
    %276 = vector.extract_strided_slice %268 {offsets = [0, 32], sizes = [2, 32], strides = [1, 1]} : vector<2x64xf32> to vector<2x32xf32>
    %277 = arith.index_cast %228 : i32 to index
    %c0_121 = arith.constant 0 : index
    %c0_122 = arith.constant 0 : index
    %278 = vector.load %arg11[%277, %c0_121, %c0_122] : memref<8x2x32xf32, #tpu.memory_space<vmem>>, vector<1x2x32xf32>
    %279 = vector.shape_cast %278 : vector<1x2x32xf32> to vector<2x32xf32>
    %280 = vector.shape_cast %276 : vector<2x32xf32> to vector<1x2x32xf32>
    tpu.vector_store %arg11[%277, %c0_121, %c0_122], %280 {strides = array<i32>} : memref<8x2x32xf32, #tpu.memory_space<vmem>>, vector<1x2x32xf32>,
    %c5_i32 = arith.constant 5 : i32
    %c7_i32_123 = arith.constant 7 : i32
    %281 = arith.subi %c7_i32_123, %c5_i32 : i32
    %c0_124 = arith.constant 0 : index
    %c0_125 = arith.constant 0 : index
    %282 = vector.load %arg12[%c0_124, %c0_125] : memref<2x64xf32, #tpu.memory_space<vmem>>, vector<2x64xf32>
    %c0_126 = arith.constant 0 : index
    %c0_127 = arith.constant 0 : index
    %283 = vector.load %arg13[%c0_126, %c0_127] : memref<2x64xf32, #tpu.memory_space<vmem>>, vector<2x64xf32>
    %284 = arith.index_cast %c5_i32 : i32 to index
    %c0_128 = arith.constant 0 : index
    %c0_129 = arith.constant 0 : index
    %285 = vector.load %arg9[%284, %c0_128, %c0_129] : memref<8x2x256xf32, #tpu.memory_space<vmem>>, vector<1x2x256xf32>
    %286 = vector.shape_cast %285 : vector<1x2x256xf32> to vector<2x256xf32>
    %287 = vector.broadcast %13 : vector<1x256xf32> to vector<2x256xf32>
    %288 = arith.mulf %286, %287 : vector<2x256xf32>
    %289 = arith.index_cast %281 : i32 to index
    %c0_130 = arith.constant 0 : index
    %c0_131 = arith.constant 0 : index
    %290 = vector.load %arg9[%289, %c0_130, %c0_131] : memref<8x2x256xf32, #tpu.memory_space<vmem>>, vector<1x2x256xf32>
    %291 = vector.shape_cast %290 : vector<1x2x256xf32> to vector<2x256xf32>
    %292 = vector.broadcast %15 : vector<1x256xf32> to vector<2x256xf32>
    %293 = arith.mulf %291, %292 : vector<2x256xf32>
    %294 = arith.addf %288, %293 : vector<2x256xf32>
    %cst_132 = arith.constant dense<0.000000e+00> : vector<2x256xf32>
    %295 = tpu.matmul %282, %12, %cst_132 {dimension_numbers = #tpu.dot_dimension_numbers<[1], [0], [0], [1], [0, 0, 1, 1], [], []>} : vector<2x64xf32>, vector<64x256xf32>, vector<2x256xf32> -> vector<2x256xf32>
    %296 = arith.addf %294, %295 : vector<2x256xf32>
    %297 = vector.extract_strided_slice %296 {offsets = [0, 0], sizes = [2, 64], strides = [1, 1]} : vector<2x256xf32> to vector<2x64xf32>
    %298 = arith.negf %297 : vector<2x64xf32>
    %299 = math.exp %298 : vector<2x64xf32>
    %cst_133 = arith.constant 1.000000e+00 : f32
    %300 = vector.broadcast %cst_133 : f32 to vector<2x64xf32>
    %301 = arith.addf %300, %299 : vector<2x64xf32>
    %302 = arith.divf %300, %301 : vector<2x64xf32>
    %303 = vector.extract_strided_slice %296 {offsets = [0, 64], sizes = [2, 64], strides = [1, 1]} : vector<2x256xf32> to vector<2x64xf32>
    %304 = arith.negf %303 : vector<2x64xf32>
    %305 = math.exp %304 : vector<2x64xf32>
    %cst_134 = arith.constant 1.000000e+00 : f32
    %306 = vector.broadcast %cst_134 : f32 to vector<2x64xf32>
    %307 = arith.addf %306, %305 : vector<2x64xf32>
    %308 = arith.divf %306, %307 : vector<2x64xf32>
    %309 = vector.extract_strided_slice %296 {offsets = [0, 128], sizes = [2, 64], strides = [1, 1]} : vector<2x256xf32> to vector<2x64xf32>
    %310 = math.tanh %309 : vector<2x64xf32>
    %311 = vector.extract_strided_slice %296 {offsets = [0, 192], sizes = [2, 64], strides = [1, 1]} : vector<2x256xf32> to vector<2x64xf32>
    %312 = arith.negf %311 : vector<2x64xf32>
    %313 = math.exp %312 : vector<2x64xf32>
    %cst_135 = arith.constant 1.000000e+00 : f32
    %314 = vector.broadcast %cst_135 : f32 to vector<2x64xf32>
    %315 = arith.addf %314, %313 : vector<2x64xf32>
    %316 = arith.divf %314, %315 : vector<2x64xf32>
    %317 = arith.mulf %308, %283 : vector<2x64xf32>
    %318 = arith.mulf %302, %310 : vector<2x64xf32>
    %319 = arith.addf %317, %318 : vector<2x64xf32>
    %320 = math.tanh %319 : vector<2x64xf32>
    %321 = arith.mulf %316, %320 : vector<2x64xf32>
    %c0_136 = arith.constant 0 : index
    %c0_137 = arith.constant 0 : index
    %322 = vector.load %arg12[%c0_136, %c0_137] : memref<2x64xf32, #tpu.memory_space<vmem>>, vector<2x64xf32>
    tpu.vector_store %arg12[%c0_136, %c0_137], %321 {strides = array<i32>} : memref<2x64xf32, #tpu.memory_space<vmem>>, vector<2x64xf32>,
    %c0_138 = arith.constant 0 : index
    %c0_139 = arith.constant 0 : index
    %323 = vector.load %arg13[%c0_138, %c0_139] : memref<2x64xf32, #tpu.memory_space<vmem>>, vector<2x64xf32>
    tpu.vector_store %arg13[%c0_138, %c0_139], %319 {strides = array<i32>} : memref<2x64xf32, #tpu.memory_space<vmem>>, vector<2x64xf32>,
    %324 = vector.extract_strided_slice %321 {offsets = [0, 0], sizes = [2, 32], strides = [1, 1]} : vector<2x64xf32> to vector<2x32xf32>
    %325 = arith.index_cast %c5_i32 : i32 to index
    %c0_140 = arith.constant 0 : index
    %c0_141 = arith.constant 0 : index
    %326 = vector.load %arg10[%325, %c0_140, %c0_141] : memref<8x2x32xf32, #tpu.memory_space<vmem>>, vector<1x2x32xf32>
    %327 = vector.shape_cast %326 : vector<1x2x32xf32> to vector<2x32xf32>
    %328 = vector.shape_cast %324 : vector<2x32xf32> to vector<1x2x32xf32>
    tpu.vector_store %arg10[%325, %c0_140, %c0_141], %328 {strides = array<i32>} : memref<8x2x32xf32, #tpu.memory_space<vmem>>, vector<1x2x32xf32>,
    %329 = vector.extract_strided_slice %321 {offsets = [0, 32], sizes = [2, 32], strides = [1, 1]} : vector<2x64xf32> to vector<2x32xf32>
    %330 = arith.index_cast %281 : i32 to index
    %c0_142 = arith.constant 0 : index
    %c0_143 = arith.constant 0 : index
    %331 = vector.load %arg11[%330, %c0_142, %c0_143] : memref<8x2x32xf32, #tpu.memory_space<vmem>>, vector<1x2x32xf32>
    %332 = vector.shape_cast %331 : vector<1x2x32xf32> to vector<2x32xf32>
    %333 = vector.shape_cast %329 : vector<2x32xf32> to vector<1x2x32xf32>
    tpu.vector_store %arg11[%330, %c0_142, %c0_143], %333 {strides = array<i32>} : memref<8x2x32xf32, #tpu.memory_space<vmem>>, vector<1x2x32xf32>,
    %c6_i32 = arith.constant 6 : i32
    %c7_i32_144 = arith.constant 7 : i32
    %334 = arith.subi %c7_i32_144, %c6_i32 : i32
    %c0_145 = arith.constant 0 : index
    %c0_146 = arith.constant 0 : index
    %335 = vector.load %arg12[%c0_145, %c0_146] : memref<2x64xf32, #tpu.memory_space<vmem>>, vector<2x64xf32>
    %c0_147 = arith.constant 0 : index
    %c0_148 = arith.constant 0 : index
    %336 = vector.load %arg13[%c0_147, %c0_148] : memref<2x64xf32, #tpu.memory_space<vmem>>, vector<2x64xf32>
    %337 = arith.index_cast %c6_i32 : i32 to index
    %c0_149 = arith.constant 0 : index
    %c0_150 = arith.constant 0 : index
    %338 = vector.load %arg9[%337, %c0_149, %c0_150] : memref<8x2x256xf32, #tpu.memory_space<vmem>>, vector<1x2x256xf32>
    %339 = vector.shape_cast %338 : vector<1x2x256xf32> to vector<2x256xf32>
    %340 = vector.broadcast %13 : vector<1x256xf32> to vector<2x256xf32>
    %341 = arith.mulf %339, %340 : vector<2x256xf32>
    %342 = arith.index_cast %334 : i32 to index
    %c0_151 = arith.constant 0 : index
    %c0_152 = arith.constant 0 : index
    %343 = vector.load %arg9[%342, %c0_151, %c0_152] : memref<8x2x256xf32, #tpu.memory_space<vmem>>, vector<1x2x256xf32>
    %344 = vector.shape_cast %343 : vector<1x2x256xf32> to vector<2x256xf32>
    %345 = vector.broadcast %15 : vector<1x256xf32> to vector<2x256xf32>
    %346 = arith.mulf %344, %345 : vector<2x256xf32>
    %347 = arith.addf %341, %346 : vector<2x256xf32>
    %cst_153 = arith.constant dense<0.000000e+00> : vector<2x256xf32>
    %348 = tpu.matmul %335, %12, %cst_153 {dimension_numbers = #tpu.dot_dimension_numbers<[1], [0], [0], [1], [0, 0, 1, 1], [], []>} : vector<2x64xf32>, vector<64x256xf32>, vector<2x256xf32> -> vector<2x256xf32>
    %349 = arith.addf %347, %348 : vector<2x256xf32>
    %350 = vector.extract_strided_slice %349 {offsets = [0, 0], sizes = [2, 64], strides = [1, 1]} : vector<2x256xf32> to vector<2x64xf32>
    %351 = arith.negf %350 : vector<2x64xf32>
    %352 = math.exp %351 : vector<2x64xf32>
    %cst_154 = arith.constant 1.000000e+00 : f32
    %353 = vector.broadcast %cst_154 : f32 to vector<2x64xf32>
    %354 = arith.addf %353, %352 : vector<2x64xf32>
    %355 = arith.divf %353, %354 : vector<2x64xf32>
    %356 = vector.extract_strided_slice %349 {offsets = [0, 64], sizes = [2, 64], strides = [1, 1]} : vector<2x256xf32> to vector<2x64xf32>
    %357 = arith.negf %356 : vector<2x64xf32>
    %358 = math.exp %357 : vector<2x64xf32>
    %cst_155 = arith.constant 1.000000e+00 : f32
    %359 = vector.broadcast %cst_155 : f32 to vector<2x64xf32>
    %360 = arith.addf %359, %358 : vector<2x64xf32>
    %361 = arith.divf %359, %360 : vector<2x64xf32>
    %362 = vector.extract_strided_slice %349 {offsets = [0, 128], sizes = [2, 64], strides = [1, 1]} : vector<2x256xf32> to vector<2x64xf32>
    %363 = math.tanh %362 : vector<2x64xf32>
    %364 = vector.extract_strided_slice %349 {offsets = [0, 192], sizes = [2, 64], strides = [1, 1]} : vector<2x256xf32> to vector<2x64xf32>
    %365 = arith.negf %364 : vector<2x64xf32>
    %366 = math.exp %365 : vector<2x64xf32>
    %cst_156 = arith.constant 1.000000e+00 : f32
    %367 = vector.broadcast %cst_156 : f32 to vector<2x64xf32>
    %368 = arith.addf %367, %366 : vector<2x64xf32>
    %369 = arith.divf %367, %368 : vector<2x64xf32>
    %370 = arith.mulf %361, %336 : vector<2x64xf32>
    %371 = arith.mulf %355, %363 : vector<2x64xf32>
    %372 = arith.addf %370, %371 : vector<2x64xf32>
    %373 = math.tanh %372 : vector<2x64xf32>
    %374 = arith.mulf %369, %373 : vector<2x64xf32>
    %c0_157 = arith.constant 0 : index
    %c0_158 = arith.constant 0 : index
    %375 = vector.load %arg12[%c0_157, %c0_158] : memref<2x64xf32, #tpu.memory_space<vmem>>, vector<2x64xf32>
    tpu.vector_store %arg12[%c0_157, %c0_158], %374 {strides = array<i32>} : memref<2x64xf32, #tpu.memory_space<vmem>>, vector<2x64xf32>,
    %c0_159 = arith.constant 0 : index
    %c0_160 = arith.constant 0 : index
    %376 = vector.load %arg13[%c0_159, %c0_160] : memref<2x64xf32, #tpu.memory_space<vmem>>, vector<2x64xf32>
    tpu.vector_store %arg13[%c0_159, %c0_160], %372 {strides = array<i32>} : memref<2x64xf32, #tpu.memory_space<vmem>>, vector<2x64xf32>,
    %377 = vector.extract_strided_slice %374 {offsets = [0, 0], sizes = [2, 32], strides = [1, 1]} : vector<2x64xf32> to vector<2x32xf32>
    %378 = arith.index_cast %c6_i32 : i32 to index
    %c0_161 = arith.constant 0 : index
    %c0_162 = arith.constant 0 : index
    %379 = vector.load %arg10[%378, %c0_161, %c0_162] : memref<8x2x32xf32, #tpu.memory_space<vmem>>, vector<1x2x32xf32>
    %380 = vector.shape_cast %379 : vector<1x2x32xf32> to vector<2x32xf32>
    %381 = vector.shape_cast %377 : vector<2x32xf32> to vector<1x2x32xf32>
    tpu.vector_store %arg10[%378, %c0_161, %c0_162], %381 {strides = array<i32>} : memref<8x2x32xf32, #tpu.memory_space<vmem>>, vector<1x2x32xf32>,
    %382 = vector.extract_strided_slice %374 {offsets = [0, 32], sizes = [2, 32], strides = [1, 1]} : vector<2x64xf32> to vector<2x32xf32>
    %383 = arith.index_cast %334 : i32 to index
    %c0_163 = arith.constant 0 : index
    %c0_164 = arith.constant 0 : index
    %384 = vector.load %arg11[%383, %c0_163, %c0_164] : memref<8x2x32xf32, #tpu.memory_space<vmem>>, vector<1x2x32xf32>
    %385 = vector.shape_cast %384 : vector<1x2x32xf32> to vector<2x32xf32>
    %386 = vector.shape_cast %382 : vector<2x32xf32> to vector<1x2x32xf32>
    tpu.vector_store %arg11[%383, %c0_163, %c0_164], %386 {strides = array<i32>} : memref<8x2x32xf32, #tpu.memory_space<vmem>>, vector<1x2x32xf32>,
    %c7_i32_165 = arith.constant 7 : i32
    %c7_i32_166 = arith.constant 7 : i32
    %387 = arith.subi %c7_i32_166, %c7_i32_165 : i32
    %c0_167 = arith.constant 0 : index
    %c0_168 = arith.constant 0 : index
    %388 = vector.load %arg12[%c0_167, %c0_168] : memref<2x64xf32, #tpu.memory_space<vmem>>, vector<2x64xf32>
    %c0_169 = arith.constant 0 : index
    %c0_170 = arith.constant 0 : index
    %389 = vector.load %arg13[%c0_169, %c0_170] : memref<2x64xf32, #tpu.memory_space<vmem>>, vector<2x64xf32>
    %390 = arith.index_cast %c7_i32_165 : i32 to index
    %c0_171 = arith.constant 0 : index
    %c0_172 = arith.constant 0 : index
    %391 = vector.load %arg9[%390, %c0_171, %c0_172] : memref<8x2x256xf32, #tpu.memory_space<vmem>>, vector<1x2x256xf32>
    %392 = vector.shape_cast %391 : vector<1x2x256xf32> to vector<2x256xf32>
    %393 = vector.broadcast %13 : vector<1x256xf32> to vector<2x256xf32>
    %394 = arith.mulf %392, %393 : vector<2x256xf32>
    %395 = arith.index_cast %387 : i32 to index
    %c0_173 = arith.constant 0 : index
    %c0_174 = arith.constant 0 : index
    %396 = vector.load %arg9[%395, %c0_173, %c0_174] : memref<8x2x256xf32, #tpu.memory_space<vmem>>, vector<1x2x256xf32>
    %397 = vector.shape_cast %396 : vector<1x2x256xf32> to vector<2x256xf32>
    %398 = vector.broadcast %15 : vector<1x256xf32> to vector<2x256xf32>
    %399 = arith.mulf %397, %398 : vector<2x256xf32>
    %400 = arith.addf %394, %399 : vector<2x256xf32>
    %cst_175 = arith.constant dense<0.000000e+00> : vector<2x256xf32>
    %401 = tpu.matmul %388, %12, %cst_175 {dimension_numbers = #tpu.dot_dimension_numbers<[1], [0], [0], [1], [0, 0, 1, 1], [], []>} : vector<2x64xf32>, vector<64x256xf32>, vector<2x256xf32> -> vector<2x256xf32>
    %402 = arith.addf %400, %401 : vector<2x256xf32>
    %403 = vector.extract_strided_slice %402 {offsets = [0, 0], sizes = [2, 64], strides = [1, 1]} : vector<2x256xf32> to vector<2x64xf32>
    %404 = arith.negf %403 : vector<2x64xf32>
    %405 = math.exp %404 : vector<2x64xf32>
    %cst_176 = arith.constant 1.000000e+00 : f32
    %406 = vector.broadcast %cst_176 : f32 to vector<2x64xf32>
    %407 = arith.addf %406, %405 : vector<2x64xf32>
    %408 = arith.divf %406, %407 : vector<2x64xf32>
    %409 = vector.extract_strided_slice %402 {offsets = [0, 64], sizes = [2, 64], strides = [1, 1]} : vector<2x256xf32> to vector<2x64xf32>
    %410 = arith.negf %409 : vector<2x64xf32>
    %411 = math.exp %410 : vector<2x64xf32>
    %cst_177 = arith.constant 1.000000e+00 : f32
    %412 = vector.broadcast %cst_177 : f32 to vector<2x64xf32>
    %413 = arith.addf %412, %411 : vector<2x64xf32>
    %414 = arith.divf %412, %413 : vector<2x64xf32>
    %415 = vector.extract_strided_slice %402 {offsets = [0, 128], sizes = [2, 64], strides = [1, 1]} : vector<2x256xf32> to vector<2x64xf32>
    %416 = math.tanh %415 : vector<2x64xf32>
    %417 = vector.extract_strided_slice %402 {offsets = [0, 192], sizes = [2, 64], strides = [1, 1]} : vector<2x256xf32> to vector<2x64xf32>
    %418 = arith.negf %417 : vector<2x64xf32>
    %419 = math.exp %418 : vector<2x64xf32>
    %cst_178 = arith.constant 1.000000e+00 : f32
    %420 = vector.broadcast %cst_178 : f32 to vector<2x64xf32>
    %421 = arith.addf %420, %419 : vector<2x64xf32>
    %422 = arith.divf %420, %421 : vector<2x64xf32>
    %423 = arith.mulf %414, %389 : vector<2x64xf32>
    %424 = arith.mulf %408, %416 : vector<2x64xf32>
    %425 = arith.addf %423, %424 : vector<2x64xf32>
    %426 = math.tanh %425 : vector<2x64xf32>
    %427 = arith.mulf %422, %426 : vector<2x64xf32>
    %c0_179 = arith.constant 0 : index
    %c0_180 = arith.constant 0 : index
    %428 = vector.load %arg12[%c0_179, %c0_180] : memref<2x64xf32, #tpu.memory_space<vmem>>, vector<2x64xf32>
    tpu.vector_store %arg12[%c0_179, %c0_180], %427 {strides = array<i32>} : memref<2x64xf32, #tpu.memory_space<vmem>>, vector<2x64xf32>,
    %c0_181 = arith.constant 0 : index
    %c0_182 = arith.constant 0 : index
    %429 = vector.load %arg13[%c0_181, %c0_182] : memref<2x64xf32, #tpu.memory_space<vmem>>, vector<2x64xf32>
    tpu.vector_store %arg13[%c0_181, %c0_182], %425 {strides = array<i32>} : memref<2x64xf32, #tpu.memory_space<vmem>>, vector<2x64xf32>,
    %430 = vector.extract_strided_slice %427 {offsets = [0, 0], sizes = [2, 32], strides = [1, 1]} : vector<2x64xf32> to vector<2x32xf32>
    %431 = arith.index_cast %c7_i32_165 : i32 to index
    %c0_183 = arith.constant 0 : index
    %c0_184 = arith.constant 0 : index
    %432 = vector.load %arg10[%431, %c0_183, %c0_184] : memref<8x2x32xf32, #tpu.memory_space<vmem>>, vector<1x2x32xf32>
    %433 = vector.shape_cast %432 : vector<1x2x32xf32> to vector<2x32xf32>
    %434 = vector.shape_cast %430 : vector<2x32xf32> to vector<1x2x32xf32>
    tpu.vector_store %arg10[%431, %c0_183, %c0_184], %434 {strides = array<i32>} : memref<8x2x32xf32, #tpu.memory_space<vmem>>, vector<1x2x32xf32>,
    %435 = vector.extract_strided_slice %427 {offsets = [0, 32], sizes = [2, 32], strides = [1, 1]} : vector<2x64xf32> to vector<2x32xf32>
    %436 = arith.index_cast %387 : i32 to index
    %c0_185 = arith.constant 0 : index
    %c0_186 = arith.constant 0 : index
    %437 = vector.load %arg11[%436, %c0_185, %c0_186] : memref<8x2x32xf32, #tpu.memory_space<vmem>>, vector<1x2x32xf32>
    %438 = vector.shape_cast %437 : vector<1x2x32xf32> to vector<2x32xf32>
    %439 = vector.shape_cast %435 : vector<2x32xf32> to vector<1x2x32xf32>
    tpu.vector_store %arg11[%436, %c0_185, %c0_186], %439 {strides = array<i32>} : memref<8x2x32xf32, #tpu.memory_space<vmem>>, vector<1x2x32xf32>,
    %c8_i32 = arith.constant 8 : i32
    %c0_187 = arith.constant 0 : index
    %c0_188 = arith.constant 0 : index
    %c0_189 = arith.constant 0 : index
    %440 = vector.load %arg10[%c0_187, %c0_188, %c0_189] : memref<8x2x32xf32, #tpu.memory_space<vmem>>, vector<8x2x32xf32>
    %441 = vector.shape_cast %440 : vector<8x2x32xf32> to vector<16x32xf32>
    %c0_190 = arith.constant 0 : index
    %c0_191 = arith.constant 0 : index
    %c0_192 = arith.constant 0 : index
    %442 = vector.load %arg11[%c0_190, %c0_191, %c0_192] : memref<8x2x32xf32, #tpu.memory_space<vmem>>, vector<8x2x32xf32>
    %443 = vector.shape_cast %442 : vector<8x2x32xf32> to vector<16x32xf32>
    %c0_193 = arith.constant 0 : index
    %c0_194 = arith.constant 0 : index
    %444 = vector.load %arg6[%c0_193, %c0_194] : memref<64x128xf32, #tpu.memory_space<vmem>>, vector<32x128xf32>
    %cst_195 = arith.constant dense<0.000000e+00> : vector<16x128xf32>
    %445 = tpu.matmul %441, %444, %cst_195 {dimension_numbers = #tpu.dot_dimension_numbers<[1], [0], [0], [1], [0, 0, 1, 1], [], []>} : vector<16x32xf32>, vector<32x128xf32>, vector<16x128xf32> -> vector<16x128xf32>
    %c32 = arith.constant 32 : index
    %c0_196 = arith.constant 0 : index
    %446 = vector.load %arg6[%c32, %c0_196] : memref<64x128xf32, #tpu.memory_space<vmem>>, vector<32x128xf32>
    %cst_197 = arith.constant dense<0.000000e+00> : vector<16x128xf32>
    %447 = tpu.matmul %443, %446, %cst_197 {dimension_numbers = #tpu.dot_dimension_numbers<[1], [0], [0], [1], [0, 0, 1, 1], [], []>} : vector<16x32xf32>, vector<32x128xf32>, vector<16x128xf32> -> vector<16x128xf32>
    %448 = arith.addf %445, %447 : vector<16x128xf32>
    %c0_198 = arith.constant 0 : index
    %c0_199 = arith.constant 0 : index
    %449 = vector.load %arg7[%c0_198, %c0_199] : memref<1x128xf32, #tpu.memory_space<vmem>>, vector<1x128xf32>
    %450 = vector.broadcast %449 : vector<1x128xf32> to vector<16x128xf32>
    %451 = arith.addf %448, %450 : vector<16x128xf32>
    %c0_200 = arith.constant 0 : index
    %c0_201 = arith.constant 0 : index
    %452 = vector.load %arg8[%c0_200, %c0_201] : memref<16x128xf32, #tpu.memory_space<vmem>>, vector<16x128xf32>
    tpu.vector_store %arg8[%c0_200, %c0_201], %451 {strides = array<i32>} : memref<16x128xf32, #tpu.memory_space<vmem>>, vector<16x128xf32>,
    return
  }
  func.func @transform_0(%arg0: i32) -> (i32, i32) {
    %c0_i32 = arith.constant 0 : i32
    %c0_i32_0 = arith.constant 0 : i32
    %c0_i32_1 = arith.constant 0 : i32
    return %c0_i32, %c0_i32_0 : i32, i32
  }
  func.func @transform_1(%arg0: i32) -> (i32, i32) {
    %c0_i32 = arith.constant 0 : i32
    %c0_i32_0 = arith.constant 0 : i32
    %c0_i32_1 = arith.constant 0 : i32
    return %c0_i32, %c0_i32_0 : i32, i32
  }
  func.func @transform_2(%arg0: i32) -> (i32, i32) {
    %c0_i32 = arith.constant 0 : i32
    %c0_i32_0 = arith.constant 0 : i32
    %c0_i32_1 = arith.constant 0 : i32
    return %c0_i32, %c0_i32_0 : i32, i32
  }
  func.func @transform_3(%arg0: i32) -> (i32, i32) {
    %c0_i32 = arith.constant 0 : i32
    %c0_i32_0 = arith.constant 0 : i32
    %c0_i32_1 = arith.constant 0 : i32
    return %c0_i32, %c0_i32_0 : i32, i32
  }
  func.func @transform_4(%arg0: i32) -> (i32, i32) {
    %c0_i32 = arith.constant 0 : i32
    %c0_i32_0 = arith.constant 0 : i32
    %c0_i32_1 = arith.constant 0 : i32
    return %c0_i32, %c0_i32_0 : i32, i32
  }
  func.func @transform_5(%arg0: i32) -> (i32, i32) {
    %c0_i32 = arith.constant 0 : i32
    %c0_i32_0 = arith.constant 0 : i32
    %c0_i32_1 = arith.constant 0 : i32
    return %c0_i32, %c0_i32_0 : i32, i32
  }
  func.func @transform_6(%arg0: i32) -> (i32, i32) {
    %c0_i32 = arith.constant 0 : i32
    %c0_i32_0 = arith.constant 0 : i32
    %c0_i32_1 = arith.constant 0 : i32
    return %c0_i32, %c0_i32_0 : i32, i32
  }
  func.func @transform_7(%arg0: i32) -> (i32, i32) {
    %c0_i32 = arith.constant 0 : i32
    %c0_i32_0 = arith.constant 0 : i32
    %c0_i32_1 = arith.constant 0 : i32
    return %c0_i32, %c0_i32_0 : i32, i32
  }
}

</mosaic_0001>

<llo_original>
// kernel: custom-call.8
$region0: #{custom-call.8}
  %s0 = inlined_call_operand.vmem [shape: s32[7,2,5], index: 0, kind: output, shape index: {}]

// kernel: bilstm_lstm_crf_forward.2
$region0: #{bilstm_lstm_crf_forward.2}
  #allocation0 [shape = 'u32[]', space=smem, size = 0x4, offset = 0x4, fixed_abs, tag = 'smem constant byte address 0x4 - core index']
  #allocation1 [shape = 'u32[144,128]{1,0:T(1,128)}', space=vmem, size = 0x12000, scoped, tag = 'internal scratch']
  #allocation2 [shape = 'f32[2,48,128]{2,1,0:T(8,128)}', space=vmem, size = 0xc000, scoped, tag = 'scratch operand']
  #allocation3 [shape = 'f32[48,32]{1,0:T(8,128)}', space=vmem, size = 0x6000, scoped, tag = 'scratch operand']
  #allocation4 [shape = 'f32[48,32]{1,0:T(8,128)}', space=vmem, size = 0x6000, scoped, tag = 'scratch operand']
  %s0 = inlined_call_operand.vmem [shape: f32[96,32], index: 0, kind: input, shape index: {}]
  %s1 = inlined_call_operand.vmem [shape: f32[32,128], index: 1, kind: input, shape index: {}]
  %s2 = inlined_call_operand.vmem [shape: f32[32,128], index: 2, kind: input, shape index: {}]
  %s3 = inlined_call_operand.vmem [shape: f32[1,128], index: 3, kind: input, shape index: {}]
  %s4 = inlined_call_operand.vmem [shape: f32[2,8,32], index: 4, kind: output, shape index: {}]
  %s5 = sld [smem:[#allocation0]]
  $region26: #{bilstm_lstm_crf_forward.2} parent=0
    _
  %s7 = ssub.s32 1, %s5
  %s8 = scalar_select 0, %s7, %s5
  // Predicated region
  $region2: #{bilstm_lstm_crf_forward.2} parent=0 // pred_check
    _
  $region3: #{bilstm_lstm_crf_forward.2} parent=0 // pred_check_branch
    %10 = sbr.rel (0) target = $region5
  $region4: #{bilstm_lstm_crf_forward.2} parent=0 // pred_region
    _
  $region5: #{bilstm_lstm_crf_forward.2} parent=0 // pred_fallthru
    _
  // Predicated region
  $region6: #{bilstm_lstm_crf_forward.2} parent=0 // pred_check
    _
  $region7: #{bilstm_lstm_crf_forward.2} parent=0 // pred_check_branch
    %12 = sbr.rel (0) target = $region9
  $region8: #{bilstm_lstm_crf_forward.2} parent=0 // pred_region
    _
  $region9: #{bilstm_lstm_crf_forward.2} parent=0 // pred_fallthru
    _
  // Predicated region
  $region10: #{bilstm_lstm_crf_forward.2} parent=0 // pred_check
    _
  $region11: #{bilstm_lstm_crf_forward.2} parent=0 // pred_check_branch
    %14 = sbr.rel (0) target = $region13
  $region12: #{bilstm_lstm_crf_forward.2} parent=0 // pred_region
    _
  $region13: #{bilstm_lstm_crf_forward.2} parent=0 // pred_fallthru
    _
  // Predicated region
  $region14: #{bilstm_lstm_crf_forward.2} parent=0 // pred_check
    _
  $region15: #{bilstm_lstm_crf_forward.2} parent=0 // pred_check_branch
    %16 = sbr.rel (0) target = $region17
  $region16: #{bilstm_lstm_crf_forward.2} parent=0 // pred_region
    _
  $region17: #{bilstm_lstm_crf_forward.2} parent=0 // pred_fallthru
    _
  %v17 = vld [vmem:[%s0] sm:$0xff]
  %v18 = vld [vmem:[%s0 + $0x8] sm:$0xff]
  %v19 = vld [vmem:[%s0 + $0x10] sm:$0xff]
  %v20 = vld [vmem:[%s0 + $0x18] sm:$0xff]
  %v21 = vld [vmem:[%s0 + $0x20] sm:$0xff]
  %v22 = vld [vmem:[%s0 + $0x28] sm:$0xff]
  %v23 = vld [vmem:[%s0 + $0x30] sm:$0xff]
  %v24 = vld [vmem:[%s0 + $0x38] sm:$0xff]
  %v25 = vld [vmem:[%s0 + $0x40] sm:$0xff]
  %v26 = vld [vmem:[%s0 + $0x48] sm:$0xff]
  %v27 = vld [vmem:[%s0 + $0x50] sm:$0xff]
  %v28 = vld [vmem:[%s0 + $0x58] sm:$0xff]
  %v29 = vld [vmem:[%s1] sm:$0xff]
  %v30 = vld [vmem:[%s1 + $0x8] sm:$0xff]
  %v31 = vld [vmem:[%s1 + $0x10] sm:$0xff]
  %v32 = vld [vmem:[%s1 + $0x18] sm:$0xff]
  %v33 = vld [vmem:[%s3] sm:$0x1]
  %v35 = vlaneseq
  %v36 = vshrl.u32 %v35, 7
  %v37 = vsub.s32 0, %v36
  %v38 = vrot.slane %v33, %v37
  %vm40 = vcmask 261120
  %v42 = vsel %vm40, %v17, 0
  %v45 = vsel %vm40, %v18, 0
  %v48 = vsel %vm40, %v19, 0
  %v51 = vsel %vm40, %v20, 0
  %v54 = vsel %vm40, %v21, 0
  %v57 = vsel %vm40, %v22, 0
  %v60 = vsel %vm40, %v23, 0
  %v63 = vsel %vm40, %v24, 0
  %v66 = vsel %vm40, %v25, 0
  %v69 = vsel %vm40, %v26, 0
  %v72 = vsel %vm40, %v27, 0
  %v75 = vsel %vm40, %v28, 0
  %77 = vmatprep.subr.mxu0 0.0
  %78 = vmatpush1.msra.mxu0 0.0
  %79 = vmatprep.subr.mxu0 0.0
  %80 = vmatpush1.msra.mxu0 0.0
  %81 = vmatprep.subr.mxu0 0.0
  %82 = vmatpush1.msra.mxu0 0.0
  %83 = vmatprep.subr.mxu0 0.0
  %84 = vmatpush1.msra.mxu0 0.0
  %85 = vmatprep.subr.mxu0 0.0
  %86 = vmatpush1.msra.mxu0 0.0
  %87 = vmatprep.subr.mxu0 0.0
  %88 = vmatpush1.msra.mxu0 0.0
  %89 = vmatprep.subr.mxu0 0.0
  %90 = vmatpush1.msra.mxu0 0.0
  %91 = vmatprep.subr.mxu0 0.0
  %92 = vmatpush1.msra.mxu0 0.0
  %93 = vmatprep.subr.mxu0 0.0
  %94 = vmatpush1.msra.mxu0 0.0
  %95 = vmatprep.subr.mxu0 0.0
  %96 = vmatpush1.msra.mxu0 0.0
  %97 = vmatprep.subr.mxu0 0.0
  %98 = vmatpush1.msra.mxu0 0.0
  %99 = vmatprep.subr.mxu0 0.0
  %100 = vmatpush1.msra.mxu0 0.0
  %101 = vmatprep.subr.mxu0 0.0
  %102 = vmatpush1.msra.mxu0 %v32
  %103 = vmatprep.subr.mxu0 0.0
  %104 = vmatpush1.msra.mxu0 %v31
  %105 = vmatprep.subr.mxu0 0.0
  %106 = vmatpush1.msra.mxu0 %v30
  %107 = vmatprep.subr.mxu0 0.0
  %108 = vmatpush1.msra.mxu0 %v29
  %109 = vmatprep.subr.mxu0 0.0
  %110 = vmatpush2.msra.mxu0 0.0
  %111 = vmatprep.subr.mxu0 0.0
  %112 = vmatpush2.msra.mxu0 0.0
  %113 = vmatprep.subr.mxu0 0.0
  %114 = vmatpush2.msra.mxu0 0.0
  %115 = vmatprep.subr.mxu0 0.0
  %116 = vmatpush2.msra.mxu0 0.0
  %117 = vmatprep.subr.mxu0 0.0
  %118 = vmatpush2.msra.mxu0 0.0
  %119 = vmatprep.subr.mxu0 0.0
  %120 = vmatpush2.msra.mxu0 0.0
  %121 = vmatprep.subr.mxu0 0.0
  %122 = vmatpush2.msra.mxu0 0.0
  %123 = vmatprep.subr.mxu0 0.0
  %124 = vmatpush2.msra.mxu0 0.0
  %125 = vmatprep.subr.mxu0 0.0
  %126 = vmatpush2.msra.mxu0 0.0
  %127 = vmatprep.subr.mxu0 0.0
  %128 = vmatpush2.msra.mxu0 0.0
  %129 = vmatprep.subr.mxu0 0.0
  %130 = vmatpush2.msra.mxu0 0.0
  %131 = vmatprep.subr.mxu0 0.0
  %132 = vmatpush2.msra.mxu0 0.0
  %133 = vmatprep.subr.mxu0 0.0
  %134 = vmatpush2.msra.mxu0 0.0
  %135 = vmatprep.subr.mxu0 0.0
  %136 = vmatpush2.msra.mxu0 0.0
  %137 = vmatprep.subr.mxu0 0.0
  %138 = vmatpush2.msra.mxu0 0.0
  %139 = vmatprep.subr.mxu0 0.0
  %140 = vmatpush2.msra.mxu0 0.0
  %141 = vmatprep.mubr.f32.mxu0 0.0
  %142 = vmatmul.mubr.f32.gmra.mxu0 %v42
  %v143 = vpop.f32.mrf.mxu0
  %v144 = vadd.f32 %v38, %v143
  %v145 = vpop.f32.mrf.mxu0
  %146 = vmatprep.mubr.f32.mxu0 0.0
  %147 = vmatmul.mubr.f32.gmra.mxu0 %v45
  %v148 = vpop.f32.mrf.mxu0
  %v149 = vadd.f32 %v38, %v148
  %v150 = vpop.f32.mrf.mxu0
  %151 = vmatprep.mubr.f32.mxu0 0.0
  %152 = vmatmul.mubr.f32.gmra.mxu0 %v48
  %v153 = vpop.f32.mrf.mxu0
  %v154 = vadd.f32 %v38, %v153
  %v155 = vpop.f32.mrf.mxu0
  %156 = vmatprep.mubr.f32.mxu0 0.0
  %157 = vmatmul.mubr.f32.gmra.mxu0 %v51
  %v158 = vpop.f32.mrf.mxu0
  %v159 = vadd.f32 %v38, %v158
  %v160 = vpop.f32.mrf.mxu0
  %161 = vmatprep.mubr.f32.mxu0 0.0
  %162 = vmatmul.mubr.f32.gmra.mxu0 %v54
  %v163 = vpop.f32.mrf.mxu0
  %v164 = vadd.f32 %v38, %v163
  %v165 = vpop.f32.mrf.mxu0
  %166 = vmatprep.mubr.f32.mxu0 0.0
  %167 = vmatmul.mubr.f32.gmra.mxu0 %v57
  %v168 = vpop.f32.mrf.mxu0
  %v169 = vadd.f32 %v38, %v168
  %v170 = vpop.f32.mrf.mxu0
  %171 = vmatprep.mubr.f32.mxu0 0.0
  %172 = vmatmul.mubr.f32.gmra.mxu0 %v60
  %v173 = vpop.f32.mrf.mxu0
  %v174 = vadd.f32 %v38, %v173
  %v175 = vpop.f32.mrf.mxu0
  %176 = vmatprep.mubr.f32.mxu0 0.0
  %177 = vmatmul.mubr.f32.gmra.mxu0 %v63
  %v178 = vpop.f32.mrf.mxu0
  %v179 = vadd.f32 %v38, %v178
  %v180 = vpop.f32.mrf.mxu0
  %181 = vmatprep.mubr.f32.mxu0 0.0
  %182 = vmatmul.mubr.f32.gmra.mxu0 %v66
  %v183 = vpop.f32.mrf.mxu0
  %v184 = vadd.f32 %v38, %v183
  %v185 = vpop.f32.mrf.mxu0
  %186 = vmatprep.mubr.f32.mxu0 0.0
  %187 = vmatmul.mubr.f32.gmra.mxu0 %v69
  %v188 = vpop.f32.mrf.mxu0
  %v189 = vadd.f32 %v38, %v188
  %v190 = vpop.f32.mrf.mxu0
  %191 = vmatprep.mubr.f32.mxu0 0.0
  %192 = vmatmul.mubr.f32.gmra.mxu0 %v72
  %v193 = vpop.f32.mrf.mxu0
  %v194 = vadd.f32 %v38, %v193
  %v195 = vpop.f32.mrf.mxu0
  %196 = vmatprep.mubr.f32.mxu0 0.0
  %197 = vmatmul.mubr.f32.gmra.mxu0 %v75
  %v198 = vpop.f32.mrf.mxu0
  %v199 = vadd.f32 %v38, %v198
  %v200 = vpop.f32.mrf.mxu0
  %201 = vdwg.mxu0
  %202 = vst [vmem:[#allocation2] sm:$0xff] %v144
  %203 = vst [vmem:[#allocation2 + $0x8] sm:$0xff] %v149
  %204 = vst [vmem:[#allocation2 + $0x10] sm:$0xff] %v154
  %205 = vst [vmem:[#allocation2 + $0x18] sm:$0xff] %v159
  %206 = vst [vmem:[#allocation2 + $0x20] sm:$0xff] %v164
  %207 = vst [vmem:[#allocation2 + $0x28] sm:$0xff] %v169
  %208 = vst [vmem:[#allocation2 + $0x30] sm:$0xff] %v174
  %209 = vst [vmem:[#allocation2 + $0x38] sm:$0xff] %v179
  %210 = vst [vmem:[#allocation2 + $0x40] sm:$0xff] %v184
  %211 = vst [vmem:[#allocation2 + $0x48] sm:$0xff] %v189
  %212 = vst [vmem:[#allocation2 + $0x50] sm:$0xff] %v194
  %213 = vst [vmem:[#allocation2 + $0x58] sm:$0xff] %v199
  %214 = vst.msk [vmem:[#allocation3] sm:$0xff] %vm40, 0.0
  %215 = vst.msk [vmem:[#allocation3 + $0x8] sm:$0xff] %vm40, 0.0
  %216 = vst.msk [vmem:[#allocation3 + $0x10] sm:$0xff] %vm40, 0.0
  %217 = vst.msk [vmem:[#allocation3 + $0x18] sm:$0xff] %vm40, 0.0
  %218 = vst.msk [vmem:[#allocation3 + $0x20] sm:$0xff] %vm40, 0.0
  %219 = vst.msk [vmem:[#allocation3 + $0x28] sm:$0xff] %vm40, 0.0
  %220 = vst.msk [vmem:[#allocation4] sm:$0xff] %vm40, 0.0
  %221 = vst.msk [vmem:[#allocation4 + $0x8] sm:$0xff] %vm40, 0.0
  %222 = vst.msk [vmem:[#allocation4 + $0x10] sm:$0xff] %vm40, 0.0
  %223 = vst.msk [vmem:[#allocation4 + $0x18] sm:$0xff] %vm40, 0.0
  %224 = vst.msk [vmem:[#allocation4 + $0x20] sm:$0xff] %vm40, 0.0
  %225 = vst.msk [vmem:[#allocation4 + $0x28] sm:$0xff] %vm40, 0.0
  %v226 = vld [vmem:[%s2] sm:$0xff]
  %v227 = vld [vmem:[%s2 + $0x8] sm:$0xff]
  %v228 = vld [vmem:[%s2 + $0x10] sm:$0xff]
  %v229 = vld [vmem:[%s2 + $0x18] sm:$0xff]
  %v230 = vld [vmem:[#allocation3] sm:$0xff]
  %v231 = vld [vmem:[#allocation3 + $0x8] sm:$0xff]
  %v232 = vld [vmem:[#allocation3 + $0x10] sm:$0xff]
  %v233 = vld [vmem:[#allocation3 + $0x18] sm:$0xff]
  %v234 = vld [vmem:[#allocation3 + $0x20] sm:$0xff]
  %v235 = vld [vmem:[#allocation3 + $0x28] sm:$0xff]
  %v236 = vld [vmem:[#allocation4] sm:$0xff]
  %v237 = vld [vmem:[#allocation4 + $0x8] sm:$0xff]
  %v238 = vld [vmem:[#allocation4 + $0x10] sm:$0xff]
  %v239 = vld [vmem:[#allocation4 + $0x18] sm:$0xff]
  %v240 = vld [vmem:[#allocation4 + $0x20] sm:$0xff]
  %v241 = vld [vmem:[#allocation4 + $0x28] sm:$0xff]
  %v242 = vld [vmem:[#allocation2] sm:$0xff]
  %v243 = vld [vmem:[#allocation2 + $0x8] sm:$0xff]
  %v244 = vld [vmem:[#allocation2 + $0x10] sm:$0xff]
  %v245 = vld [vmem:[#allocation2 + $0x18] sm:$0xff]
  %v246 = vld [vmem:[#allocation2 + $0x20] sm:$0xff]
  %v247 = vld [vmem:[#allocation2 + $0x28] sm:$0xff]
  %v249 = vsel %vm40, %v230, 0
  %v252 = vsel %vm40, %v231, 0
  %v255 = vsel %vm40, %v232, 0
  %v258 = vsel %vm40, %v233, 0
  %v261 = vsel %vm40, %v234, 0
  %v264 = vsel %vm40, %v235, 0
  %266 = vmatprep.subr.mxu0 0.0
  %267 = vmatpush1.msra.mxu0 0.0
  %268 = vmatprep.subr.mxu0 0.0
  %269 = vmatpush1.msra.mxu0 0.0
  %270 = vmatprep.subr.mxu0 0.0
  %271 = vmatpush1.msra.mxu0 0.0
  %272 = vmatprep.subr.mxu0 0.0
  %273 = vmatpush1.msra.mxu0 0.0
  %274 = vmatprep.subr.mxu0 0.0
  %275 = vmatpush1.msra.mxu0 0.0
  %276 = vmatprep.subr.mxu0 0.0
  %277 = vmatpush1.msra.mxu0 0.0
  %278 = vmatprep.subr.mxu0 0.0
  %279 = vmatpush1.msra.mxu0 0.0
  %280 = vmatprep.subr.mxu0 0.0
  %281 = vmatpush1.msra.mxu0 0.0
  %282 = vmatprep.subr.mxu0 0.0
  %283 = vmatpush1.msra.mxu0 0.0
  %284 = vmatprep.subr.mxu0 0.0
  %285 = vmatpush1.msra.mxu0 0.0
  %286 = vmatprep.subr.mxu0 0.0
  %287 = vmatpush1.msra.mxu0 0.0
  %288 = vmatprep.subr.mxu0 0.0
  %289 = vmatpush1.msra.mxu0 0.0
  %290 = vmatprep.subr.mxu0 0.0
  %291 = vmatpush1.msra.mxu0 %v229
  %292 = vmatprep.subr.mxu0 0.0
  %293 = vmatpush1.msra.mxu0 %v228
  %294 = vmatprep.subr.mxu0 0.0
  %295 = vmatpush1.msra.mxu0 %v227
  %296 = vmatprep.subr.mxu0 0.0
  %297 = vmatpush1.msra.mxu0 %v226
  %298 = vmatprep.subr.mxu0 0.0
  %299 = vmatpush2.msra.mxu0 0.0
  %300 = vmatprep.subr.mxu0 0.0
  %301 = vmatpush2.msra.mxu0 0.0
  %302 = vmatprep.subr.mxu0 0.0
  %303 = vmatpush2.msra.mxu0 0.0
  %304 = vmatprep.subr.mxu0 0.0
  %305 = vmatpush2.msra.mxu0 0.0
  %306 = vmatprep.subr.mxu0 0.0
  %307 = vmatpush2.msra.mxu0 0.0
  %308 = vmatprep.subr.mxu0 0.0
  %309 = vmatpush2.msra.mxu0 0.0
  %310 = vmatprep.subr.mxu0 0.0
  %311 = vmatpush2.msra.mxu0 0.0
  %312 = vmatprep.subr.mxu0 0.0
  %313 = vmatpush2.msra.mxu0 0.0
  %314 = vmatprep.subr.mxu0 0.0
  %315 = vmatpush2.msra.mxu0 0.0
  %316 = vmatprep.subr.mxu0 0.0
  %317 = vmatpush2.msra.mxu0 0.0
  %318 = vmatprep.subr.mxu0 0.0
  %319 = vmatpush2.msra.mxu0 0.0
  %320 = vmatprep.subr.mxu0 0.0
  %321 = vmatpush2.msra.mxu0 0.0
  %322 = vmatprep.subr.mxu0 0.0
  %323 = vmatpush2.msra.mxu0 0.0
  %324 = vmatprep.subr.mxu0 0.0
  %325 = vmatpush2.msra.mxu0 0.0
  %326 = vmatprep.subr.mxu0 0.0
  %327 = vmatpush2.msra.mxu0 0.0
  %328 = vmatprep.subr.mxu0 0.0
  %329 = vmatpush2.msra.mxu0 0.0
  %330 = vmatprep.mubr.f32.mxu0 0.0
  %331 = vmatmul.mubr.f32.gmra.mxu0 %v249
  %v332 = vpop.f32.mrf.mxu0
  %v333 = vadd.f32 0.0, %v332
  %v334 = vpop.f32.mrf.mxu0
  %335 = vmatprep.mubr.f32.mxu0 0.0
  %336 = vmatmul.mubr.f32.gmra.mxu0 %v252
  %v337 = vpop.f32.mrf.mxu0
  %v338 = vadd.f32 0.0, %v337
  %v339 = vpop.f32.mrf.mxu0
  %340 = vmatprep.mubr.f32.mxu0 0.0
  %341 = vmatmul.mubr.f32.gmra.mxu0 %v255
  %v342 = vpop.f32.mrf.mxu0
  %v343 = vadd.f32 0.0, %v342
  %v344 = vpop.f32.mrf.mxu0
  %345 = vmatprep.mubr.f32.mxu0 0.0
  %346 = vmatmul.mubr.f32.gmra.mxu0 %v258
  %v347 = vpop.f32.mrf.mxu0
  %v348 = vadd.f32 0.0, %v347
  %v349 = vpop.f32.mrf.mxu0
  %350 = vmatprep.mubr.f32.mxu0 0.0
  %351 = vmatmul.mubr.f32.gmra.mxu0 %v261
  %v352 = vpop.f32.mrf.mxu0
  %v353 = vadd.f32 0.0, %v352
  %v354 = vpop.f32.mrf.mxu0
  %355 = vmatprep.mubr.f32.mxu0 0.0
  %356 = vmatmul.mubr.f32.gmra.mxu0 %v264
  %v357 = vpop.f32.mrf.mxu0
  %v358 = vadd.f32 0.0, %v357
  %v359 = vpop.f32.mrf.mxu0
  %360 = vdwg.mxu0
  %v361 = vadd.f32 %v242, %v333
  %v362 = vadd.f32 %v243, %v338
  %v363 = vadd.f32 %v244, %v343
  %v364 = vadd.f32 %v245, %v348
  %v365 = vadd.f32 %v246, %v353
  %v366 = vadd.f32 %v247, %v358
  %v367 = vxor.u32 %v361, 2147483648
  %v368 = vxor.u32 %v362, 2147483648
  %v369 = vxor.u32 %v363, 2147483648
  %v370 = vxor.u32 %v364, 2147483648
  %v371 = vxor.u32 %v365, 2147483648
  %v372 = vxor.u32 %v366, 2147483648
  %v373 = vmul.f32 %v367, 1.442695
  %v374 = vpow.pop %v373
  %v375 = vmul.f32 %v368, 1.442695
  %v376 = vpow.pop %v375
  %v377 = vmul.f32 %v369, 1.442695
  %v378 = vpow.pop %v377
  %v379 = vmul.f32 %v370, 1.442695
  %v380 = vpow.pop %v379
  %v381 = vmul.f32 %v371, 1.442695
  %v382 = vpow.pop %v381
  %v383 = vmul.f32 %v372, 1.442695
  %v384 = vpow.pop %v383
  %v385 = vadd.f32 %v374, 1.0
  %v386 = vadd.f32 %v376, 1.0
  %v387 = vadd.f32 %v378, 1.0
  %v388 = vadd.f32 %v380, 1.0
  %v389 = vadd.f32 %v382, 1.0
  %v390 = vadd.f32 %v384, 1.0
  %v391 = vrcp.pop %v385
  %v392 = vmul.f32 1.0, %v391
  %v393 = vrcp.pop %v386
  %v394 = vmul.f32 1.0, %v393
  %v395 = vrcp.pop %v387
  %v396 = vmul.f32 1.0, %v395
  %v397 = vrcp.pop %v388
  %v398 = vmul.f32 1.0, %v397
  %v399 = vrcp.pop %v389
  %v400 = vmul.f32 1.0, %v399
  %v401 = vrcp.pop %v390
  %v402 = vmul.f32 1.0, %v401
  %v403 = vtanh.pop %v361
  %v404 = vtanh.pop %v362
  %v405 = vtanh.pop %v363
  %v406 = vtanh.pop %v364
  %v407 = vtanh.pop %v365
  %v408 = vtanh.pop %v366
  %415 = vrot.lane.b32.xlu0 %v236, 32
  %v416 = vpop.permute.xlu0 %415
  %417 = vrot.lane.b32.xlu0 %v237, 32
  %v418 = vpop.permute.xlu0 %417
  %419 = vrot.lane.b32.xlu0 %v238, 32
  %v420 = vpop.permute.xlu0 %419
  %421 = vrot.lane.b32.xlu0 %v239, 32
  %v422 = vpop.permute.xlu0 %421
  %423 = vrot.lane.b32.xlu0 %v240, 32
  %v424 = vpop.permute.xlu0 %423
  %425 = vrot.lane.b32.xlu0 %v241, 32
  %v426 = vpop.permute.xlu0 %425
  %v433 = vmul.f32 %v392, %v416
  %v434 = vmul.f32 %v394, %v418
  %v435 = vmul.f32 %v396, %v420
  %v436 = vmul.f32 %v398, %v422
  %v437 = vmul.f32 %v400, %v424
  %v438 = vmul.f32 %v402, %v426
  %445 = vrot.lane.b32.xlu0 %v403, 64
  %v446 = vpop.permute.xlu0 %445
  %447 = vrot.lane.b32.xlu0 %v404, 64
  %v448 = vpop.permute.xlu0 %447
  %449 = vrot.lane.b32.xlu0 %v405, 64
  %v450 = vpop.permute.xlu0 %449
  %451 = vrot.lane.b32.xlu0 %v406, 64
  %v452 = vpop.permute.xlu0 %451
  %453 = vrot.lane.b32.xlu0 %v407, 64
  %v454 = vpop.permute.xlu0 %453
  %455 = vrot.lane.b32.xlu0 %v408, 64
  %v456 = vpop.permute.xlu0 %455
  %v463 = vmul.f32 %v392, %v446
  %v464 = vmul.f32 %v394, %v448
  %v465 = vmul.f32 %v396, %v450
  %v466 = vmul.f32 %v398, %v452
  %v467 = vmul.f32 %v400, %v454
  %v468 = vmul.f32 %v402, %v456
  %475 = vrot.lane.b32.xlu0 %v463, 32
  %v476 = vpop.permute.xlu0 %475
  %477 = vrot.lane.b32.xlu0 %v464, 32
  %v478 = vpop.permute.xlu0 %477
  %479 = vrot.lane.b32.xlu0 %v465, 32
  %v480 = vpop.permute.xlu0 %479
  %481 = vrot.lane.b32.xlu0 %v466, 32
  %v482 = vpop.permute.xlu0 %481
  %483 = vrot.lane.b32.xlu0 %v467, 32
  %v484 = vpop.permute.xlu0 %483
  %485 = vrot.lane.b32.xlu0 %v468, 32
  %v486 = vpop.permute.xlu0 %485
  %v493 = vadd.f32 %v433, %v476
  %v494 = vadd.f32 %v434, %v478
  %v495 = vadd.f32 %v435, %v480
  %v496 = vadd.f32 %v436, %v482
  %v497 = vadd.f32 %v437, %v484
  %v498 = vadd.f32 %v438, %v486
  %v499 = vtanh.pop %v493
  %v500 = vtanh.pop %v494
  %v501 = vtanh.pop %v495
  %v502 = vtanh.pop %v496
  %v503 = vtanh.pop %v497
  %v504 = vtanh.pop %v498
  %511 = vrot.lane.b32.xlu0 %v499, 64
  %v512 = vpop.permute.xlu0 %511
  %513 = vrot.lane.b32.xlu0 %v500, 64
  %v514 = vpop.permute.xlu0 %513
  %515 = vrot.lane.b32.xlu0 %v501, 64
  %v516 = vpop.permute.xlu0 %515
  %517 = vrot.lane.b32.xlu0 %v502, 64
  %v518 = vpop.permute.xlu0 %517
  %519 = vrot.lane.b32.xlu0 %v503, 64
  %v520 = vpop.permute.xlu0 %519
  %521 = vrot.lane.b32.xlu0 %v504, 64
  %v522 = vpop.permute.xlu0 %521
  %v529 = vmul.f32 %v392, %v512
  %v530 = vmul.f32 %v394, %v514
  %v531 = vmul.f32 %v396, %v516
  %v532 = vmul.f32 %v398, %v518
  %v533 = vmul.f32 %v400, %v520
  %v534 = vmul.f32 %v402, %v522
  %541 = vrot.lane.b32.xlu0 %v529, 32
  %v542 = vpop.permute.xlu0 %541
  %543 = vrot.lane.b32.xlu0 %v530, 32
  %v544 = vpop.permute.xlu0 %543
  %545 = vrot.lane.b32.xlu0 %v531, 32
  %v546 = vpop.permute.xlu0 %545
  %547 = vrot.lane.b32.xlu0 %v532, 32
  %v548 = vpop.permute.xlu0 %547
  %549 = vrot.lane.b32.xlu0 %v533, 32
  %v550 = vpop.permute.xlu0 %549
  %551 = vrot.lane.b32.xlu0 %v534, 32
  %v552 = vpop.permute.xlu0 %551
  %559 = vst.msk [vmem:[#allocation3] sm:$0xff] %vm40, %v542
  %560 = vst.msk [vmem:[#allocation3 + $0x8] sm:$0xff] %vm40, %v544
  %561 = vst.msk [vmem:[#allocation3 + $0x10] sm:$0xff] %vm40, %v546
  %562 = vst.msk [vmem:[#allocation3 + $0x18] sm:$0xff] %vm40, %v548
  %563 = vst.msk [vmem:[#allocation3 + $0x20] sm:$0xff] %vm40, %v550
  %564 = vst.msk [vmem:[#allocation3 + $0x28] sm:$0xff] %vm40, %v552
  %571 = vrot.lane.b32.xlu0 %v493, 96
  %v572 = vpop.permute.xlu0 %571
  %573 = vrot.lane.b32.xlu0 %v494, 96
  %v574 = vpop.permute.xlu0 %573
  %575 = vrot.lane.b32.xlu0 %v495, 96
  %v576 = vpop.permute.xlu0 %575
  %577 = vrot.lane.b32.xlu0 %v496, 96
  %v578 = vpop.permute.xlu0 %577
  %579 = vrot.lane.b32.xlu0 %v497, 96
  %v580 = vpop.permute.xlu0 %579
  %581 = vrot.lane.b32.xlu0 %v498, 96
  %v582 = vpop.permute.xlu0 %581
  %589 = vst.msk [vmem:[#allocation4] sm:$0xff] %vm40, %v572
  %590 = vst.msk [vmem:[#allocation4 + $0x8] sm:$0xff] %vm40, %v574
  %591 = vst.msk [vmem:[#allocation4 + $0x10] sm:$0xff] %vm40, %v576
  %592 = vst.msk [vmem:[#allocation4 + $0x18] sm:$0xff] %vm40, %v578
  %593 = vst.msk [vmem:[#allocation4 + $0x20] sm:$0xff] %vm40, %v580
  %594 = vst.msk [vmem:[#allocation4 + $0x28] sm:$0xff] %vm40, %v582
  %595 = vst.msk [vmem:[%s4] sm:$0xff] %vm40, %v552
  %v596 = vld [vmem:[#allocation3] sm:$0xff]
  %v597 = vld [vmem:[#allocation3 + $0x8] sm:$0xff]
  %v598 = vld [vmem:[#allocation3 + $0x10] sm:$0xff]
  %v599 = vld [vmem:[#allocation3 + $0x18] sm:$0xff]
  %v600 = vld [vmem:[#allocation3 + $0x20] sm:$0xff]
  %v601 = vld [vmem:[#allocation3 + $0x28] sm:$0xff]
  %v602 = vld [vmem:[#allocation4] sm:$0xff]
  %v603 = vld [vmem:[#allocation4 + $0x8] sm:$0xff]
  %v604 = vld [vmem:[#allocation4 + $0x10] sm:$0xff]
  %v605 = vld [vmem:[#allocation4 + $0x18] sm:$0xff]
  %v606 = vld [vmem:[#allocation4 + $0x20] sm:$0xff]
  %v607 = vld [vmem:[#allocation4 + $0x28] sm:$0xff]
  %s608 = scalar_lea.vmem [#allocation2], 48
  %v609 = vld [vmem:[%s608] sm:$0xff]
  %v610 = vld [vmem:[%s608 + $0x8] sm:$0xff]
  %v611 = vld [vmem:[%s608 + $0x10] sm:$0xff]
  %v612 = vld [vmem:[%s608 + $0x18] sm:$0xff]
  %v613 = vld [vmem:[%s608 + $0x20] sm:$0xff]
  %v614 = vld [vmem:[%s608 + $0x28] sm:$0xff]
  %v616 = vsel %vm40, %v596, 0
  %v619 = vsel %vm40, %v597, 0
  %v622 = vsel %vm40, %v598, 0
  %v625 = vsel %vm40, %v599, 0
  %v628 = vsel %vm40, %v600, 0
  %v631 = vsel %vm40, %v601, 0
  %633 = vmatprep.subr.mxu0 0.0
  %634 = vmatpush1.msra.mxu0 0.0
  %635 = vmatprep.subr.mxu0 0.0
  %636 = vmatpush1.msra.mxu0 0.0
  %637 = vmatprep.subr.mxu0 0.0
  %638 = vmatpush1.msra.mxu0 0.0
  %639 = vmatprep.subr.mxu0 0.0
  %640 = vmatpush1.msra.mxu0 0.0
  %641 = vmatprep.subr.mxu0 0.0
  %642 = vmatpush1.msra.mxu0 0.0
  %643 = vmatprep.subr.mxu0 0.0
  %644 = vmatpush1.msra.mxu0 0.0
  %645 = vmatprep.subr.mxu0 0.0
  %646 = vmatpush1.msra.mxu0 0.0
  %647 = vmatprep.subr.mxu0 0.0
  %648 = vmatpush1.msra.mxu0 0.0
  %649 = vmatprep.subr.mxu0 0.0
  %650 = vmatpush1.msra.mxu0 0.0
  %651 = vmatprep.subr.mxu0 0.0
  %652 = vmatpush1.msra.mxu0 0.0
  %653 = vmatprep.subr.mxu0 0.0
  %654 = vmatpush1.msra.mxu0 0.0
  %655 = vmatprep.subr.mxu0 0.0
  %656 = vmatpush1.msra.mxu0 0.0
  %657 = vmatprep.subr.mxu0 0.0
  %658 = vmatpush1.msra.mxu0 %v229
  %659 = vmatprep.subr.mxu0 0.0
  %660 = vmatpush1.msra.mxu0 %v228
  %661 = vmatprep.subr.mxu0 0.0
  %662 = vmatpush1.msra.mxu0 %v227
  %663 = vmatprep.subr.mxu0 0.0
  %664 = vmatpush1.msra.mxu0 %v226
  %665 = vmatprep.subr.mxu0 0.0
  %666 = vmatpush2.msra.mxu0 0.0
  %667 = vmatprep.subr.mxu0 0.0
  %668 = vmatpush2.msra.mxu0 0.0
  %669 = vmatprep.subr.mxu0 0.0
  %670 = vmatpush2.msra.mxu0 0.0
  %671 = vmatprep.subr.mxu0 0.0
  %672 = vmatpush2.msra.mxu0 0.0
  %673 = vmatprep.subr.mxu0 0.0
  %674 = vmatpush2.msra.mxu0 0.0
  %675 = vmatprep.subr.mxu0 0.0
  %676 = vmatpush2.msra.mxu0 0.0
  %677 = vmatprep.subr.mxu0 0.0
  %678 = vmatpush2.msra.mxu0 0.0
  %679 = vmatprep.subr.mxu0 0.0
  %680 = vmatpush2.msra.mxu0 0.0
  %681 = vmatprep.subr.mxu0 0.0
  %682 = vmatpush2.msra.mxu0 0.0
  %683 = vmatprep.subr.mxu0 0.0
  %684 = vmatpush2.msra.mxu0 0.0
  %685 = vmatprep.subr.mxu0 0.0
  %686 = vmatpush2.msra.mxu0 0.0
  %687 = vmatprep.subr.mxu0 0.0
  %688 = vmatpush2.msra.mxu0 0.0
  %689 = vmatprep.subr.mxu0 0.0
  %690 = vmatpush2.msra.mxu0 0.0
  %691 = vmatprep.subr.mxu0 0.0
  %692 = vmatpush2.msra.mxu0 0.0
  %693 = vmatprep.subr.mxu0 0.0
  %694 = vmatpush2.msra.mxu0 0.0
  %695 = vmatprep.subr.mxu0 0.0
  %696 = vmatpush2.msra.mxu0 0.0
  %697 = vmatprep.mubr.f32.mxu0 0.0
  %698 = vmatmul.mubr.f32.gmra.mxu0 %v616
  %v699 = vpop.f32.mrf.mxu0
  %v700 = vadd.f32 0.0, %v699
  %v701 = vpop.f32.mrf.mxu0
  %702 = vmatprep.mubr.f32.mxu0 0.0
  %703 = vmatmul.mubr.f32.gmra.mxu0 %v619
  %v704 = vpop.f32.mrf.mxu0
  %v705 = vadd.f32 0.0, %v704
  %v706 = vpop.f32.mrf.mxu0
  %707 = vmatprep.mubr.f32.mxu0 0.0
  %708 = vmatmul.mubr.f32.gmra.mxu0 %v622
  %v709 = vpop.f32.mrf.mxu0
  %v710 = vadd.f32 0.0, %v709
  %v711 = vpop.f32.mrf.mxu0
  %712 = vmatprep.mubr.f32.mxu0 0.0
  %713 = vmatmul.mubr.f32.gmra.mxu0 %v625
  %v714 = vpop.f32.mrf.mxu0
  %v715 = vadd.f32 0.0, %v714
  %v716 = vpop.f32.mrf.mxu0
  %717 = vmatprep.mubr.f32.mxu0 0.0
  %718 = vmatmul.mubr.f32.gmra.mxu0 %v628
  %v719 = vpop.f32.mrf.mxu0
  %v720 = vadd.f32 0.0, %v719
  %v721 = vpop.f32.mrf.mxu0
  %722 = vmatprep.mubr.f32.mxu0 0.0
  %723 = vmatmul.mubr.f32.gmra.mxu0 %v631
  %v724 = vpop.f32.mrf.mxu0
  %v725 = vadd.f32 0.0, %v724
  %v726 = vpop.f32.mrf.mxu0
  %727 = vdwg.mxu0
  %v728 = vadd.f32 %v609, %v700
  %v729 = vadd.f32 %v610, %v705
  %v730 = vadd.f32 %v611, %v710
  %v731 = vadd.f32 %v612, %v715
  %v732 = vadd.f32 %v613, %v720
  %v733 = vadd.f32 %v614, %v725
  %v734 = vxor.u32 %v728, 2147483648
  %v735 = vxor.u32 %v729, 2147483648
  %v736 = vxor.u32 %v730, 2147483648
  %v737 = vxor.u32 %v731, 2147483648
  %v738 = vxor.u32 %v732, 2147483648
  %v739 = vxor.u32 %v733, 2147483648
  %v740 = vmul.f32 %v734, 1.442695
  %v741 = vpow.pop %v740
  %v742 = vmul.f32 %v735, 1.442695
  %v743 = vpow.pop %v742
  %v744 = vmul.f32 %v736, 1.442695
  %v745 = vpow.pop %v744
  %v746 = vmul.f32 %v737, 1.442695
  %v747 = vpow.pop %v746
  %v748 = vmul.f32 %v738, 1.442695
  %v749 = vpow.pop %v748
  %v750 = vmul.f32 %v739, 1.442695
  %v751 = vpow.pop %v750
  %v752 = vadd.f32 %v741, 1.0
  %v753 = vadd.f32 %v743, 1.0
  %v754 = vadd.f32 %v745, 1.0
  %v755 = vadd.f32 %v747, 1.0
  %v756 = vadd.f32 %v749, 1.0
  %v757 = vadd.f32 %v751, 1.0
  %v758 = vrcp.pop %v752
  %v759 = vmul.f32 1.0, %v758
  %v760 = vrcp.pop %v753
  %v761 = vmul.f32 1.0, %v760
  %v762 = vrcp.pop %v754
  %v763 = vmul.f32 1.0, %v762
  %v764 = vrcp.pop %v755
  %v765 = vmul.f32 1.0, %v764
  %v766 = vrcp.pop %v756
  %v767 = vmul.f32 1.0, %v766
  %v768 = vrcp.pop %v757
  %v769 = vmul.f32 1.0, %v768
  %v770 = vtanh.pop %v728
  %v771 = vtanh.pop %v729
  %v772 = vtanh.pop %v730
  %v773 = vtanh.pop %v731
  %v774 = vtanh.pop %v732
  %v775 = vtanh.pop %v733
  %782 = vrot.lane.b32.xlu0 %v602, 32
  %v783 = vpop.permute.xlu0 %782
  %784 = vrot.lane.b32.xlu0 %v603, 32
  %v785 = vpop.permute.xlu0 %784
  %786 = vrot.lane.b32.xlu0 %v604, 32
  %v787 = vpop.permute.xlu0 %786
  %788 = vrot.lane.b32.xlu0 %v605, 32
  %v789 = vpop.permute.xlu0 %788
  %790 = vrot.lane.b32.xlu0 %v606, 32
  %v791 = vpop.permute.xlu0 %790
  %792 = vrot.lane.b32.xlu0 %v607, 32
  %v793 = vpop.permute.xlu0 %792
  %v800 = vmul.f32 %v759, %v783
  %v801 = vmul.f32 %v761, %v785
  %v802 = vmul.f32 %v763, %v787
  %v803 = vmul.f32 %v765, %v789
  %v804 = vmul.f32 %v767, %v791
  %v805 = vmul.f32 %v769, %v793
  %812 = vrot.lane.b32.xlu0 %v770, 64
  %v813 = vpop.permute.xlu0 %812
  %814 = vrot.lane.b32.xlu0 %v771, 64
  %v815 = vpop.permute.xlu0 %814
  %816 = vrot.lane.b32.xlu0 %v772, 64
  %v817 = vpop.permute.xlu0 %816
  %818 = vrot.lane.b32.xlu0 %v773, 64
  %v819 = vpop.permute.xlu0 %818
  %820 = vrot.lane.b32.xlu0 %v774, 64
  %v821 = vpop.permute.xlu0 %820
  %822 = vrot.lane.b32.xlu0 %v775, 64
  %v823 = vpop.permute.xlu0 %822
  %v830 = vmul.f32 %v759, %v813
  %v831 = vmul.f32 %v761, %v815
  %v832 = vmul.f32 %v763, %v817
  %v833 = vmul.f32 %v765, %v819
  %v834 = vmul.f32 %v767, %v821
  %v835 = vmul.f32 %v769, %v823
  %842 = vrot.lane.b32.xlu0 %v830, 32
  %v843 = vpop.permute.xlu0 %842
  %844 = vrot.lane.b32.xlu0 %v831, 32
  %v845 = vpop.permute.xlu0 %844
  %846 = vrot.lane.b32.xlu0 %v832, 32
  %v847 = vpop.permute.xlu0 %846
  %848 = vrot.lane.b32.xlu0 %v833, 32
  %v849 = vpop.permute.xlu0 %848
  %850 = vrot.lane.b32.xlu0 %v834, 32
  %v851 = vpop.permute.xlu0 %850
  %852 = vrot.lane.b32.xlu0 %v835, 32
  %v853 = vpop.permute.xlu0 %852
  %v860 = vadd.f32 %v800, %v843
  %v861 = vadd.f32 %v801, %v845
  %v862 = vadd.f32 %v802, %v847
  %v863 = vadd.f32 %v803, %v849
  %v864 = vadd.f32 %v804, %v851
  %v865 = vadd.f32 %v805, %v853
  %v866 = vtanh.pop %v860
  %v867 = vtanh.pop %v861
  %v868 = vtanh.pop %v862
  %v869 = vtanh.pop %v863
  %v870 = vtanh.pop %v864
  %v871 = vtanh.pop %v865
  %878 = vrot.lane.b32.xlu0 %v866, 64
  %v879 = vpop.permute.xlu0 %878
  %880 = vrot.lane.b32.xlu0 %v867, 64
  %v881 = vpop.permute.xlu0 %880
  %882 = vrot.lane.b32.xlu0 %v868, 64
  %v883 = vpop.permute.xlu0 %882
  %884 = vrot.lane.b32.xlu0 %v869, 64
  %v885 = vpop.permute.xlu0 %884
  %886 = vrot.lane.b32.xlu0 %v870, 64
  %v887 = vpop.permute.xlu0 %886
  %888 = vrot.lane.b32.xlu0 %v871, 64
  %v889 = vpop.permute.xlu0 %888
  %v896 = vmul.f32 %v759, %v879
  %v897 = vmul.f32 %v761, %v881
  %v898 = vmul.f32 %v763, %v883
  %v899 = vmul.f32 %v765, %v885
  %v900 = vmul.f32 %v767, %v887
  %v901 = vmul.f32 %v769, %v889
  %908 = vrot.lane.b32.xlu0 %v896, 32
  %v909 = vpop.permute.xlu0 %908
  %910 = vrot.lane.b32.xlu0 %v897, 32
  %v911 = vpop.permute.xlu0 %910
  %912 = vrot.lane.b32.xlu0 %v898, 32
  %v913 = vpop.permute.xlu0 %912
  %914 = vrot.lane.b32.xlu0 %v899, 32
  %v915 = vpop.permute.xlu0 %914
  %916 = vrot.lane.b32.xlu0 %v900, 32
  %v917 = vpop.permute.xlu0 %916
  %918 = vrot.lane.b32.xlu0 %v901, 32
  %v919 = vpop.permute.xlu0 %918
  %926 = vst.msk [vmem:[#allocation3] sm:$0xff] %vm40, %v909
  %927 = vst.msk [vmem:[#allocation3 + $0x8] sm:$0xff] %vm40, %v911
  %928 = vst.msk [vmem:[#allocation3 + $0x10] sm:$0xff] %vm40, %v913
  %929 = vst.msk [vmem:[#allocation3 + $0x18] sm:$0xff] %vm40, %v915
  %930 = vst.msk [vmem:[#allocation3 + $0x20] sm:$0xff] %vm40, %v917
  %931 = vst.msk [vmem:[#allocation3 + $0x28] sm:$0xff] %vm40, %v919
  %938 = vrot.lane.b32.xlu0 %v860, 96
  %v939 = vpop.permute.xlu0 %938
  %940 = vrot.lane.b32.xlu0 %v861, 96
  %v941 = vpop.permute.xlu0 %940
  %942 = vrot.lane.b32.xlu0 %v862, 96
  %v943 = vpop.permute.xlu0 %942
  %944 = vrot.lane.b32.xlu0 %v863, 96
  %v945 = vpop.permute.xlu0 %944
  %946 = vrot.lane.b32.xlu0 %v864, 96
  %v947 = vpop.permute.xlu0 %946
  %948 = vrot.lane.b32.xlu0 %v865, 96
  %v949 = vpop.permute.xlu0 %948
  %956 = vst.msk [vmem:[#allocation4] sm:$0xff] %vm40, %v939
  %957 = vst.msk [vmem:[#allocation4 + $0x8] sm:$0xff] %vm40, %v941
  %958 = vst.msk [vmem:[#allocation4 + $0x10] sm:$0xff] %vm40, %v943
  %959 = vst.msk [vmem:[#allocation4 + $0x18] sm:$0xff] %vm40, %v945
  %960 = vst.msk [vmem:[#allocation4 + $0x20] sm:$0xff] %vm40, %v947
  %961 = vst.msk [vmem:[#allocation4 + $0x28] sm:$0xff] %vm40, %v949
  %s962 = scalar_lea.vmem %s4, 8
  %963 = vst.msk [vmem:[%s962] sm:$0xff] %vm40, %v919
  // Predicated region
  $region18: #{bilstm_lstm_crf_forward.2} parent=0 // pred_check
    _
  $region19: #{bilstm_lstm_crf_forward.2} parent=0 // pred_check_branch
    %965 = sbr.rel (0) target = $region21
  $region20: #{bilstm_lstm_crf_forward.2} parent=0 // pred_region
    _
  $region21: #{bilstm_lstm_crf_forward.2} parent=0 // pred_fallthru
    _
  // Predicated region
  $region22: #{bilstm_lstm_crf_forward.2} parent=0 // pred_check
    _
  $region23: #{bilstm_lstm_crf_forward.2} parent=0 // pred_check_branch
    %967 = sbr.rel (0) target = $region25
  $region24: #{bilstm_lstm_crf_forward.2} parent=0 // pred_region
    _
  $region25: #{bilstm_lstm_crf_forward.2} parent=0 // pred_fallthru
    _

// kernel: bilstm_lstm_crf_forward.3
$region0: #{bilstm_lstm_crf_forward.3}
  #allocation0 [shape = 'u32[]', space=smem, size = 0x4, offset = 0x4, fixed_abs, tag = 'smem constant byte address 0x4 - core index']
  #allocation1 [shape = 'u32[144,128]{1,0:T(1,128)}', space=vmem, size = 0x12000, scoped, tag = 'internal scratch']
  #allocation2 [shape = 'f32[8,2,256]{2,1,0:T(2,128)}', space=vmem, size = 0x4000, scoped, tag = 'scratch operand']
  #allocation3 [shape = 'f32[8,2,32]{2,1,0:T(2,128)}', space=vmem, size = 0x2000, scoped, tag = 'scratch operand']
  #allocation4 [shape = 'f32[8,2,32]{2,1,0:T(2,128)}', space=vmem, size = 0x2000, scoped, tag = 'scratch operand']
  #allocation5 [shape = 'f32[2,64]{1,0:T(2,128)}', space=vmem, size = 0x400, scoped, tag = 'scratch operand']
  #allocation6 [shape = 'f32[2,64]{1,0:T(2,128)}', space=vmem, size = 0x400, scoped, tag = 'scratch operand']
  %s0 = inlined_call_operand.vmem [shape: f32[16,64], index: 0, kind: input, shape index: {}]
  %s1 = inlined_call_operand.vmem [shape: f32[64,256], index: 1, kind: input, shape index: {}]
  %s2 = inlined_call_operand.vmem [shape: f32[64,256], index: 2, kind: input, shape index: {}]
  %s3 = inlined_call_operand.vmem [shape: f32[1,256], index: 3, kind: input, shape index: {}]
  %s4 = inlined_call_operand.vmem [shape: f32[1,256], index: 4, kind: input, shape index: {}]
  %s5 = inlined_call_operand.vmem [shape: f32[64,128], index: 5, kind: input, shape index: {}]
  %s6 = inlined_call_operand.vmem [shape: f32[1,128], index: 6, kind: input, shape index: {}]
  %s7 = inlined_call_operand.vmem [shape: f32[16,128], index: 7, kind: output, shape index: {}]
  %s8 = sld [smem:[#allocation0]]
  $region38: #{bilstm_lstm_crf_forward.3} parent=0
    _
  %s10 = ssub.s32 1, %s8
  %s11 = scalar_select 0, %s10, %s8
  // Predicated region
  $region2: #{bilstm_lstm_crf_forward.3} parent=0 // pred_check
    _
  $region3: #{bilstm_lstm_crf_forward.3} parent=0 // pred_check_branch
    %13 = sbr.rel (0) target = $region5
  $region4: #{bilstm_lstm_crf_forward.3} parent=0 // pred_region
    _
  $region5: #{bilstm_lstm_crf_forward.3} parent=0 // pred_fallthru
    _
  // Predicated region
  $region6: #{bilstm_lstm_crf_forward.3} parent=0 // pred_check
    _
  $region7: #{bilstm_lstm_crf_forward.3} parent=0 // pred_check_branch
    %15 = sbr.rel (0) target = $region9
  $region8: #{bilstm_lstm_crf_forward.3} parent=0 // pred_region
    _
  $region9: #{bilstm_lstm_crf_forward.3} parent=0 // pred_fallthru
    _
  // Predicated region
  $region10: #{bilstm_lstm_crf_forward.3} parent=0 // pred_check
    _
  $region11: #{bilstm_lstm_crf_forward.3} parent=0 // pred_check_branch
    %17 = sbr.rel (0) target = $region13
  $region12: #{bilstm_lstm_crf_forward.3} parent=0 // pred_region
    _
  $region13: #{bilstm_lstm_crf_forward.3} parent=0 // pred_fallthru
    _
  // Predicated region
  $region14: #{bilstm_lstm_crf_forward.3} parent=0 // pred_check
    _
  $region15: #{bilstm_lstm_crf_forward.3} parent=0 // pred_check_branch
    %19 = sbr.rel (0) target = $region17
  $region16: #{bilstm_lstm_crf_forward.3} parent=0 // pred_region
    _
  $region17: #{bilstm_lstm_crf_forward.3} parent=0 // pred_fallthru
    _
  // Predicated region
  $region18: #{bilstm_lstm_crf_forward.3} parent=0 // pred_check
    _
  $region19: #{bilstm_lstm_crf_forward.3} parent=0 // pred_check_branch
    %21 = sbr.rel (0) target = $region21
  $region20: #{bilstm_lstm_crf_forward.3} parent=0 // pred_region
    _
  $region21: #{bilstm_lstm_crf_forward.3} parent=0 // pred_fallthru
    _
  // Predicated region
  $region22: #{bilstm_lstm_crf_forward.3} parent=0 // pred_check
    _
  $region23: #{bilstm_lstm_crf_forward.3} parent=0 // pred_check_branch
    %23 = sbr.rel (0) target = $region25
  $region24: #{bilstm_lstm_crf_forward.3} parent=0 // pred_region
    _
  $region25: #{bilstm_lstm_crf_forward.3} parent=0 // pred_fallthru
    _
  // Predicated region
  $region26: #{bilstm_lstm_crf_forward.3} parent=0 // pred_check
    _
  $region27: #{bilstm_lstm_crf_forward.3} parent=0 // pred_check_branch
    %25 = sbr.rel (0) target = $region29
  $region28: #{bilstm_lstm_crf_forward.3} parent=0 // pred_region
    _
  $region29: #{bilstm_lstm_crf_forward.3} parent=0 // pred_fallthru
    _
  %v26 = vld [vmem:[%s0] sm:$0xff]
  %v27 = vld [vmem:[%s0 + $0x8] sm:$0xff]
  %v28 = vld [vmem:[%s1] sm:$0xff]
  %v29 = vld [vmem:[%s1 + $0x8] sm:$0xff]
  %v30 = vld [vmem:[%s1 + $0x10] sm:$0xff]
  %v31 = vld [vmem:[%s1 + $0x18] sm:$0xff]
  %v32 = vld [vmem:[%s1 + $0x20] sm:$0xff]
  %v33 = vld [vmem:[%s1 + $0x28] sm:$0xff]
  %v34 = vld [vmem:[%s1 + $0x30] sm:$0xff]
  %v35 = vld [vmem:[%s1 + $0x38] sm:$0xff]
  %v36 = vld [vmem:[%s1 + $0x40] sm:$0xff]
  %v37 = vld [vmem:[%s1 + $0x48] sm:$0xff]
  %v38 = vld [vmem:[%s1 + $0x50] sm:$0xff]
  %v39 = vld [vmem:[%s1 + $0x58] sm:$0xff]
  %v40 = vld [vmem:[%s1 + $0x60] sm:$0xff]
  %v41 = vld [vmem:[%s1 + $0x68] sm:$0xff]
  %v42 = vld [vmem:[%s1 + $0x70] sm:$0xff]
  %v43 = vld [vmem:[%s1 + $0x78] sm:$0xff]
  %v44 = vld [vmem:[%s3] sm:$0x3]
  %v46 = vlaneseq
  %v47 = vshrl.u32 %v46, 7
  %v48 = vsub.s32 0, %v47
  %v49 = vrot.slane %v44, %v48
  %v50 = vlaneseq
  %v51 = vshrl.u32 %v50, 7
  %v52 = vsub.s32 1, %v51
  %v53 = vrot.slane %v44, %v52
  %vm56 = vcmask 523264
  %v58 = vsel %vm56, %v26, 0
  %v61 = vsel %vm56, %v27, 0
  %63 = vmatprep.subr.mxu0 0.0
  %64 = vmatpush1.msra.mxu0 0.0
  %65 = vmatprep.subr.mxu0 0.0
  %66 = vmatpush1.msra.mxu0 0.0
  %67 = vmatprep.subr.mxu0 0.0
  %68 = vmatpush1.msra.mxu0 0.0
  %69 = vmatprep.subr.mxu0 0.0
  %70 = vmatpush1.msra.mxu0 0.0
  %71 = vmatprep.subr.mxu0 0.0
  %72 = vmatpush1.msra.mxu0 0.0
  %73 = vmatprep.subr.mxu0 0.0
  %74 = vmatpush1.msra.mxu0 0.0
  %75 = vmatprep.subr.mxu0 0.0
  %76 = vmatpush1.msra.mxu0 0.0
  %77 = vmatprep.subr.mxu0 0.0
  %78 = vmatpush1.msra.mxu0 0.0
  %79 = vmatprep.subr.mxu0 %v43
  %80 = vmatpush1.msra.mxu0 %v42
  %81 = vmatprep.subr.mxu0 %v41
  %82 = vmatpush1.msra.mxu0 %v40
  %83 = vmatprep.subr.mxu0 %v39
  %84 = vmatpush1.msra.mxu0 %v38
  %85 = vmatprep.subr.mxu0 %v37
  %86 = vmatpush1.msra.mxu0 %v36
  %87 = vmatprep.subr.mxu0 %v35
  %88 = vmatpush1.msra.mxu0 %v34
  %89 = vmatprep.subr.mxu0 %v33
  %90 = vmatpush1.msra.mxu0 %v32
  %91 = vmatprep.subr.mxu0 %v31
  %92 = vmatpush1.msra.mxu0 %v30
  %93 = vmatprep.subr.mxu0 %v29
  %94 = vmatpush1.msra.mxu0 %v28
  %95 = vmatprep.subr.mxu0 0.0
  %96 = vmatpush2.msra.mxu0 0.0
  %97 = vmatprep.subr.mxu0 0.0
  %98 = vmatpush2.msra.mxu0 0.0
  %99 = vmatprep.subr.mxu0 0.0
  %100 = vmatpush2.msra.mxu0 0.0
  %101 = vmatprep.subr.mxu0 0.0
  %102 = vmatpush2.msra.mxu0 0.0
  %103 = vmatprep.subr.mxu0 0.0
  %104 = vmatpush2.msra.mxu0 0.0
  %105 = vmatprep.subr.mxu0 0.0
  %106 = vmatpush2.msra.mxu0 0.0
  %107 = vmatprep.subr.mxu0 0.0
  %108 = vmatpush2.msra.mxu0 0.0
  %109 = vmatprep.subr.mxu0 0.0
  %110 = vmatpush2.msra.mxu0 0.0
  %111 = vmatprep.subr.mxu0 0.0
  %112 = vmatpush2.msra.mxu0 0.0
  %113 = vmatprep.subr.mxu0 0.0
  %114 = vmatpush2.msra.mxu0 0.0
  %115 = vmatprep.subr.mxu0 0.0
  %116 = vmatpush2.msra.mxu0 0.0
  %117 = vmatprep.subr.mxu0 0.0
  %118 = vmatpush2.msra.mxu0 0.0
  %119 = vmatprep.subr.mxu0 0.0
  %120 = vmatpush2.msra.mxu0 0.0
  %121 = vmatprep.subr.mxu0 0.0
  %122 = vmatpush2.msra.mxu0 0.0
  %123 = vmatprep.subr.mxu0 0.0
  %124 = vmatpush2.msra.mxu0 0.0
  %125 = vmatprep.subr.mxu0 0.0
  %126 = vmatpush2.msra.mxu0 0.0
  %127 = vmatprep.mubr.f32.mxu0 0.0
  %128 = vmatmul.mubr.f32.gmra.mxu0 %v58
  %v129 = vpop.f32.mrf.mxu0
  %v130 = vadd.f32 %v49, %v129
  %v131 = vpop.f32.mrf.mxu0
  %v132 = vadd.f32 %v53, %v131
  %133 = vmatprep.mubr.f32.mxu0 0.0
  %134 = vmatmul.mubr.f32.gmra.mxu0 %v61
  %v135 = vpop.f32.mrf.mxu0
  %v136 = vadd.f32 %v49, %v135
  %v137 = vpop.f32.mrf.mxu0
  %v138 = vadd.f32 %v53, %v137
  %139 = vdwg.mxu0
  %v144 = vcombine.low %v130, %v132
  %v145 = vcombine.high %v130, %v132
  %v147 = vunpack.c.l.s4 1983009808
  %v148 = vunpack.c.0.s8 %v147
  %v149 = vlaneseq
  %v150 = vshrl.u32 %v149, 7
  %v151 = vsub.s32 %v148, %v150
  %v152 = vrot.slane %v144, %v151
  %v154 = vunpack.c.l.s4 1983009808
  %v155 = vunpack.c.0.s8 %v154
  %v156 = vlaneseq
  %v157 = vshrl.u32 %v156, 7
  %v158 = vsub.s32 %v155, %v157
  %v159 = vrot.slane %v145, %v158
  %v160 = vcombine.high %v152, %v152
  %v161 = vcombine.high %v159, %v159
  %v162 = vcombine.low %v136, %v138
  %v163 = vcombine.high %v136, %v138
  %v165 = vunpack.c.l.s4 1983009808
  %v166 = vunpack.c.0.s8 %v165
  %v167 = vlaneseq
  %v168 = vshrl.u32 %v167, 7
  %v169 = vsub.s32 %v166, %v168
  %v170 = vrot.slane %v162, %v169
  %v172 = vunpack.c.l.s4 1983009808
  %v173 = vunpack.c.0.s8 %v172
  %v174 = vlaneseq
  %v175 = vshrl.u32 %v174, 7
  %v176 = vsub.s32 %v173, %v175
  %v177 = vrot.slane %v163, %v176
  %v178 = vcombine.high %v170, %v170
  %v179 = vcombine.high %v177, %v177
  %188 = vst [vmem:[#allocation2] sm:$0xf] %v152
  %189 = vst [vmem:[#allocation2 + $0x4] sm:$0xf] %v160
  %190 = vst [vmem:[#allocation2 + $0x8] sm:$0xf] %v159
  %191 = vst [vmem:[#allocation2 + $0xc] sm:$0xf] %v161
  %192 = vst [vmem:[#allocation2 + $0x10] sm:$0xf] %v170
  %193 = vst [vmem:[#allocation2 + $0x14] sm:$0xf] %v178
  %194 = vst [vmem:[#allocation2 + $0x18] sm:$0xf] %v177
  %195 = vst [vmem:[#allocation2 + $0x1c] sm:$0xf] %v179
  %vm196 = vcmask 517120
  %197 = vst.msk [vmem:[#allocation5] sm:$0x3] %vm196, 0.0
  %198 = vst.msk [vmem:[#allocation6] sm:$0x3] %vm196, 0.0
  %v199 = vld [vmem:[%s2] sm:$0xff]
  %v200 = vld [vmem:[%s2 + $0x8] sm:$0xff]
  %v201 = vld [vmem:[%s2 + $0x10] sm:$0xff]
  %v202 = vld [vmem:[%s2 + $0x18] sm:$0xff]
  %v203 = vld [vmem:[%s2 + $0x20] sm:$0xff]
  %v204 = vld [vmem:[%s2 + $0x28] sm:$0xff]
  %v205 = vld [vmem:[%s2 + $0x30] sm:$0xff]
  %v206 = vld [vmem:[%s2 + $0x38] sm:$0xff]
  %v207 = vld [vmem:[%s2 + $0x40] sm:$0xff]
  %v208 = vld [vmem:[%s2 + $0x48] sm:$0xff]
  %v209 = vld [vmem:[%s2 + $0x50] sm:$0xff]
  %v210 = vld [vmem:[%s2 + $0x58] sm:$0xff]
  %v211 = vld [vmem:[%s2 + $0x60] sm:$0xff]
  %v212 = vld [vmem:[%s2 + $0x68] sm:$0xff]
  %v213 = vld [vmem:[%s2 + $0x70] sm:$0xff]
  %v214 = vld [vmem:[%s2 + $0x78] sm:$0xff]
  %v215 = vld [vmem:[%s4] sm:$0x3]
  %v216 = vsub.f32 1.0, %v215
  %v217 = vld [vmem:[#allocation5] sm:$0x3]
  %v218 = vld [vmem:[#allocation6] sm:$0x3]
  %v219 = vld [vmem:[#allocation2] sm:$0xf]
  %v221 = vlaneseq
  %v222 = vshrl.u32 %v221, 7
  %v223 = vsub.s32 0, %v222
  %v224 = vrot.slane %v215, %v223
  %v225 = vlaneseq
  %v226 = vshrl.u32 %v225, 7
  %v227 = vsub.s32 1, %v226
  %v228 = vrot.slane %v215, %v227
  %v229 = vcombine.low %v224, %v228
  %v231 = vunpack.c.l.s4 1983009808
  %v232 = vunpack.c.0.s8 %v231
  %v233 = vlaneseq
  %v234 = vshrl.u32 %v233, 7
  %v235 = vsub.s32 %v232, %v234
  %v236 = vrot.slane %v229, %v235
  %v238 = vmul.f32 %v219, %v236
  %s239 = scalar_lea.vmem [#allocation2], 28
  %v240 = vld [vmem:[%s239] sm:$0xf]
  %v242 = vlaneseq
  %v243 = vshrl.u32 %v242, 7
  %v244 = vsub.s32 0, %v243
  %v245 = vrot.slane %v216, %v244
  %v246 = vlaneseq
  %v247 = vshrl.u32 %v246, 7
  %v248 = vsub.s32 1, %v247
  %v249 = vrot.slane %v216, %v248
  %v250 = vcombine.low %v245, %v249
  %v252 = vunpack.c.l.s4 1983009808
  %v253 = vunpack.c.0.s8 %v252
  %v254 = vlaneseq
  %v255 = vshrl.u32 %v254, 7
  %v256 = vsub.s32 %v253, %v255
  %v257 = vrot.slane %v250, %v256
  %v259 = vmul.f32 %v240, %v257
  %v260 = vadd.f32 %v238, %v259
  %v262 = vsel %vm56, %v217, 0
  %264 = vmatprep.subr.mxu0 0.0
  %265 = vmatpush1.msra.mxu0 0.0
  %266 = vmatprep.subr.mxu0 0.0
  %267 = vmatpush1.msra.mxu0 0.0
  %268 = vmatprep.subr.mxu0 0.0
  %269 = vmatpush1.msra.mxu0 0.0
  %270 = vmatprep.subr.mxu0 0.0
  %271 = vmatpush1.msra.mxu0 0.0
  %272 = vmatprep.subr.mxu0 0.0
  %273 = vmatpush1.msra.mxu0 0.0
  %274 = vmatprep.subr.mxu0 0.0
  %275 = vmatpush1.msra.mxu0 0.0
  %276 = vmatprep.subr.mxu0 0.0
  %277 = vmatpush1.msra.mxu0 0.0
  %278 = vmatprep.subr.mxu0 0.0
  %279 = vmatpush1.msra.mxu0 0.0
  %280 = vmatprep.subr.mxu0 %v214
  %281 = vmatpush1.msra.mxu0 %v213
  %282 = vmatprep.subr.mxu0 %v212
  %283 = vmatpush1.msra.mxu0 %v211
  %284 = vmatprep.subr.mxu0 %v210
  %285 = vmatpush1.msra.mxu0 %v209
  %286 = vmatprep.subr.mxu0 %v208
  %287 = vmatpush1.msra.mxu0 %v207
  %288 = vmatprep.subr.mxu0 %v206
  %289 = vmatpush1.msra.mxu0 %v205
  %290 = vmatprep.subr.mxu0 %v204
  %291 = vmatpush1.msra.mxu0 %v203
  %292 = vmatprep.subr.mxu0 %v202
  %293 = vmatpush1.msra.mxu0 %v201
  %294 = vmatprep.subr.mxu0 %v200
  %295 = vmatpush1.msra.mxu0 %v199
  %296 = vmatprep.subr.mxu0 0.0
  %297 = vmatpush2.msra.mxu0 0.0
  %298 = vmatprep.subr.mxu0 0.0
  %299 = vmatpush2.msra.mxu0 0.0
  %300 = vmatprep.subr.mxu0 0.0
  %301 = vmatpush2.msra.mxu0 0.0
  %302 = vmatprep.subr.mxu0 0.0
  %303 = vmatpush2.msra.mxu0 0.0
  %304 = vmatprep.subr.mxu0 0.0
  %305 = vmatpush2.msra.mxu0 0.0
  %306 = vmatprep.subr.mxu0 0.0
  %307 = vmatpush2.msra.mxu0 0.0
  %308 = vmatprep.subr.mxu0 0.0
  %309 = vmatpush2.msra.mxu0 0.0
  %310 = vmatprep.subr.mxu0 0.0
  %311 = vmatpush2.msra.mxu0 0.0
  %312 = vmatprep.subr.mxu0 0.0
  %313 = vmatpush2.msra.mxu0 0.0
  %314 = vmatprep.subr.mxu0 0.0
  %315 = vmatpush2.msra.mxu0 0.0
  %316 = vmatprep.subr.mxu0 0.0
  %317 = vmatpush2.msra.mxu0 0.0
  %318 = vmatprep.subr.mxu0 0.0
  %319 = vmatpush2.msra.mxu0 0.0
  %320 = vmatprep.subr.mxu0 0.0
  %321 = vmatpush2.msra.mxu0 0.0
  %322 = vmatprep.subr.mxu0 0.0
  %323 = vmatpush2.msra.mxu0 0.0
  %324 = vmatprep.subr.mxu0 0.0
  %325 = vmatpush2.msra.mxu0 0.0
  %326 = vmatprep.subr.mxu0 0.0
  %327 = vmatpush2.msra.mxu0 0.0
  %328 = vmatprep.mubr.f32.mxu0 0.0
  %329 = vmatmul.mubr.f32.gmra.mxu0 %v262
  %v330 = vpop.f32.mrf.mxu0
  %v331 = vadd.f32 0.0, %v330
  %v332 = vpop.f32.mrf.mxu0
  %v333 = vadd.f32 0.0, %v332
  %334 = vdwg.mxu0
  %v337 = vcombine.low %v331, %v333
  %v339 = vunpack.c.l.s4 1983009808
  %v340 = vunpack.c.0.s8 %v339
  %v341 = vlaneseq
  %v342 = vshrl.u32 %v341, 7
  %v343 = vsub.s32 %v340, %v342
  %v344 = vrot.slane %v337, %v343
  %v346 = vadd.f32 %v260, %v344
  %v347 = vxor.u32 %v346, 2147483648
  %v348 = vmul.f32 %v347, 1.442695
  %v349 = vpow.pop %v348
  %v350 = vadd.f32 %v349, 1.0
  %v351 = vrcp.pop %v350
  %v352 = vmul.f32 1.0, %v351
  %v354 = vrot.slane %v346, 2
  %v356 = vtanh.pop %v354
  %357 = vrot.lane.b32.xlu0 %v346, 64
  %v358 = vpop.permute.xlu0 %357
  %v359 = vrot.slane %v358, 2
  %v361 = vxor.u32 %v359, 2147483648
  %v362 = vmul.f32 %v361, 1.442695
  %v363 = vpow.pop %v362
  %v364 = vadd.f32 %v363, 1.0
  %v365 = vrcp.pop %v364
  %v366 = vmul.f32 1.0, %v365
  %v369 = vunpack.c.l.s4 1983009808
  %v370 = vunpack.c.0.s8 %v369
  %v371 = vlaneseq
  %v372 = vshrl.u32 %v371, 7
  %v373 = vsub.s32 %v370, %v372
  %v374 = vrot.slane %v218, %v373
  %375 = vrot.lane.b32.xlu0 %v374, 64
  %v376 = vpop.permute.xlu0 %375
  %v378 = vmul.f32 %v352, %v376
  %v379 = vmul.f32 %v352, %v356
  %381 = vrot.lane.b32.xlu0 %v379, 64
  %v382 = vpop.permute.xlu0 %381
  %v384 = vadd.f32 %v378, %v382
  %v385 = vtanh.pop %v384
  %387 = vrot.lane.b32.xlu0 %v385, 64
  %v388 = vpop.permute.xlu0 %387
  %v390 = vmul.f32 %v366, %v388
  %391 = vst.msk [vmem:[#allocation5] sm:$0x3] %vm196, %v390
  %v394 = vunpack.c.l.s4 1983009808
  %v395 = vunpack.c.0.s8 %v394
  %v396 = vlaneseq
  %v397 = vshrl.u32 %v396, 7
  %v398 = vsub.s32 %v395, %v397
  %v399 = vrot.slane %v384, %v398
  %400 = vrot.lane.b32.xlu0 %v399, 64
  %v401 = vpop.permute.xlu0 %400
  %403 = vst.msk [vmem:[#allocation6] sm:$0x3] %vm196, %v401
  %vm404 = vcmask 254976
  %405 = vst.msk [vmem:[#allocation3] sm:$0x3] %vm404, %v390
  %v408 = vunpack.c.l.s4 1983009808
  %v409 = vunpack.c.0.s8 %v408
  %v410 = vlaneseq
  %v411 = vshrl.u32 %v410, 7
  %v412 = vsub.s32 %v409, %v411
  %v413 = vrot.slane %v390, %v412
  %414 = vrot.lane.b32.xlu0 %v413, 96
  %v415 = vpop.permute.xlu0 %414
  %s417 = scalar_lea.vmem [#allocation4], 14
  %418 = vst.msk [vmem:[%s417] sm:$0x3] %vm404, %v415
  %v419 = vld [vmem:[#allocation5] sm:$0x3]
  %v420 = vld [vmem:[#allocation6] sm:$0x3]
  %s421 = scalar_lea.vmem [#allocation2], 4
  %v422 = vld [vmem:[%s421] sm:$0xf]
  %v423 = vmul.f32 %v422, %v236
  %s424 = scalar_lea.vmem [#allocation2], 24
  %v425 = vld [vmem:[%s424] sm:$0xf]
  %v426 = vmul.f32 %v425, %v257
  %v427 = vadd.f32 %v423, %v426
  %v429 = vsel %vm56, %v419, 0
  %431 = vmatprep.subr.mxu0 0.0
  %432 = vmatpush1.msra.mxu0 0.0
  %433 = vmatprep.subr.mxu0 0.0
  %434 = vmatpush1.msra.mxu0 0.0
  %435 = vmatprep.subr.mxu0 0.0
  %436 = vmatpush1.msra.mxu0 0.0
  %437 = vmatprep.subr.mxu0 0.0
  %438 = vmatpush1.msra.mxu0 0.0
  %439 = vmatprep.subr.mxu0 0.0
  %440 = vmatpush1.msra.mxu0 0.0
  %441 = vmatprep.subr.mxu0 0.0
  %442 = vmatpush1.msra.mxu0 0.0
  %443 = vmatprep.subr.mxu0 0.0
  %444 = vmatpush1.msra.mxu0 0.0
  %445 = vmatprep.subr.mxu0 0.0
  %446 = vmatpush1.msra.mxu0 0.0
  %447 = vmatprep.subr.mxu0 %v214
  %448 = vmatpush1.msra.mxu0 %v213
  %449 = vmatprep.subr.mxu0 %v212
  %450 = vmatpush1.msra.mxu0 %v211
  %451 = vmatprep.subr.mxu0 %v210
  %452 = vmatpush1.msra.mxu0 %v209
  %453 = vmatprep.subr.mxu0 %v208
  %454 = vmatpush1.msra.mxu0 %v207
  %455 = vmatprep.subr.mxu0 %v206
  %456 = vmatpush1.msra.mxu0 %v205
  %457 = vmatprep.subr.mxu0 %v204
  %458 = vmatpush1.msra.mxu0 %v203
  %459 = vmatprep.subr.mxu0 %v202
  %460 = vmatpush1.msra.mxu0 %v201
  %461 = vmatprep.subr.mxu0 %v200
  %462 = vmatpush1.msra.mxu0 %v199
  %463 = vmatprep.subr.mxu0 0.0
  %464 = vmatpush2.msra.mxu0 0.0
  %465 = vmatprep.subr.mxu0 0.0
  %466 = vmatpush2.msra.mxu0 0.0
  %467 = vmatprep.subr.mxu0 0.0
  %468 = vmatpush2.msra.mxu0 0.0
  %469 = vmatprep.subr.mxu0 0.0
  %470 = vmatpush2.msra.mxu0 0.0
  %471 = vmatprep.subr.mxu0 0.0
  %472 = vmatpush2.msra.mxu0 0.0
  %473 = vmatprep.subr.mxu0 0.0
  %474 = vmatpush2.msra.mxu0 0.0
  %475 = vmatprep.subr.mxu0 0.0
  %476 = vmatpush2.msra.mxu0 0.0
  %477 = vmatprep.subr.mxu0 0.0
  %478 = vmatpush2.msra.mxu0 0.0
  %479 = vmatprep.subr.mxu0 0.0
  %480 = vmatpush2.msra.mxu0 0.0
  %481 = vmatprep.subr.mxu0 0.0
  %482 = vmatpush2.msra.mxu0 0.0
  %483 = vmatprep.subr.mxu0 0.0
  %484 = vmatpush2.msra.mxu0 0.0
  %485 = vmatprep.subr.mxu0 0.0
  %486 = vmatpush2.msra.mxu0 0.0
  %487 = vmatprep.subr.mxu0 0.0
  %488 = vmatpush2.msra.mxu0 0.0
  %489 = vmatprep.subr.mxu0 0.0
  %490 = vmatpush2.msra.mxu0 0.0
  %491 = vmatprep.subr.mxu0 0.0
  %492 = vmatpush2.msra.mxu0 0.0
  %493 = vmatprep.subr.mxu0 0.0
  %494 = vmatpush2.msra.mxu0 0.0
  %495 = vmatprep.mubr.f32.mxu0 0.0
  %496 = vmatmul.mubr.f32.gmra.mxu0 %v429
  %v497 = vpop.f32.mrf.mxu0
  %v498 = vadd.f32 0.0, %v497
  %v499 = vpop.f32.mrf.mxu0
  %v500 = vadd.f32 0.0, %v499
  %501 = vdwg.mxu0
  %v504 = vcombine.low %v498, %v500
  %v506 = vunpack.c.l.s4 1983009808
  %v507 = vunpack.c.0.s8 %v506
  %v508 = vlaneseq
  %v509 = vshrl.u32 %v508, 7
  %v510 = vsub.s32 %v507, %v509
  %v511 = vrot.slane %v504, %v510
  %v513 = vadd.f32 %v427, %v511
  %v514 = vxor.u32 %v513, 2147483648
  %v515 = vmul.f32 %v514, 1.442695
  %v516 = vpow.pop %v515
  %v517 = vadd.f32 %v516, 1.0
  %v518 = vrcp.pop %v517
  %v519 = vmul.f32 1.0, %v518
  %v521 = vrot.slane %v513, 2
  %v523 = vtanh.pop %v521
  %524 = vrot.lane.b32.xlu0 %v513, 64
  %v525 = vpop.permute.xlu0 %524
  %v526 = vrot.slane %v525, 2
  %v528 = vxor.u32 %v526, 2147483648
  %v529 = vmul.f32 %v528, 1.442695
  %v530 = vpow.pop %v529
  %v531 = vadd.f32 %v530, 1.0
  %v532 = vrcp.pop %v531
  %v533 = vmul.f32 1.0, %v532
  %v536 = vunpack.c.l.s4 1983009808
  %v537 = vunpack.c.0.s8 %v536
  %v538 = vlaneseq
  %v539 = vshrl.u32 %v538, 7
  %v540 = vsub.s32 %v537, %v539
  %v541 = vrot.slane %v420, %v540
  %542 = vrot.lane.b32.xlu0 %v541, 64
  %v543 = vpop.permute.xlu0 %542
  %v545 = vmul.f32 %v519, %v543
  %v546 = vmul.f32 %v519, %v523
  %548 = vrot.lane.b32.xlu0 %v546, 64
  %v549 = vpop.permute.xlu0 %548
  %v551 = vadd.f32 %v545, %v549
  %v552 = vtanh.pop %v551
  %554 = vrot.lane.b32.xlu0 %v552, 64
  %v555 = vpop.permute.xlu0 %554
  %v557 = vmul.f32 %v533, %v555
  %558 = vst.msk [vmem:[#allocation5] sm:$0x3] %vm196, %v557
  %v561 = vunpack.c.l.s4 1983009808
  %v562 = vunpack.c.0.s8 %v561
  %v563 = vlaneseq
  %v564 = vshrl.u32 %v563, 7
  %v565 = vsub.s32 %v562, %v564
  %v566 = vrot.slane %v551, %v565
  %567 = vrot.lane.b32.xlu0 %v566, 64
  %v568 = vpop.permute.xlu0 %567
  %570 = vst.msk [vmem:[#allocation6] sm:$0x3] %vm196, %v568
  %s571 = scalar_lea.vmem [#allocation3], 2
  %572 = vst.msk [vmem:[%s571] sm:$0x3] %vm404, %v557
  %v575 = vunpack.c.l.s4 1983009808
  %v576 = vunpack.c.0.s8 %v575
  %v577 = vlaneseq
  %v578 = vshrl.u32 %v577, 7
  %v579 = vsub.s32 %v576, %v578
  %v580 = vrot.slane %v557, %v579
  %581 = vrot.lane.b32.xlu0 %v580, 96
  %v582 = vpop.permute.xlu0 %581
  %s584 = scalar_lea.vmem [#allocation4], 12
  %585 = vst.msk [vmem:[%s584] sm:$0x3] %vm404, %v582
  %v586 = vld [vmem:[#allocation5] sm:$0x3]
  %v587 = vld [vmem:[#allocation6] sm:$0x3]
  %s588 = scalar_lea.vmem [#allocation2], 8
  %v589 = vld [vmem:[%s588] sm:$0xf]
  %v590 = vmul.f32 %v589, %v236
  %s591 = scalar_lea.vmem [#allocation2], 20
  %v592 = vld [vmem:[%s591] sm:$0xf]
  %v593 = vmul.f32 %v592, %v257
  %v594 = vadd.f32 %v590, %v593
  %v596 = vsel %vm56, %v586, 0
  %598 = vmatprep.subr.mxu0 0.0
  %599 = vmatpush1.msra.mxu0 0.0
  %600 = vmatprep.subr.mxu0 0.0
  %601 = vmatpush1.msra.mxu0 0.0
  %602 = vmatprep.subr.mxu0 0.0
  %603 = vmatpush1.msra.mxu0 0.0
  %604 = vmatprep.subr.mxu0 0.0
  %605 = vmatpush1.msra.mxu0 0.0
  %606 = vmatprep.subr.mxu0 0.0
  %607 = vmatpush1.msra.mxu0 0.0
  %608 = vmatprep.subr.mxu0 0.0
  %609 = vmatpush1.msra.mxu0 0.0
  %610 = vmatprep.subr.mxu0 0.0
  %611 = vmatpush1.msra.mxu0 0.0
  %612 = vmatprep.subr.mxu0 0.0
  %613 = vmatpush1.msra.mxu0 0.0
  %614 = vmatprep.subr.mxu0 %v214
  %615 = vmatpush1.msra.mxu0 %v213
  %616 = vmatprep.subr.mxu0 %v212
  %617 = vmatpush1.msra.mxu0 %v211
  %618 = vmatprep.subr.mxu0 %v210
  %619 = vmatpush1.msra.mxu0 %v209
  %620 = vmatprep.subr.mxu0 %v208
  %621 = vmatpush1.msra.mxu0 %v207
  %622 = vmatprep.subr.mxu0 %v206
  %623 = vmatpush1.msra.mxu0 %v205
  %624 = vmatprep.subr.mxu0 %v204
  %625 = vmatpush1.msra.mxu0 %v203
  %626 = vmatprep.subr.mxu0 %v202
  %627 = vmatpush1.msra.mxu0 %v201
  %628 = vmatprep.subr.mxu0 %v200
  %629 = vmatpush1.msra.mxu0 %v199
  %630 = vmatprep.subr.mxu0 0.0
  %631 = vmatpush2.msra.mxu0 0.0
  %632 = vmatprep.subr.mxu0 0.0
  %633 = vmatpush2.msra.mxu0 0.0
  %634 = vmatprep.subr.mxu0 0.0
  %635 = vmatpush2.msra.mxu0 0.0
  %636 = vmatprep.subr.mxu0 0.0
  %637 = vmatpush2.msra.mxu0 0.0
  %638 = vmatprep.subr.mxu0 0.0
  %639 = vmatpush2.msra.mxu0 0.0
  %640 = vmatprep.subr.mxu0 0.0
  %641 = vmatpush2.msra.mxu0 0.0
  %642 = vmatprep.subr.mxu0 0.0
  %643 = vmatpush2.msra.mxu0 0.0
  %644 = vmatprep.subr.mxu0 0.0
  %645 = vmatpush2.msra.mxu0 0.0
  %646 = vmatprep.subr.mxu0 0.0
  %647 = vmatpush2.msra.mxu0 0.0
  %648 = vmatprep.subr.mxu0 0.0
  %649 = vmatpush2.msra.mxu0 0.0
  %650 = vmatprep.subr.mxu0 0.0
  %651 = vmatpush2.msra.mxu0 0.0
  %652 = vmatprep.subr.mxu0 0.0
  %653 = vmatpush2.msra.mxu0 0.0
  %654 = vmatprep.subr.mxu0 0.0
  %655 = vmatpush2.msra.mxu0 0.0
  %656 = vmatprep.subr.mxu0 0.0
  %657 = vmatpush2.msra.mxu0 0.0
  %658 = vmatprep.subr.mxu0 0.0
  %659 = vmatpush2.msra.mxu0 0.0
  %660 = vmatprep.subr.mxu0 0.0
  %661 = vmatpush2.msra.mxu0 0.0
  %662 = vmatprep.mubr.f32.mxu0 0.0
  %663 = vmatmul.mubr.f32.gmra.mxu0 %v596
  %v664 = vpop.f32.mrf.mxu0
  %v665 = vadd.f32 0.0, %v664
  %v666 = vpop.f32.mrf.mxu0
  %v667 = vadd.f32 0.0, %v666
  %668 = vdwg.mxu0
  %v671 = vcombine.low %v665, %v667
  %v673 = vunpack.c.l.s4 1983009808
  %v674 = vunpack.c.0.s8 %v673
  %v675 = vlaneseq
  %v676 = vshrl.u32 %v675, 7
  %v677 = vsub.s32 %v674, %v676
  %v678 = vrot.slane %v671, %v677
  %v680 = vadd.f32 %v594, %v678
  %v681 = vxor.u32 %v680, 2147483648
  %v682 = vmul.f32 %v681, 1.442695
  %v683 = vpow.pop %v682
  %v684 = vadd.f32 %v683, 1.0
  %v685 = vrcp.pop %v684
  %v686 = vmul.f32 1.0, %v685
  %v688 = vrot.slane %v680, 2
  %v690 = vtanh.pop %v688
  %691 = vrot.lane.b32.xlu0 %v680, 64
  %v692 = vpop.permute.xlu0 %691
  %v693 = vrot.slane %v692, 2
  %v695 = vxor.u32 %v693, 2147483648
  %v696 = vmul.f32 %v695, 1.442695
  %v697 = vpow.pop %v696
  %v698 = vadd.f32 %v697, 1.0
  %v699 = vrcp.pop %v698
  %v700 = vmul.f32 1.0, %v699
  %v703 = vunpack.c.l.s4 1983009808
  %v704 = vunpack.c.0.s8 %v703
  %v705 = vlaneseq
  %v706 = vshrl.u32 %v705, 7
  %v707 = vsub.s32 %v704, %v706
  %v708 = vrot.slane %v587, %v707
  %709 = vrot.lane.b32.xlu0 %v708, 64
  %v710 = vpop.permute.xlu0 %709
  %v712 = vmul.f32 %v686, %v710
  %v713 = vmul.f32 %v686, %v690
  %715 = vrot.lane.b32.xlu0 %v713, 64
  %v716 = vpop.permute.xlu0 %715
  %v718 = vadd.f32 %v712, %v716
  %v719 = vtanh.pop %v718
  %721 = vrot.lane.b32.xlu0 %v719, 64
  %v722 = vpop.permute.xlu0 %721
  %v724 = vmul.f32 %v700, %v722
  %725 = vst.msk [vmem:[#allocation5] sm:$0x3] %vm196, %v724
  %v728 = vunpack.c.l.s4 1983009808
  %v729 = vunpack.c.0.s8 %v728
  %v730 = vlaneseq
  %v731 = vshrl.u32 %v730, 7
  %v732 = vsub.s32 %v729, %v731
  %v733 = vrot.slane %v718, %v732
  %734 = vrot.lane.b32.xlu0 %v733, 64
  %v735 = vpop.permute.xlu0 %734
  %737 = vst.msk [vmem:[#allocation6] sm:$0x3] %vm196, %v735
  %s738 = scalar_lea.vmem [#allocation3], 4
  %739 = vst.msk [vmem:[%s738] sm:$0x3] %vm404, %v724
  %v742 = vunpack.c.l.s4 1983009808
  %v743 = vunpack.c.0.s8 %v742
  %v744 = vlaneseq
  %v745 = vshrl.u32 %v744, 7
  %v746 = vsub.s32 %v743, %v745
  %v747 = vrot.slane %v724, %v746
  %748 = vrot.lane.b32.xlu0 %v747, 96
  %v749 = vpop.permute.xlu0 %748
  %s751 = scalar_lea.vmem [#allocation4], 10
  %752 = vst.msk [vmem:[%s751] sm:$0x3] %vm404, %v749
  %v753 = vld [vmem:[#allocation5] sm:$0x3]
  %v754 = vld [vmem:[#allocation6] sm:$0x3]
  %s755 = scalar_lea.vmem [#allocation2], 12
  %v756 = vld [vmem:[%s755] sm:$0xf]
  %v757 = vmul.f32 %v756, %v236
  %s758 = scalar_lea.vmem [#allocation2], 16
  %v759 = vld [vmem:[%s758] sm:$0xf]
  %v760 = vmul.f32 %v759, %v257
  %v761 = vadd.f32 %v757, %v760
  %v763 = vsel %vm56, %v753, 0
  %765 = vmatprep.subr.mxu0 0.0
  %766 = vmatpush1.msra.mxu0 0.0
  %767 = vmatprep.subr.mxu0 0.0
  %768 = vmatpush1.msra.mxu0 0.0
  %769 = vmatprep.subr.mxu0 0.0
  %770 = vmatpush1.msra.mxu0 0.0
  %771 = vmatprep.subr.mxu0 0.0
  %772 = vmatpush1.msra.mxu0 0.0
  %773 = vmatprep.subr.mxu0 0.0
  %774 = vmatpush1.msra.mxu0 0.0
  %775 = vmatprep.subr.mxu0 0.0
  %776 = vmatpush1.msra.mxu0 0.0
  %777 = vmatprep.subr.mxu0 0.0
  %778 = vmatpush1.msra.mxu0 0.0
  %779 = vmatprep.subr.mxu0 0.0
  %780 = vmatpush1.msra.mxu0 0.0
  %781 = vmatprep.subr.mxu0 %v214
  %782 = vmatpush1.msra.mxu0 %v213
  %783 = vmatprep.subr.mxu0 %v212
  %784 = vmatpush1.msra.mxu0 %v211
  %785 = vmatprep.subr.mxu0 %v210
  %786 = vmatpush1.msra.mxu0 %v209
  %787 = vmatprep.subr.mxu0 %v208
  %788 = vmatpush1.msra.mxu0 %v207
  %789 = vmatprep.subr.mxu0 %v206
  %790 = vmatpush1.msra.mxu0 %v205
  %791 = vmatprep.subr.mxu0 %v204
  %792 = vmatpush1.msra.mxu0 %v203
  %793 = vmatprep.subr.mxu0 %v202
  %794 = vmatpush1.msra.mxu0 %v201
  %795 = vmatprep.subr.mxu0 %v200
  %796 = vmatpush1.msra.mxu0 %v199
  %797 = vmatprep.subr.mxu0 0.0
  %798 = vmatpush2.msra.mxu0 0.0
  %799 = vmatprep.subr.mxu0 0.0
  %800 = vmatpush2.msra.mxu0 0.0
  %801 = vmatprep.subr.mxu0 0.0
  %802 = vmatpush2.msra.mxu0 0.0
  %803 = vmatprep.subr.mxu0 0.0
  %804 = vmatpush2.msra.mxu0 0.0
  %805 = vmatprep.subr.mxu0 0.0
  %806 = vmatpush2.msra.mxu0 0.0
  %807 = vmatprep.subr.mxu0 0.0
  %808 = vmatpush2.msra.mxu0 0.0
  %809 = vmatprep.subr.mxu0 0.0
  %810 = vmatpush2.msra.mxu0 0.0
  %811 = vmatprep.subr.mxu0 0.0
  %812 = vmatpush2.msra.mxu0 0.0
  %813 = vmatprep.subr.mxu0 0.0
  %814 = vmatpush2.msra.mxu0 0.0
  %815 = vmatprep.subr.mxu0 0.0
  %816 = vmatpush2.msra.mxu0 0.0
  %817 = vmatprep.subr.mxu0 0.0
  %818 = vmatpush2.msra.mxu0 0.0
  %819 = vmatprep.subr.mxu0 0.0
  %820 = vmatpush2.msra.mxu0 0.0
  %821 = vmatprep.subr.mxu0 0.0
  %822 = vmatpush2.msra.mxu0 0.0
  %823 = vmatprep.subr.mxu0 0.0
  %824 = vmatpush2.msra.mxu0 0.0
  %825 = vmatprep.subr.mxu0 0.0
  %826 = vmatpush2.msra.mxu0 0.0
  %827 = vmatprep.subr.mxu0 0.0
  %828 = vmatpush2.msra.mxu0 0.0
  %829 = vmatprep.mubr.f32.mxu0 0.0
  %830 = vmatmul.mubr.f32.gmra.mxu0 %v763
  %v831 = vpop.f32.mrf.mxu0
  %v832 = vadd.f32 0.0, %v831
  %v833 = vpop.f32.mrf.mxu0
  %v834 = vadd.f32 0.0, %v833
  %835 = vdwg.mxu0
  %v838 = vcombine.low %v832, %v834
  %v840 = vunpack.c.l.s4 1983009808
  %v841 = vunpack.c.0.s8 %v840
  %v842 = vlaneseq
  %v843 = vshrl.u32 %v842, 7
  %v844 = vsub.s32 %v841, %v843
  %v845 = vrot.slane %v838, %v844
  %v847 = vadd.f32 %v761, %v845
  %v848 = vxor.u32 %v847, 2147483648
  %v849 = vmul.f32 %v848, 1.442695
  %v850 = vpow.pop %v849
  %v851 = vadd.f32 %v850, 1.0
  %v852 = vrcp.pop %v851
  %v853 = vmul.f32 1.0, %v852
  %v855 = vrot.slane %v847, 2
  %v857 = vtanh.pop %v855
  %858 = vrot.lane.b32.xlu0 %v847, 64
  %v859 = vpop.permute.xlu0 %858
  %v860 = vrot.slane %v859, 2
  %v862 = vxor.u32 %v860, 2147483648
  %v863 = vmul.f32 %v862, 1.442695
  %v864 = vpow.pop %v863
  %v865 = vadd.f32 %v864, 1.0
  %v866 = vrcp.pop %v865
  %v867 = vmul.f32 1.0, %v866
  %v870 = vunpack.c.l.s4 1983009808
  %v871 = vunpack.c.0.s8 %v870
  %v872 = vlaneseq
  %v873 = vshrl.u32 %v872, 7
  %v874 = vsub.s32 %v871, %v873
  %v875 = vrot.slane %v754, %v874
  %876 = vrot.lane.b32.xlu0 %v875, 64
  %v877 = vpop.permute.xlu0 %876
  %v879 = vmul.f32 %v853, %v877
  %v880 = vmul.f32 %v853, %v857
  %882 = vrot.lane.b32.xlu0 %v880, 64
  %v883 = vpop.permute.xlu0 %882
  %v885 = vadd.f32 %v879, %v883
  %v886 = vtanh.pop %v885
  %888 = vrot.lane.b32.xlu0 %v886, 64
  %v889 = vpop.permute.xlu0 %888
  %v891 = vmul.f32 %v867, %v889
  %892 = vst.msk [vmem:[#allocation5] sm:$0x3] %vm196, %v891
  %v895 = vunpack.c.l.s4 1983009808
  %v896 = vunpack.c.0.s8 %v895
  %v897 = vlaneseq
  %v898 = vshrl.u32 %v897, 7
  %v899 = vsub.s32 %v896, %v898
  %v900 = vrot.slane %v885, %v899
  %901 = vrot.lane.b32.xlu0 %v900, 64
  %v902 = vpop.permute.xlu0 %901
  %904 = vst.msk [vmem:[#allocation6] sm:$0x3] %vm196, %v902
  %s905 = scalar_lea.vmem [#allocation3], 6
  %906 = vst.msk [vmem:[%s905] sm:$0x3] %vm404, %v891
  %v909 = vunpack.c.l.s4 1983009808
  %v910 = vunpack.c.0.s8 %v909
  %v911 = vlaneseq
  %v912 = vshrl.u32 %v911, 7
  %v913 = vsub.s32 %v910, %v912
  %v914 = vrot.slane %v891, %v913
  %915 = vrot.lane.b32.xlu0 %v914, 96
  %v916 = vpop.permute.xlu0 %915
  %s918 = scalar_lea.vmem [#allocation4], 8
  %919 = vst.msk [vmem:[%s918] sm:$0x3] %vm404, %v916
  %v920 = vld [vmem:[#allocation5] sm:$0x3]
  %v921 = vld [vmem:[#allocation6] sm:$0x3]
  %v922 = vld [vmem:[%s758] sm:$0xf]
  %v923 = vmul.f32 %v922, %v236
  %v924 = vld [vmem:[%s755] sm:$0xf]
  %v925 = vmul.f32 %v924, %v257
  %v926 = vadd.f32 %v923, %v925
  %v928 = vsel %vm56, %v920, 0
  %930 = vmatprep.subr.mxu0 0.0
  %931 = vmatpush1.msra.mxu0 0.0
  %932 = vmatprep.subr.mxu0 0.0
  %933 = vmatpush1.msra.mxu0 0.0
  %934 = vmatprep.subr.mxu0 0.0
  %935 = vmatpush1.msra.mxu0 0.0
  %936 = vmatprep.subr.mxu0 0.0
  %937 = vmatpush1.msra.mxu0 0.0
  %938 = vmatprep.subr.mxu0 0.0
  %939 = vmatpush1.msra.mxu0 0.0
  %940 = vmatprep.subr.mxu0 0.0
  %941 = vmatpush1.msra.mxu0 0.0
  %942 = vmatprep.subr.mxu0 0.0
  %943 = vmatpush1.msra.mxu0 0.0
  %944 = vmatprep.subr.mxu0 0.0
  %945 = vmatpush1.msra.mxu0 0.0
  %946 = vmatprep.subr.mxu0 %v214
  %947 = vmatpush1.msra.mxu0 %v213
  %948 = vmatprep.subr.mxu0 %v212
  %949 = vmatpush1.msra.mxu0 %v211
  %950 = vmatprep.subr.mxu0 %v210
  %951 = vmatpush1.msra.mxu0 %v209
  %952 = vmatprep.subr.mxu0 %v208
  %953 = vmatpush1.msra.mxu0 %v207
  %954 = vmatprep.subr.mxu0 %v206
  %955 = vmatpush1.msra.mxu0 %v205
  %956 = vmatprep.subr.mxu0 %v204
  %957 = vmatpush1.msra.mxu0 %v203
  %958 = vmatprep.subr.mxu0 %v202
  %959 = vmatpush1.msra.mxu0 %v201
  %960 = vmatprep.subr.mxu0 %v200
  %961 = vmatpush1.msra.mxu0 %v199
  %962 = vmatprep.subr.mxu0 0.0
  %963 = vmatpush2.msra.mxu0 0.0
  %964 = vmatprep.subr.mxu0 0.0
  %965 = vmatpush2.msra.mxu0 0.0
  %966 = vmatprep.subr.mxu0 0.0
  %967 = vmatpush2.msra.mxu0 0.0
  %968 = vmatprep.subr.mxu0 0.0
  %969 = vmatpush2.msra.mxu0 0.0
  %970 = vmatprep.subr.mxu0 0.0
  %971 = vmatpush2.msra.mxu0 0.0
  %972 = vmatprep.subr.mxu0 0.0
  %973 = vmatpush2.msra.mxu0 0.0
  %974 = vmatprep.subr.mxu0 0.0
  %975 = vmatpush2.msra.mxu0 0.0
  %976 = vmatprep.subr.mxu0 0.0
  %977 = vmatpush2.msra.mxu0 0.0
  %978 = vmatprep.subr.mxu0 0.0
  %979 = vmatpush2.msra.mxu0 0.0
  %980 = vmatprep.subr.mxu0 0.0
  %981 = vmatpush2.msra.mxu0 0.0
  %982 = vmatprep.subr.mxu0 0.0
  %983 = vmatpush2.msra.mxu0 0.0
  %984 = vmatprep.subr.mxu0 0.0
  %985 = vmatpush2.msra.mxu0 0.0
  %986 = vmatprep.subr.mxu0 0.0
  %987 = vmatpush2.msra.mxu0 0.0
  %988 = vmatprep.subr.mxu0 0.0
  %989 = vmatpush2.msra.mxu0 0.0
  %990 = vmatprep.subr.mxu0 0.0
  %991 = vmatpush2.msra.mxu0 0.0
  %992 = vmatprep.subr.mxu0 0.0
  %993 = vmatpush2.msra.mxu0 0.0
  %994 = vmatprep.mubr.f32.mxu0 0.0
  %995 = vmatmul.mubr.f32.gmra.mxu0 %v928
  %v996 = vpop.f32.mrf.mxu0
  %v997 = vadd.f32 0.0, %v996
  %v998 = vpop.f32.mrf.mxu0
  %v999 = vadd.f32 0.0, %v998
  %1000 = vdwg.mxu0
  %v1003 = vcombine.low %v997, %v999
  %v1005 = vunpack.c.l.s4 1983009808
  %v1006 = vunpack.c.0.s8 %v1005
  %v1007 = vlaneseq
  %v1008 = vshrl.u32 %v1007, 7
  %v1009 = vsub.s32 %v1006, %v1008
  %v1010 = vrot.slane %v1003, %v1009
  %v1012 = vadd.f32 %v926, %v1010
  %v1013 = vxor.u32 %v1012, 2147483648
  %v1014 = vmul.f32 %v1013, 1.442695
  %v1015 = vpow.pop %v1014
  %v1016 = vadd.f32 %v1015, 1.0
  %v1017 = vrcp.pop %v1016
  %v1018 = vmul.f32 1.0, %v1017
  %v1020 = vrot.slane %v1012, 2
  %v1022 = vtanh.pop %v1020
  %1023 = vrot.lane.b32.xlu0 %v1012, 64
  %v1024 = vpop.permute.xlu0 %1023
  %v1025 = vrot.slane %v1024, 2
  %v1027 = vxor.u32 %v1025, 2147483648
  %v1028 = vmul.f32 %v1027, 1.442695
  %v1029 = vpow.pop %v1028
  %v1030 = vadd.f32 %v1029, 1.0
  %v1031 = vrcp.pop %v1030
  %v1032 = vmul.f32 1.0, %v1031
  %v1035 = vunpack.c.l.s4 1983009808
  %v1036 = vunpack.c.0.s8 %v1035
  %v1037 = vlaneseq
  %v1038 = vshrl.u32 %v1037, 7
  %v1039 = vsub.s32 %v1036, %v1038
  %v1040 = vrot.slane %v921, %v1039
  %1041 = vrot.lane.b32.xlu0 %v1040, 64
  %v1042 = vpop.permute.xlu0 %1041
  %v1044 = vmul.f32 %v1018, %v1042
  %v1045 = vmul.f32 %v1018, %v1022
  %1047 = vrot.lane.b32.xlu0 %v1045, 64
  %v1048 = vpop.permute.xlu0 %1047
  %v1050 = vadd.f32 %v1044, %v1048
  %v1051 = vtanh.pop %v1050
  %1053 = vrot.lane.b32.xlu0 %v1051, 64
  %v1054 = vpop.permute.xlu0 %1053
  %v1056 = vmul.f32 %v1032, %v1054
  %1057 = vst.msk [vmem:[#allocation5] sm:$0x3] %vm196, %v1056
  %v1060 = vunpack.c.l.s4 1983009808
  %v1061 = vunpack.c.0.s8 %v1060
  %v1062 = vlaneseq
  %v1063 = vshrl.u32 %v1062, 7
  %v1064 = vsub.s32 %v1061, %v1063
  %v1065 = vrot.slane %v1050, %v1064
  %1066 = vrot.lane.b32.xlu0 %v1065, 64
  %v1067 = vpop.permute.xlu0 %1066
  %1069 = vst.msk [vmem:[#allocation6] sm:$0x3] %vm196, %v1067
  %s1070 = scalar_lea.vmem [#allocation3], 8
  %1071 = vst.msk [vmem:[%s1070] sm:$0x3] %vm404, %v1056
  %v1074 = vunpack.c.l.s4 1983009808
  %v1075 = vunpack.c.0.s8 %v1074
  %v1076 = vlaneseq
  %v1077 = vshrl.u32 %v1076, 7
  %v1078 = vsub.s32 %v1075, %v1077
  %v1079 = vrot.slane %v1056, %v1078
  %1080 = vrot.lane.b32.xlu0 %v1079, 96
  %v1081 = vpop.permute.xlu0 %1080
  %s1083 = scalar_lea.vmem [#allocation4], 6
  %1084 = vst.msk [vmem:[%s1083] sm:$0x3] %vm404, %v1081
  %v1085 = vld [vmem:[#allocation5] sm:$0x3]
  %v1086 = vld [vmem:[#allocation6] sm:$0x3]
  %v1087 = vld [vmem:[%s591] sm:$0xf]
  %v1088 = vmul.f32 %v1087, %v236
  %v1089 = vld [vmem:[%s588] sm:$0xf]
  %v1090 = vmul.f32 %v1089, %v257
  %v1091 = vadd.f32 %v1088, %v1090
  %v1093 = vsel %vm56, %v1085, 0
  %1095 = vmatprep.subr.mxu0 0.0
  %1096 = vmatpush1.msra.mxu0 0.0
  %1097 = vmatprep.subr.mxu0 0.0
  %1098 = vmatpush1.msra.mxu0 0.0
  %1099 = vmatprep.subr.mxu0 0.0
  %1100 = vmatpush1.msra.mxu0 0.0
  %1101 = vmatprep.subr.mxu0 0.0
  %1102 = vmatpush1.msra.mxu0 0.0
  %1103 = vmatprep.subr.mxu0 0.0
  %1104 = vmatpush1.msra.mxu0 0.0
  %1105 = vmatprep.subr.mxu0 0.0
  %1106 = vmatpush1.msra.mxu0 0.0
  %1107 = vmatprep.subr.mxu0 0.0
  %1108 = vmatpush1.msra.mxu0 0.0
  %1109 = vmatprep.subr.mxu0 0.0
  %1110 = vmatpush1.msra.mxu0 0.0
  %1111 = vmatprep.subr.mxu0 %v214
  %1112 = vmatpush1.msra.mxu0 %v213
  %1113 = vmatprep.subr.mxu0 %v212
  %1114 = vmatpush1.msra.mxu0 %v211
  %1115 = vmatprep.subr.mxu0 %v210
  %1116 = vmatpush1.msra.mxu0 %v209
  %1117 = vmatprep.subr.mxu0 %v208
  %1118 = vmatpush1.msra.mxu0 %v207
  %1119 = vmatprep.subr.mxu0 %v206
  %1120 = vmatpush1.msra.mxu0 %v205
  %1121 = vmatprep.subr.mxu0 %v204
  %1122 = vmatpush1.msra.mxu0 %v203
  %1123 = vmatprep.subr.mxu0 %v202
  %1124 = vmatpush1.msra.mxu0 %v201
  %1125 = vmatprep.subr.mxu0 %v200
  %1126 = vmatpush1.msra.mxu0 %v199
  %1127 = vmatprep.subr.mxu0 0.0
  %1128 = vmatpush2.msra.mxu0 0.0
  %1129 = vmatprep.subr.mxu0 0.0
  %1130 = vmatpush2.msra.mxu0 0.0
  %1131 = vmatprep.subr.mxu0 0.0
  %1132 = vmatpush2.msra.mxu0 0.0
  %1133 = vmatprep.subr.mxu0 0.0
  %1134 = vmatpush2.msra.mxu0 0.0
  %1135 = vmatprep.subr.mxu0 0.0
  %1136 = vmatpush2.msra.mxu0 0.0
  %1137 = vmatprep.subr.mxu0 0.0
  %1138 = vmatpush2.msra.mxu0 0.0
  %1139 = vmatprep.subr.mxu0 0.0
  %1140 = vmatpush2.msra.mxu0 0.0
  %1141 = vmatprep.subr.mxu0 0.0
  %1142 = vmatpush2.msra.mxu0 0.0
  %1143 = vmatprep.subr.mxu0 0.0
  %1144 = vmatpush2.msra.mxu0 0.0
  %1145 = vmatprep.subr.mxu0 0.0
  %1146 = vmatpush2.msra.mxu0 0.0
  %1147 = vmatprep.subr.mxu0 0.0
  %1148 = vmatpush2.msra.mxu0 0.0
  %1149 = vmatprep.subr.mxu0 0.0
  %1150 = vmatpush2.msra.mxu0 0.0
  %1151 = vmatprep.subr.mxu0 0.0
  %1152 = vmatpush2.msra.mxu0 0.0
  %1153 = vmatprep.subr.mxu0 0.0
  %1154 = vmatpush2.msra.mxu0 0.0
  %1155 = vmatprep.subr.mxu0 0.0
  %1156 = vmatpush2.msra.mxu0 0.0
  %1157 = vmatprep.subr.mxu0 0.0
  %1158 = vmatpush2.msra.mxu0 0.0
  %1159 = vmatprep.mubr.f32.mxu0 0.0
  %1160 = vmatmul.mubr.f32.gmra.mxu0 %v1093
  %v1161 = vpop.f32.mrf.mxu0
  %v1162 = vadd.f32 0.0, %v1161
  %v1163 = vpop.f32.mrf.mxu0
  %v1164 = vadd.f32 0.0, %v1163
  %1165 = vdwg.mxu0
  %v1168 = vcombine.low %v1162, %v1164
  %v1170 = vunpack.c.l.s4 1983009808
  %v1171 = vunpack.c.0.s8 %v1170
  %v1172 = vlaneseq
  %v1173 = vshrl.u32 %v1172, 7
  %v1174 = vsub.s32 %v1171, %v1173
  %v1175 = vrot.slane %v1168, %v1174
  %v1177 = vadd.f32 %v1091, %v1175
  %v1178 = vxor.u32 %v1177, 2147483648
  %v1179 = vmul.f32 %v1178, 1.442695
  %v1180 = vpow.pop %v1179
  %v1181 = vadd.f32 %v1180, 1.0
  %v1182 = vrcp.pop %v1181
  %v1183 = vmul.f32 1.0, %v1182
  %v1185 = vrot.slane %v1177, 2
  %v1187 = vtanh.pop %v1185
  %1188 = vrot.lane.b32.xlu0 %v1177, 64
  %v1189 = vpop.permute.xlu0 %1188
  %v1190 = vrot.slane %v1189, 2
  %v1192 = vxor.u32 %v1190, 2147483648
  %v1193 = vmul.f32 %v1192, 1.442695
  %v1194 = vpow.pop %v1193
  %v1195 = vadd.f32 %v1194, 1.0
  %v1196 = vrcp.pop %v1195
  %v1197 = vmul.f32 1.0, %v1196
  %v1200 = vunpack.c.l.s4 1983009808
  %v1201 = vunpack.c.0.s8 %v1200
  %v1202 = vlaneseq
  %v1203 = vshrl.u32 %v1202, 7
  %v1204 = vsub.s32 %v1201, %v1203
  %v1205 = vrot.slane %v1086, %v1204
  %1206 = vrot.lane.b32.xlu0 %v1205, 64
  %v1207 = vpop.permute.xlu0 %1206
  %v1209 = vmul.f32 %v1183, %v1207
  %v1210 = vmul.f32 %v1183, %v1187
  %1212 = vrot.lane.b32.xlu0 %v1210, 64
  %v1213 = vpop.permute.xlu0 %1212
  %v1215 = vadd.f32 %v1209, %v1213
  %v1216 = vtanh.pop %v1215
  %1218 = vrot.lane.b32.xlu0 %v1216, 64
  %v1219 = vpop.permute.xlu0 %1218
  %v1221 = vmul.f32 %v1197, %v1219
  %1222 = vst.msk [vmem:[#allocation5] sm:$0x3] %vm196, %v1221
  %v1225 = vunpack.c.l.s4 1983009808
  %v1226 = vunpack.c.0.s8 %v1225
  %v1227 = vlaneseq
  %v1228 = vshrl.u32 %v1227, 7
  %v1229 = vsub.s32 %v1226, %v1228
  %v1230 = vrot.slane %v1215, %v1229
  %1231 = vrot.lane.b32.xlu0 %v1230, 64
  %v1232 = vpop.permute.xlu0 %1231
  %1234 = vst.msk [vmem:[#allocation6] sm:$0x3] %vm196, %v1232
  %s1235 = scalar_lea.vmem [#allocation3], 10
  %1236 = vst.msk [vmem:[%s1235] sm:$0x3] %vm404, %v1221
  %v1239 = vunpack.c.l.s4 1983009808
  %v1240 = vunpack.c.0.s8 %v1239
  %v1241 = vlaneseq
  %v1242 = vshrl.u32 %v1241, 7
  %v1243 = vsub.s32 %v1240, %v1242
  %v1244 = vrot.slane %v1221, %v1243
  %1245 = vrot.lane.b32.xlu0 %v1244, 96
  %v1246 = vpop.permute.xlu0 %1245
  %s1248 = scalar_lea.vmem [#allocation4], 4
  %1249 = vst.msk [vmem:[%s1248] sm:$0x3] %vm404, %v1246
  %v1250 = vld [vmem:[#allocation5] sm:$0x3]
  %v1251 = vld [vmem:[#allocation6] sm:$0x3]
  %v1252 = vld [vmem:[%s424] sm:$0xf]
  %v1253 = vmul.f32 %v1252, %v236
  %v1254 = vld [vmem:[%s421] sm:$0xf]
  %v1255 = vmul.f32 %v1254, %v257
  %v1256 = vadd.f32 %v1253, %v1255
  %v1258 = vsel %vm56, %v1250, 0
  %1260 = vmatprep.subr.mxu0 0.0
  %1261 = vmatpush1.msra.mxu0 0.0
  %1262 = vmatprep.subr.mxu0 0.0
  %1263 = vmatpush1.msra.mxu0 0.0
  %1264 = vmatprep.subr.mxu0 0.0
  %1265 = vmatpush1.msra.mxu0 0.0
  %1266 = vmatprep.subr.mxu0 0.0
  %1267 = vmatpush1.msra.mxu0 0.0
  %1268 = vmatprep.subr.mxu0 0.0
  %1269 = vmatpush1.msra.mxu0 0.0
  %1270 = vmatprep.subr.mxu0 0.0
  %1271 = vmatpush1.msra.mxu0 0.0
  %1272 = vmatprep.subr.mxu0 0.0
  %1273 = vmatpush1.msra.mxu0 0.0
  %1274 = vmatprep.subr.mxu0 0.0
  %1275 = vmatpush1.msra.mxu0 0.0
  %1276 = vmatprep.subr.mxu0 %v214
  %1277 = vmatpush1.msra.mxu0 %v213
  %1278 = vmatprep.subr.mxu0 %v212
  %1279 = vmatpush1.msra.mxu0 %v211
  %1280 = vmatprep.subr.mxu0 %v210
  %1281 = vmatpush1.msra.mxu0 %v209
  %1282 = vmatprep.subr.mxu0 %v208
  %1283 = vmatpush1.msra.mxu0 %v207
  %1284 = vmatprep.subr.mxu0 %v206
  %1285 = vmatpush1.msra.mxu0 %v205
  %1286 = vmatprep.subr.mxu0 %v204
  %1287 = vmatpush1.msra.mxu0 %v203
  %1288 = vmatprep.subr.mxu0 %v202
  %1289 = vmatpush1.msra.mxu0 %v201
  %1290 = vmatprep.subr.mxu0 %v200
  %1291 = vmatpush1.msra.mxu0 %v199
  %1292 = vmatprep.subr.mxu0 0.0
  %1293 = vmatpush2.msra.mxu0 0.0
  %1294 = vmatprep.subr.mxu0 0.0
  %1295 = vmatpush2.msra.mxu0 0.0
  %1296 = vmatprep.subr.mxu0 0.0
  %1297 = vmatpush2.msra.mxu0 0.0
  %1298 = vmatprep.subr.mxu0 0.0
  %1299 = vmatpush2.msra.mxu0 0.0
  %1300 = vmatprep.subr.mxu0 0.0
  %1301 = vmatpush2.msra.mxu0 0.0
  %1302 = vmatprep.subr.mxu0 0.0
  %1303 = vmatpush2.msra.mxu0 0.0
  %1304 = vmatprep.subr.mxu0 0.0
  %1305 = vmatpush2.msra.mxu0 0.0
  %1306 = vmatprep.subr.mxu0 0.0
  %1307 = vmatpush2.msra.mxu0 0.0
  %1308 = vmatprep.subr.mxu0 0.0
  %1309 = vmatpush2.msra.mxu0 0.0
  %1310 = vmatprep.subr.mxu0 0.0
  %1311 = vmatpush2.msra.mxu0 0.0
  %1312 = vmatprep.subr.mxu0 0.0
  %1313 = vmatpush2.msra.mxu0 0.0
  %1314 = vmatprep.subr.mxu0 0.0
  %1315 = vmatpush2.msra.mxu0 0.0
  %1316 = vmatprep.subr.mxu0 0.0
  %1317 = vmatpush2.msra.mxu0 0.0
  %1318 = vmatprep.subr.mxu0 0.0
  %1319 = vmatpush2.msra.mxu0 0.0
  %1320 = vmatprep.subr.mxu0 0.0
  %1321 = vmatpush2.msra.mxu0 0.0
  %1322 = vmatprep.subr.mxu0 0.0
  %1323 = vmatpush2.msra.mxu0 0.0
  %1324 = vmatprep.mubr.f32.mxu0 0.0
  %1325 = vmatmul.mubr.f32.gmra.mxu0 %v1258
  %v1326 = vpop.f32.mrf.mxu0
  %v1327 = vadd.f32 0.0, %v1326
  %v1328 = vpop.f32.mrf.mxu0
  %v1329 = vadd.f32 0.0, %v1328
  %1330 = vdwg.mxu0
  %v1333 = vcombine.low %v1327, %v1329
  %v1335 = vunpack.c.l.s4 1983009808
  %v1336 = vunpack.c.0.s8 %v1335
  %v1337 = vlaneseq
  %v1338 = vshrl.u32 %v1337, 7
  %v1339 = vsub.s32 %v1336, %v1338
  %v1340 = vrot.slane %v1333, %v1339
  %v1342 = vadd.f32 %v1256, %v1340
  %v1343 = vxor.u32 %v1342, 2147483648
  %v1344 = vmul.f32 %v1343, 1.442695
  %v1345 = vpow.pop %v1344
  %v1346 = vadd.f32 %v1345, 1.0
  %v1347 = vrcp.pop %v1346
  %v1348 = vmul.f32 1.0, %v1347
  %v1350 = vrot.slane %v1342, 2
  %v1352 = vtanh.pop %v1350
  %1353 = vrot.lane.b32.xlu0 %v1342, 64
  %v1354 = vpop.permute.xlu0 %1353
  %v1355 = vrot.slane %v1354, 2
  %v1357 = vxor.u32 %v1355, 2147483648
  %v1358 = vmul.f32 %v1357, 1.442695
  %v1359 = vpow.pop %v1358
  %v1360 = vadd.f32 %v1359, 1.0
  %v1361 = vrcp.pop %v1360
  %v1362 = vmul.f32 1.0, %v1361
  %v1365 = vunpack.c.l.s4 1983009808
  %v1366 = vunpack.c.0.s8 %v1365
  %v1367 = vlaneseq
  %v1368 = vshrl.u32 %v1367, 7
  %v1369 = vsub.s32 %v1366, %v1368
  %v1370 = vrot.slane %v1251, %v1369
  %1371 = vrot.lane.b32.xlu0 %v1370, 64
  %v1372 = vpop.permute.xlu0 %1371
  %v1374 = vmul.f32 %v1348, %v1372
  %v1375 = vmul.f32 %v1348, %v1352
  %1377 = vrot.lane.b32.xlu0 %v1375, 64
  %v1378 = vpop.permute.xlu0 %1377
  %v1380 = vadd.f32 %v1374, %v1378
  %v1381 = vtanh.pop %v1380
  %1383 = vrot.lane.b32.xlu0 %v1381, 64
  %v1384 = vpop.permute.xlu0 %1383
  %v1386 = vmul.f32 %v1362, %v1384
  %1387 = vst.msk [vmem:[#allocation5] sm:$0x3] %vm196, %v1386
  %v1390 = vunpack.c.l.s4 1983009808
  %v1391 = vunpack.c.0.s8 %v1390
  %v1392 = vlaneseq
  %v1393 = vshrl.u32 %v1392, 7
  %v1394 = vsub.s32 %v1391, %v1393
  %v1395 = vrot.slane %v1380, %v1394
  %1396 = vrot.lane.b32.xlu0 %v1395, 64
  %v1397 = vpop.permute.xlu0 %1396
  %1399 = vst.msk [vmem:[#allocation6] sm:$0x3] %vm196, %v1397
  %s1400 = scalar_lea.vmem [#allocation3], 12
  %1401 = vst.msk [vmem:[%s1400] sm:$0x3] %vm404, %v1386
  %v1404 = vunpack.c.l.s4 1983009808
  %v1405 = vunpack.c.0.s8 %v1404
  %v1406 = vlaneseq
  %v1407 = vshrl.u32 %v1406, 7
  %v1408 = vsub.s32 %v1405, %v1407
  %v1409 = vrot.slane %v1386, %v1408
  %1410 = vrot.lane.b32.xlu0 %v1409, 96
  %v1411 = vpop.permute.xlu0 %1410
  %s1413 = scalar_lea.vmem [#allocation4], 2
  %1414 = vst.msk [vmem:[%s1413] sm:$0x3] %vm404, %v1411
  %v1415 = vld [vmem:[#allocation5] sm:$0x3]
  %v1416 = vld [vmem:[#allocation6] sm:$0x3]
  %v1417 = vld [vmem:[%s239] sm:$0xf]
  %v1418 = vmul.f32 %v1417, %v236
  %v1419 = vld [vmem:[#allocation2] sm:$0xf]
  %v1420 = vmul.f32 %v1419, %v257
  %v1421 = vadd.f32 %v1418, %v1420
  %v1423 = vsel %vm56, %v1415, 0
  %1425 = vmatprep.subr.mxu0 0.0
  %1426 = vmatpush1.msra.mxu0 0.0
  %1427 = vmatprep.subr.mxu0 0.0
  %1428 = vmatpush1.msra.mxu0 0.0
  %1429 = vmatprep.subr.mxu0 0.0
  %1430 = vmatpush1.msra.mxu0 0.0
  %1431 = vmatprep.subr.mxu0 0.0
  %1432 = vmatpush1.msra.mxu0 0.0
  %1433 = vmatprep.subr.mxu0 0.0
  %1434 = vmatpush1.msra.mxu0 0.0
  %1435 = vmatprep.subr.mxu0 0.0
  %1436 = vmatpush1.msra.mxu0 0.0
  %1437 = vmatprep.subr.mxu0 0.0
  %1438 = vmatpush1.msra.mxu0 0.0
  %1439 = vmatprep.subr.mxu0 0.0
  %1440 = vmatpush1.msra.mxu0 0.0
  %1441 = vmatprep.subr.mxu0 %v214
  %1442 = vmatpush1.msra.mxu0 %v213
  %1443 = vmatprep.subr.mxu0 %v212
  %1444 = vmatpush1.msra.mxu0 %v211
  %1445 = vmatprep.subr.mxu0 %v210
  %1446 = vmatpush1.msra.mxu0 %v209
  %1447 = vmatprep.subr.mxu0 %v208
  %1448 = vmatpush1.msra.mxu0 %v207
  %1449 = vmatprep.subr.mxu0 %v206
  %1450 = vmatpush1.msra.mxu0 %v205
  %1451 = vmatprep.subr.mxu0 %v204
  %1452 = vmatpush1.msra.mxu0 %v203
  %1453 = vmatprep.subr.mxu0 %v202
  %1454 = vmatpush1.msra.mxu0 %v201
  %1455 = vmatprep.subr.mxu0 %v200
  %1456 = vmatpush1.msra.mxu0 %v199
  %1457 = vmatprep.subr.mxu0 0.0
  %1458 = vmatpush2.msra.mxu0 0.0
  %1459 = vmatprep.subr.mxu0 0.0
  %1460 = vmatpush2.msra.mxu0 0.0
  %1461 = vmatprep.subr.mxu0 0.0
  %1462 = vmatpush2.msra.mxu0 0.0
  %1463 = vmatprep.subr.mxu0 0.0
  %1464 = vmatpush2.msra.mxu0 0.0
  %1465 = vmatprep.subr.mxu0 0.0
  %1466 = vmatpush2.msra.mxu0 0.0
  %1467 = vmatprep.subr.mxu0 0.0
  %1468 = vmatpush2.msra.mxu0 0.0
  %1469 = vmatprep.subr.mxu0 0.0
  %1470 = vmatpush2.msra.mxu0 0.0
  %1471 = vmatprep.subr.mxu0 0.0
  %1472 = vmatpush2.msra.mxu0 0.0
  %1473 = vmatprep.subr.mxu0 0.0
  %1474 = vmatpush2.msra.mxu0 0.0
  %1475 = vmatprep.subr.mxu0 0.0
  %1476 = vmatpush2.msra.mxu0 0.0
  %1477 = vmatprep.subr.mxu0 0.0
  %1478 = vmatpush2.msra.mxu0 0.0
  %1479 = vmatprep.subr.mxu0 0.0
  %1480 = vmatpush2.msra.mxu0 0.0
  %1481 = vmatprep.subr.mxu0 0.0
  %1482 = vmatpush2.msra.mxu0 0.0
  %1483 = vmatprep.subr.mxu0 0.0
  %1484 = vmatpush2.msra.mxu0 0.0
  %1485 = vmatprep.subr.mxu0 0.0
  %1486 = vmatpush2.msra.mxu0 0.0
  %1487 = vmatprep.subr.mxu0 0.0
  %1488 = vmatpush2.msra.mxu0 0.0
  %1489 = vmatprep.mubr.f32.mxu0 0.0
  %1490 = vmatmul.mubr.f32.gmra.mxu0 %v1423
  %v1491 = vpop.f32.mrf.mxu0
  %v1492 = vadd.f32 0.0, %v1491
  %v1493 = vpop.f32.mrf.mxu0
  %v1494 = vadd.f32 0.0, %v1493
  %1495 = vdwg.mxu0
  %v1498 = vcombine.low %v1492, %v1494
  %v1500 = vunpack.c.l.s4 1983009808
  %v1501 = vunpack.c.0.s8 %v1500
  %v1502 = vlaneseq
  %v1503 = vshrl.u32 %v1502, 7
  %v1504 = vsub.s32 %v1501, %v1503
  %v1505 = vrot.slane %v1498, %v1504
  %v1507 = vadd.f32 %v1421, %v1505
  %v1508 = vxor.u32 %v1507, 2147483648
  %v1509 = vmul.f32 %v1508, 1.442695
  %v1510 = vpow.pop %v1509
  %v1511 = vadd.f32 %v1510, 1.0
  %v1512 = vrcp.pop %v1511
  %v1513 = vmul.f32 1.0, %v1512
  %v1515 = vrot.slane %v1507, 2
  %v1517 = vtanh.pop %v1515
  %1518 = vrot.lane.b32.xlu0 %v1507, 64
  %v1519 = vpop.permute.xlu0 %1518
  %v1520 = vrot.slane %v1519, 2
  %v1522 = vxor.u32 %v1520, 2147483648
  %v1523 = vmul.f32 %v1522, 1.442695
  %v1524 = vpow.pop %v1523
  %v1525 = vadd.f32 %v1524, 1.0
  %v1526 = vrcp.pop %v1525
  %v1527 = vmul.f32 1.0, %v1526
  %v1530 = vunpack.c.l.s4 1983009808
  %v1531 = vunpack.c.0.s8 %v1530
  %v1532 = vlaneseq
  %v1533 = vshrl.u32 %v1532, 7
  %v1534 = vsub.s32 %v1531, %v1533
  %v1535 = vrot.slane %v1416, %v1534
  %1536 = vrot.lane.b32.xlu0 %v1535, 64
  %v1537 = vpop.permute.xlu0 %1536
  %v1539 = vmul.f32 %v1513, %v1537
  %v1540 = vmul.f32 %v1513, %v1517
  %1542 = vrot.lane.b32.xlu0 %v1540, 64
  %v1543 = vpop.permute.xlu0 %1542
  %v1545 = vadd.f32 %v1539, %v1543
  %v1546 = vtanh.pop %v1545
  %1548 = vrot.lane.b32.xlu0 %v1546, 64
  %v1549 = vpop.permute.xlu0 %1548
  %v1551 = vmul.f32 %v1527, %v1549
  %1552 = vst.msk [vmem:[#allocation5] sm:$0x3] %vm196, %v1551
  %v1555 = vunpack.c.l.s4 1983009808
  %v1556 = vunpack.c.0.s8 %v1555
  %v1557 = vlaneseq
  %v1558 = vshrl.u32 %v1557, 7
  %v1559 = vsub.s32 %v1556, %v1558
  %v1560 = vrot.slane %v1545, %v1559
  %1561 = vrot.lane.b32.xlu0 %v1560, 64
  %v1562 = vpop.permute.xlu0 %1561
  %1564 = vst.msk [vmem:[#allocation6] sm:$0x3] %vm196, %v1562
  %s1565 = scalar_lea.vmem [#allocation3], 14
  %1566 = vst.msk [vmem:[%s1565] sm:$0x3] %vm404, %v1551
  %v1569 = vunpack.c.l.s4 1983009808
  %v1570 = vunpack.c.0.s8 %v1569
  %v1571 = vlaneseq
  %v1572 = vshrl.u32 %v1571, 7
  %v1573 = vsub.s32 %v1570, %v1572
  %v1574 = vrot.slane %v1551, %v1573
  %1575 = vrot.lane.b32.xlu0 %v1574, 96
  %v1576 = vpop.permute.xlu0 %1575
  %1578 = vst.msk [vmem:[#allocation4] sm:$0x3] %vm404, %v1576
  %v1579 = vld [vmem:[#allocation3] sm:$0x3]
  %v1580 = vld [vmem:[#allocation3 + $0x2] sm:$0x3]
  %v1581 = vld [vmem:[#allocation3 + $0x4] sm:$0x3]
  %v1582 = vld [vmem:[#allocation3 + $0x6] sm:$0x3]
  %v1583 = vld [vmem:[#allocation3 + $0x8] sm:$0x3]
  %v1584 = vld [vmem:[#allocation3 + $0xa] sm:$0x3]
  %v1585 = vld [vmem:[#allocation3 + $0xc] sm:$0x3]
  %v1586 = vld [vmem:[#allocation3 + $0xe] sm:$0x3]
  %v1587 = vld [vmem:[#allocation4] sm:$0x3]
  %v1588 = vld [vmem:[#allocation4 + $0x2] sm:$0x3]
  %v1589 = vld [vmem:[#allocation4 + $0x4] sm:$0x3]
  %v1590 = vld [vmem:[#allocation4 + $0x6] sm:$0x3]
  %v1591 = vld [vmem:[#allocation4 + $0x8] sm:$0x3]
  %v1592 = vld [vmem:[#allocation4 + $0xa] sm:$0x3]
  %v1593 = vld [vmem:[#allocation4 + $0xc] sm:$0x3]
  %v1594 = vld [vmem:[#allocation4 + $0xe] sm:$0x3]
  %v1595 = vld [vmem:[%s5] sm:$0xff]
  %v1596 = vld [vmem:[%s5 + $0x8] sm:$0xff]
  %v1597 = vld [vmem:[%s5 + $0x10] sm:$0xff]
  %v1598 = vld [vmem:[%s5 + $0x18] sm:$0xff]
  %v1599 = vld [vmem:[%s5 + $0x20] sm:$0xff]
  %v1600 = vld [vmem:[%s5 + $0x28] sm:$0xff]
  %v1601 = vld [vmem:[%s5 + $0x30] sm:$0xff]
  %v1602 = vld [vmem:[%s5 + $0x38] sm:$0xff]
  %v1611 = vcombine.low %v1587, %v1588
  %v1612 = vcombine.low %v1589, %v1590
  %v1614 = vunpack.c.l.s4 1983009808
  %v1615 = vunpack.c.0.s8 %v1614
  %v1616 = vlaneseq
  %v1617 = vshrl.u32 %v1616, 7
  %v1618 = vsub.s32 %v1615, %v1617
  %v1619 = vrot.slane %v1611, %v1618
  %v1621 = vunpack.c.l.s4 1983009808
  %v1622 = vunpack.c.0.s8 %v1621
  %v1623 = vlaneseq
  %v1624 = vshrl.u32 %v1623, 7
  %v1625 = vsub.s32 %v1622, %v1624
  %v1626 = vrot.slane %v1612, %v1625
  %v1627 = vcombine.low %v1619, %v1626
  %v1628 = vcombine.low %v1591, %v1592
  %v1629 = vcombine.low %v1593, %v1594
  %v1631 = vunpack.c.l.s4 1983009808
  %v1632 = vunpack.c.0.s8 %v1631
  %v1633 = vlaneseq
  %v1634 = vshrl.u32 %v1633, 7
  %v1635 = vsub.s32 %v1632, %v1634
  %v1636 = vrot.slane %v1628, %v1635
  %v1638 = vunpack.c.l.s4 1983009808
  %v1639 = vunpack.c.0.s8 %v1638
  %v1640 = vlaneseq
  %v1641 = vshrl.u32 %v1640, 7
  %v1642 = vsub.s32 %v1639, %v1641
  %v1643 = vrot.slane %v1629, %v1642
  %v1644 = vcombine.low %v1636, %v1643
  %vm1645 = vcmask 261120
  %v1646 = vsel %vm1645, %v1627, 0
  %v1648 = vsel %vm1645, %v1644, 0
  %1650 = vmatprep.subr.mxu0 0.0
  %1651 = vmatpush1.msra.mxu0 0.0
  %1652 = vmatprep.subr.mxu0 0.0
  %1653 = vmatpush1.msra.mxu0 0.0
  %1654 = vmatprep.subr.mxu0 0.0
  %1655 = vmatpush1.msra.mxu0 0.0
  %1656 = vmatprep.subr.mxu0 0.0
  %1657 = vmatpush1.msra.mxu0 0.0
  %1658 = vmatprep.subr.mxu0 0.0
  %1659 = vmatpush1.msra.mxu0 0.0
  %1660 = vmatprep.subr.mxu0 0.0
  %1661 = vmatpush1.msra.mxu0 0.0
  %1662 = vmatprep.subr.mxu0 0.0
  %1663 = vmatpush1.msra.mxu0 0.0
  %1664 = vmatprep.subr.mxu0 0.0
  %1665 = vmatpush1.msra.mxu0 0.0
  %1666 = vmatprep.subr.mxu0 0.0
  %1667 = vmatpush1.msra.mxu0 0.0
  %1668 = vmatprep.subr.mxu0 0.0
  %1669 = vmatpush1.msra.mxu0 0.0
  %1670 = vmatprep.subr.mxu0 0.0
  %1671 = vmatpush1.msra.mxu0 0.0
  %1672 = vmatprep.subr.mxu0 0.0
  %1673 = vmatpush1.msra.mxu0 0.0
  %1674 = vmatprep.subr.mxu0 0.0
  %1675 = vmatpush1.msra.mxu0 %v1602
  %1676 = vmatprep.subr.mxu0 0.0
  %1677 = vmatpush1.msra.mxu0 %v1601
  %1678 = vmatprep.subr.mxu0 0.0
  %1679 = vmatpush1.msra.mxu0 %v1600
  %1680 = vmatprep.subr.mxu0 0.0
  %1681 = vmatpush1.msra.mxu0 %v1599
  %1682 = vmatprep.subr.mxu0 0.0
  %1683 = vmatpush2.msra.mxu0 0.0
  %1684 = vmatprep.subr.mxu0 0.0
  %1685 = vmatpush2.msra.mxu0 0.0
  %1686 = vmatprep.subr.mxu0 0.0
  %1687 = vmatpush2.msra.mxu0 0.0
  %1688 = vmatprep.subr.mxu0 0.0
  %1689 = vmatpush2.msra.mxu0 0.0
  %1690 = vmatprep.subr.mxu0 0.0
  %1691 = vmatpush2.msra.mxu0 0.0
  %1692 = vmatprep.subr.mxu0 0.0
  %1693 = vmatpush2.msra.mxu0 0.0
  %1694 = vmatprep.subr.mxu0 0.0
  %1695 = vmatpush2.msra.mxu0 0.0
  %1696 = vmatprep.subr.mxu0 0.0
  %1697 = vmatpush2.msra.mxu0 0.0
  %1698 = vmatprep.subr.mxu0 0.0
  %1699 = vmatpush2.msra.mxu0 0.0
  %1700 = vmatprep.subr.mxu0 0.0
  %1701 = vmatpush2.msra.mxu0 0.0
  %1702 = vmatprep.subr.mxu0 0.0
  %1703 = vmatpush2.msra.mxu0 0.0
  %1704 = vmatprep.subr.mxu0 0.0
  %1705 = vmatpush2.msra.mxu0 0.0
  %1706 = vmatprep.subr.mxu0 0.0
  %1707 = vmatpush2.msra.mxu0 0.0
  %1708 = vmatprep.subr.mxu0 0.0
  %1709 = vmatpush2.msra.mxu0 0.0
  %1710 = vmatprep.subr.mxu0 0.0
  %1711 = vmatpush2.msra.mxu0 0.0
  %1712 = vmatprep.subr.mxu0 0.0
  %1713 = vmatpush2.msra.mxu0 0.0
  %1714 = vmatprep.mubr.f32.mxu0 0.0
  %1715 = vmatmul.mubr.f32.gmra.mxu0 %v1646
  %v1716 = vpop.f32.mrf.mxu0
  %v1717 = vadd.f32 0.0, %v1716
  %v1718 = vpop.f32.mrf.mxu0
  %1719 = vmatprep.mubr.f32.mxu0 0.0
  %1720 = vmatmul.mubr.f32.gmra.mxu0 %v1648
  %v1721 = vpop.f32.mrf.mxu0
  %v1722 = vadd.f32 0.0, %v1721
  %v1723 = vpop.f32.mrf.mxu0
  %1724 = vdwg.mxu0
  %v1733 = vcombine.low %v1579, %v1580
  %v1734 = vcombine.low %v1581, %v1582
  %v1736 = vunpack.c.l.s4 1983009808
  %v1737 = vunpack.c.0.s8 %v1736
  %v1738 = vlaneseq
  %v1739 = vshrl.u32 %v1738, 7
  %v1740 = vsub.s32 %v1737, %v1739
  %v1741 = vrot.slane %v1733, %v1740
  %v1743 = vunpack.c.l.s4 1983009808
  %v1744 = vunpack.c.0.s8 %v1743
  %v1745 = vlaneseq
  %v1746 = vshrl.u32 %v1745, 7
  %v1747 = vsub.s32 %v1744, %v1746
  %v1748 = vrot.slane %v1734, %v1747
  %v1749 = vcombine.low %v1741, %v1748
  %v1750 = vcombine.low %v1583, %v1584
  %v1751 = vcombine.low %v1585, %v1586
  %v1753 = vunpack.c.l.s4 1983009808
  %v1754 = vunpack.c.0.s8 %v1753
  %v1755 = vlaneseq
  %v1756 = vshrl.u32 %v1755, 7
  %v1757 = vsub.s32 %v1754, %v1756
  %v1758 = vrot.slane %v1750, %v1757
  %v1760 = vunpack.c.l.s4 1983009808
  %v1761 = vunpack.c.0.s8 %v1760
  %v1762 = vlaneseq
  %v1763 = vshrl.u32 %v1762, 7
  %v1764 = vsub.s32 %v1761, %v1763
  %v1765 = vrot.slane %v1751, %v1764
  %v1766 = vcombine.low %v1758, %v1765
  %v1767 = vsel %vm1645, %v1749, 0
  %v1769 = vsel %vm1645, %v1766, 0
  %1771 = vmatprep.subr.mxu0 0.0
  %1772 = vmatpush1.msra.mxu0 0.0
  %1773 = vmatprep.subr.mxu0 0.0
  %1774 = vmatpush1.msra.mxu0 0.0
  %1775 = vmatprep.subr.mxu0 0.0
  %1776 = vmatpush1.msra.mxu0 0.0
  %1777 = vmatprep.subr.mxu0 0.0
  %1778 = vmatpush1.msra.mxu0 0.0
  %1779 = vmatprep.subr.mxu0 0.0
  %1780 = vmatpush1.msra.mxu0 0.0
  %1781 = vmatprep.subr.mxu0 0.0
  %1782 = vmatpush1.msra.mxu0 0.0
  %1783 = vmatprep.subr.mxu0 0.0
  %1784 = vmatpush1.msra.mxu0 0.0
  %1785 = vmatprep.subr.mxu0 0.0
  %1786 = vmatpush1.msra.mxu0 0.0
  %1787 = vmatprep.subr.mxu0 0.0
  %1788 = vmatpush1.msra.mxu0 0.0
  %1789 = vmatprep.subr.mxu0 0.0
  %1790 = vmatpush1.msra.mxu0 0.0
  %1791 = vmatprep.subr.mxu0 0.0
  %1792 = vmatpush1.msra.mxu0 0.0
  %1793 = vmatprep.subr.mxu0 0.0
  %1794 = vmatpush1.msra.mxu0 0.0
  %1795 = vmatprep.subr.mxu0 0.0
  %1796 = vmatpush1.msra.mxu0 %v1598
  %1797 = vmatprep.subr.mxu0 0.0
  %1798 = vmatpush1.msra.mxu0 %v1597
  %1799 = vmatprep.subr.mxu0 0.0
  %1800 = vmatpush1.msra.mxu0 %v1596
  %1801 = vmatprep.subr.mxu0 0.0
  %1802 = vmatpush1.msra.mxu0 %v1595
  %1803 = vmatprep.subr.mxu0 0.0
  %1804 = vmatpush2.msra.mxu0 0.0
  %1805 = vmatprep.subr.mxu0 0.0
  %1806 = vmatpush2.msra.mxu0 0.0
  %1807 = vmatprep.subr.mxu0 0.0
  %1808 = vmatpush2.msra.mxu0 0.0
  %1809 = vmatprep.subr.mxu0 0.0
  %1810 = vmatpush2.msra.mxu0 0.0
  %1811 = vmatprep.subr.mxu0 0.0
  %1812 = vmatpush2.msra.mxu0 0.0
  %1813 = vmatprep.subr.mxu0 0.0
  %1814 = vmatpush2.msra.mxu0 0.0
  %1815 = vmatprep.subr.mxu0 0.0
  %1816 = vmatpush2.msra.mxu0 0.0
  %1817 = vmatprep.subr.mxu0 0.0
  %1818 = vmatpush2.msra.mxu0 0.0
  %1819 = vmatprep.subr.mxu0 0.0
  %1820 = vmatpush2.msra.mxu0 0.0
  %1821 = vmatprep.subr.mxu0 0.0
  %1822 = vmatpush2.msra.mxu0 0.0
  %1823 = vmatprep.subr.mxu0 0.0
  %1824 = vmatpush2.msra.mxu0 0.0
  %1825 = vmatprep.subr.mxu0 0.0
  %1826 = vmatpush2.msra.mxu0 0.0
  %1827 = vmatprep.subr.mxu0 0.0
  %1828 = vmatpush2.msra.mxu0 0.0
  %1829 = vmatprep.subr.mxu0 0.0
  %1830 = vmatpush2.msra.mxu0 0.0
  %1831 = vmatprep.subr.mxu0 0.0
  %1832 = vmatpush2.msra.mxu0 0.0
  %1833 = vmatprep.subr.mxu0 0.0
  %1834 = vmatpush2.msra.mxu0 0.0
  %1835 = vmatprep.mubr.f32.mxu0 0.0
  %1836 = vmatmul.mubr.f32.gmra.mxu0 %v1767
  %v1837 = vpop.f32.mrf.mxu0
  %v1838 = vadd.f32 %v1717, %v1837
  %v1839 = vpop.f32.mrf.mxu0
  %1840 = vmatprep.mubr.f32.mxu0 0.0
  %1841 = vmatmul.mubr.f32.gmra.mxu0 %v1769
  %v1842 = vpop.f32.mrf.mxu0
  %v1843 = vadd.f32 %v1722, %v1842
  %v1844 = vpop.f32.mrf.mxu0
  %1845 = vdwg.mxu0
  %v1846 = vld [vmem:[%s6] sm:$0x1]
  %v1848 = vlaneseq
  %v1849 = vshrl.u32 %v1848, 7
  %v1850 = vsub.s32 0, %v1849
  %v1851 = vrot.slane %v1846, %v1850
  %v1853 = vadd.f32 %v1838, %v1851
  %v1854 = vadd.f32 %v1843, %v1851
  %1855 = vst [vmem:[%s7] sm:$0xff] %v1853
  %1856 = vst [vmem:[%s7 + $0x8] sm:$0xff] %v1854
  // Predicated region
  $region30: #{bilstm_lstm_crf_forward.3} parent=0 // pred_check
    _
  $region31: #{bilstm_lstm_crf_forward.3} parent=0 // pred_check_branch
    %1858 = sbr.rel (0) target = $region33
  $region32: #{bilstm_lstm_crf_forward.3} parent=0 // pred_region
    _
  $region33: #{bilstm_lstm_crf_forward.3} parent=0 // pred_fallthru
    _
  // Predicated region
  $region34: #{bilstm_lstm_crf_forward.3} parent=0 // pred_check
    _
  $region35: #{bilstm_lstm_crf_forward.3} parent=0 // pred_check_branch
    %1860 = sbr.rel (0) target = $region37
  $region36: #{bilstm_lstm_crf_forward.3} parent=0 // pred_region
    _
  $region37: #{bilstm_lstm_crf_forward.3} parent=0 // pred_fallthru
    _

</llo_original>
